<compile_context>
chip_gen: v7x
topology: tpu7x:2x2x1
jax: 0.10.0
libtpu: 0.0.40
codegen_flags: <defaults>
</compile_context>

<pallas_src>
import jax
import jax.numpy as jnp
from jax.experimental import pallas as pl
from jax.experimental.pallas import tpu as pltpu

# Keep host-side matmuls (E' precompute, reference) in true f32 so the Pallas
# kernel and the pure-JAX reference agree at tight tolerance.
jax.config.update("jax_default_matmul_precision", "float32")


# ------------------------------ Pallas kernel ------------------------------ #

def fused_textrnn_kernel(ids_ref, eproj_ref, w_hh_t_ref, b_ref,
                         fc_wt_ref, fc_b_ref, out_ref):
    """Whole model (last-batch-row path) in one invocation.

    ids_ref   : VMEM (S, 1) int32 -- token ids of text[:, -1]
    eproj_ref : VMEM (V, H) f32   -- embedding @ W_ih^T (pre-folded on host)
    w_hh_t_ref: VMEM (H, H) f32   -- W_hh^T
    b_ref     : VMEM (1, H) f32   -- b_ih + b_hh
    fc_wt_ref : VMEM (H, O) f32   -- fc weight^T
    fc_b_ref  : VMEM (1, O) f32   -- fc bias
    out_ref   : VMEM (S, O) f32   -- fc(output[:, -1, :])
    """
    S = ids_ref.shape[0]
    V, H = eproj_ref.shape

    # ---- One-hot gather fused with the input projection (single MXU dot):
    #      onehot(S,V) @ (emb @ W_ih^T)(V,H) == emb[ids] @ W_ih^T.
    ids = ids_ref[...]                                          # (S, 1) int32
    iota_v = jax.lax.broadcasted_iota(jnp.int32, (S, V), 1)     # (S, V)
    onehot = (iota_v == ids).astype(jnp.float32)                # (S, V)
    x_proj = (
        jnp.dot(onehot, eproj_ref[...], preferred_element_type=jnp.float32)
        + b_ref[...]
    )                                                           # (S, H)

    # ---- Serial recurrence on the single needed batch row, fully unrolled:
    #      one (1,H)x(H,H) dot + one tanh per step.  States stay in vregs.
    w_hh_t = w_hh_t_ref[...]
    h = jnp.zeros((1, H), jnp.float32)
    states = []
    for t in range(S):
        pre = x_proj[t:t + 1, :] + jnp.dot(
            h, w_hh_t, preferred_element_type=jnp.float32)
        h = jnp.tanh(pre)                                       # (1, H)
        states.append(h)
    states_all = jnp.concatenate(states, axis=0)                # (S, H)

    # ---- Fused final Linear on output[:, -1, :] (single small dot).
    out_ref[...] = (
        jnp.dot(states_all, fc_wt_ref[...], preferred_element_type=jnp.float32)
        + fc_b_ref[...]
    ).astype(out_ref.dtype)


# -------------------------------- Wrapper ----------------------------------- #

def model_forward(text, params):
    """text: (seq_len, batch) int32 token ids -> (seq_len, output_dim) float32."""
    seq_len, _batch = text.shape
    emb_w = params["embedding"]                      # (V, H)
    w_ih, w_hh = params["w_ih"], params["w_hh"]      # (H, H)
    b_ih, b_hh = params["b_ih"], params["b_hh"]      # (H,)
    fc_w, fc_b = params["fc_w"], params["fc_b"]      # (O, H), (O,)
    vocab, hidden = emb_w.shape
    out_dim = fc_w.shape[0]

    # Host-side layout glue / folds, done once (trivial flops).
    eproj = jnp.dot(emb_w, w_ih.T,
                    precision=jax.lax.Precision.HIGHEST)        # (V, H)
    w_hh_t = w_hh.T                                             # (H, H)
    b_rnn = (b_ih + b_hh).reshape(1, hidden)                    # (1, H)
    fc_w_t = fc_w.T                                             # (H, O)
    fc_b2 = fc_b.reshape(1, out_dim)                            # (1, O)
    # Only the last batch column feeds fc(output[:, -1, :]).
    ids_last = text[:, -1].astype(jnp.int32).reshape(seq_len, 1)  # (S, 1)

    return pl.pallas_call(
        fused_textrnn_kernel,
        out_shape=jax.ShapeDtypeStruct((seq_len, out_dim), jnp.float32),
        grid=(1,),
        in_specs=[
            pl.BlockSpec((seq_len, 1), lambda i: (0, 0)),
            pl.BlockSpec((vocab, hidden), lambda i: (0, 0)),
            pl.BlockSpec((hidden, hidden), lambda i: (0, 0)),
            pl.BlockSpec((1, hidden), lambda i: (0, 0)),
            pl.BlockSpec((hidden, out_dim), lambda i: (0, 0)),
            pl.BlockSpec((1, out_dim), lambda i: (0, 0)),
        ],
        out_specs=pl.BlockSpec((seq_len, out_dim), lambda i: (0, 0)),
        compiler_params=pltpu.CompilerParams(
            dimension_semantics=("arbitrary",),
        ),
    )(ids_last, eproj, w_hh_t, b_rnn, fc_w_t, fc_b2)


# ---------------------------- Pure-JAX reference ----------------------------- #

def model_forward_ref(text, params):
    emb = jnp.take(params["embedding"], text, axis=0)      # (S, B, H)
    w_ih, w_hh = params["w_ih"], params["w_hh"]
    b_ih, b_hh = params["b_ih"], params["b_hh"]

    def step(h, x_t):
        h_new = jnp.tanh(x_t @ w_ih.T + b_ih + h @ w_hh.T + b_hh)
        return h_new, h_new

    h0 = jnp.zeros((emb.shape[1], emb.shape[2]), jnp.float32)
    _, outs = jax.lax.scan(step, h0, emb)                  # (S, B, H)
    fc_in = outs[:, -1, :]                                 # (S, H)
    return fc_in @ params["fc_w"].T + params["fc_b"]       # (S, O)


# ---------------------------------- Main ------------------------------------ #

if __name__ == "__main__":
    seq_len = 8
    batch = 4
    hidden_dim = 32        # == input_size (required by the PyTorch module)
    vocab_size = 50
    output_dim = 8

    key = jax.random.PRNGKey(0)
    k_txt, k_emb, k_wih, k_whh, k_bih, k_bhh, k_fw, k_fb = jax.random.split(key, 8)

    bound = 1.0 / jnp.sqrt(hidden_dim).astype(jnp.float32)
    params = {
        "embedding": jax.random.normal(k_emb, (vocab_size, hidden_dim), jnp.float32),
        "w_ih": jax.random.uniform(k_wih, (hidden_dim, hidden_dim), jnp.float32, -bound, bound),
        "w_hh": jax.random.uniform(k_whh, (hidden_dim, hidden_dim), jnp.float32, -bound, bound),
        "b_ih": jax.random.uniform(k_bih, (hidden_dim,), jnp.float32, -bound, bound),
        "b_hh": jax.random.uniform(k_bhh, (hidden_dim,), jnp.float32, -bound, bound),
        "fc_w": jax.random.uniform(k_fw, (output_dim, hidden_dim), jnp.float32, -bound, bound),
        "fc_b": jax.random.uniform(k_fb, (output_dim,), jnp.float32, -bound, bound),
    }

    # Token ids, (seq_len, batch) as nn.RNN (batch_first=False) expects.
    text = jax.random.randint(k_txt, (seq_len, batch), 0, vocab_size, dtype=jnp.int32)

    out = model_forward(text, params)
    out = jax.block_until_ready(out)

    ref = model_forward_ref(text, params)
    assert out.shape == (seq_len, output_dim), out.shape
    assert jnp.allclose(out, ref, atol=1e-4, rtol=1e-4), (
        f"max abs err {jnp.max(jnp.abs(out - ref))}"
    )

    print("KERNEL_OK")
</pallas_src>

<mosaic_0001>
module attributes {stable_mosaic.version = 11 : i64} {
  func.func @fused_textrnn_kernel(%arg0: i32, %arg1: memref<8x1xi32, #tpu.memory_space<vmem>>, %arg2: memref<50x32xf32, #tpu.memory_space<vmem>>, %arg3: memref<32x32xf32, #tpu.memory_space<vmem>>, %arg4: memref<1x32xf32, #tpu.memory_space<vmem>>, %arg5: memref<32x8xf32, #tpu.memory_space<vmem>>, %arg6: memref<1x8xf32, #tpu.memory_space<vmem>>, %arg7: memref<8x8xf32, #tpu.memory_space<vmem>>) attributes {dimension_semantics = [#tpu.dimension_semantics<arbitrary>], iteration_bounds = array<i64: 1>, scalar_prefetch = 0 : i64, scratch_operands = 0 : i64, tpu.core_type = #tpu.core_type<tc>, window_params = [{pipeline_mode = #tpu.pipeline_mode<synchronous>, transform_indices = @transform_0, window_bounds = array<i64: 8, 1>}, {pipeline_mode = #tpu.pipeline_mode<synchronous>, transform_indices = @transform_1, window_bounds = array<i64: 50, 32>}, {pipeline_mode = #tpu.pipeline_mode<synchronous>, transform_indices = @transform_2, window_bounds = array<i64: 32, 32>}, {pipeline_mode = #tpu.pipeline_mode<synchronous>, transform_indices = @transform_3, window_bounds = array<i64: 1, 32>}, {pipeline_mode = #tpu.pipeline_mode<synchronous>, transform_indices = @transform_4, window_bounds = array<i64: 32, 8>}, {pipeline_mode = #tpu.pipeline_mode<synchronous>, transform_indices = @transform_5, window_bounds = array<i64: 1, 8>}, {pipeline_mode = #tpu.pipeline_mode<synchronous>, transform_indices = @transform_6, window_bounds = array<i64: 8, 8>}]} {
    %c0 = arith.constant 0 : index
    %c0_0 = arith.constant 0 : index
    %0 = vector.load %arg1[%c0, %c0_0] : memref<8x1xi32, #tpu.memory_space<vmem>>, vector<8x1xi32>
    %1 = tpu.iota {dimensions = array<i32: 1>} : vector<8x50xi32>
    %2 = vector.broadcast %0 : vector<8x1xi32> to vector<8x50xi32>
    %3 = arith.cmpi eq, %1, %2 : vector<8x50xi32>
    %4 = arith.extui %3 : vector<8x50xi1> to vector<8x50xi32>
    %5 = arith.sitofp %4 : vector<8x50xi32> to vector<8x50xf32>
    %c0_1 = arith.constant 0 : index
    %c0_2 = arith.constant 0 : index
    %6 = vector.load %arg2[%c0_1, %c0_2] : memref<50x32xf32, #tpu.memory_space<vmem>>, vector<50x32xf32>
    %cst = arith.constant dense<0.000000e+00> : vector<8x32xf32>
    %7 = tpu.matmul %5, %6, %cst {dimension_numbers = #tpu.dot_dimension_numbers<[1], [0], [0], [1], [0, 0, 1, 1], [], []>, precision = #tpu.contract_precision<fp32>} : vector<8x50xf32>, vector<50x32xf32>, vector<8x32xf32> -> vector<8x32xf32>
    %c0_3 = arith.constant 0 : index
    %c0_4 = arith.constant 0 : index
    %8 = vector.load %arg4[%c0_3, %c0_4] : memref<1x32xf32, #tpu.memory_space<vmem>>, vector<1x32xf32>
    %9 = vector.broadcast %8 : vector<1x32xf32> to vector<8x32xf32>
    %10 = arith.addf %7, %9 : vector<8x32xf32>
    %c0_5 = arith.constant 0 : index
    %c0_6 = arith.constant 0 : index
    %11 = vector.load %arg3[%c0_5, %c0_6] : memref<32x32xf32, #tpu.memory_space<vmem>>, vector<32x32xf32>
    %cst_7 = arith.constant 0.000000e+00 : f32
    %12 = vector.broadcast %cst_7 : f32 to vector<1x32xf32>
    %13 = vector.extract_strided_slice %10 {offsets = [0, 0], sizes = [1, 32], strides = [1, 1]} : vector<8x32xf32> to vector<1x32xf32>
    %cst_8 = arith.constant dense<0.000000e+00> : vector<1x32xf32>
    %14 = tpu.matmul %12, %11, %cst_8 {dimension_numbers = #tpu.dot_dimension_numbers<[1], [0], [0], [1], [0, 0, 1, 1], [], []>, precision = #tpu.contract_precision<fp32>} : vector<1x32xf32>, vector<32x32xf32>, vector<1x32xf32> -> vector<1x32xf32>
    %15 = arith.addf %13, %14 : vector<1x32xf32>
    %16 = math.tanh %15 : vector<1x32xf32>
    %17 = vector.extract_strided_slice %10 {offsets = [1, 0], sizes = [1, 32], strides = [1, 1]} : vector<8x32xf32> to vector<1x32xf32>
    %cst_9 = arith.constant dense<0.000000e+00> : vector<1x32xf32>
    %18 = tpu.matmul %16, %11, %cst_9 {dimension_numbers = #tpu.dot_dimension_numbers<[1], [0], [0], [1], [0, 0, 1, 1], [], []>, precision = #tpu.contract_precision<fp32>} : vector<1x32xf32>, vector<32x32xf32>, vector<1x32xf32> -> vector<1x32xf32>
    %19 = arith.addf %17, %18 : vector<1x32xf32>
    %20 = math.tanh %19 : vector<1x32xf32>
    %21 = vector.extract_strided_slice %10 {offsets = [2, 0], sizes = [1, 32], strides = [1, 1]} : vector<8x32xf32> to vector<1x32xf32>
    %cst_10 = arith.constant dense<0.000000e+00> : vector<1x32xf32>
    %22 = tpu.matmul %20, %11, %cst_10 {dimension_numbers = #tpu.dot_dimension_numbers<[1], [0], [0], [1], [0, 0, 1, 1], [], []>, precision = #tpu.contract_precision<fp32>} : vector<1x32xf32>, vector<32x32xf32>, vector<1x32xf32> -> vector<1x32xf32>
    %23 = arith.addf %21, %22 : vector<1x32xf32>
    %24 = math.tanh %23 : vector<1x32xf32>
    %25 = vector.extract_strided_slice %10 {offsets = [3, 0], sizes = [1, 32], strides = [1, 1]} : vector<8x32xf32> to vector<1x32xf32>
    %cst_11 = arith.constant dense<0.000000e+00> : vector<1x32xf32>
    %26 = tpu.matmul %24, %11, %cst_11 {dimension_numbers = #tpu.dot_dimension_numbers<[1], [0], [0], [1], [0, 0, 1, 1], [], []>, precision = #tpu.contract_precision<fp32>} : vector<1x32xf32>, vector<32x32xf32>, vector<1x32xf32> -> vector<1x32xf32>
    %27 = arith.addf %25, %26 : vector<1x32xf32>
    %28 = math.tanh %27 : vector<1x32xf32>
    %29 = vector.extract_strided_slice %10 {offsets = [4, 0], sizes = [1, 32], strides = [1, 1]} : vector<8x32xf32> to vector<1x32xf32>
    %cst_12 = arith.constant dense<0.000000e+00> : vector<1x32xf32>
    %30 = tpu.matmul %28, %11, %cst_12 {dimension_numbers = #tpu.dot_dimension_numbers<[1], [0], [0], [1], [0, 0, 1, 1], [], []>, precision = #tpu.contract_precision<fp32>} : vector<1x32xf32>, vector<32x32xf32>, vector<1x32xf32> -> vector<1x32xf32>
    %31 = arith.addf %29, %30 : vector<1x32xf32>
    %32 = math.tanh %31 : vector<1x32xf32>
    %33 = vector.extract_strided_slice %10 {offsets = [5, 0], sizes = [1, 32], strides = [1, 1]} : vector<8x32xf32> to vector<1x32xf32>
    %cst_13 = arith.constant dense<0.000000e+00> : vector<1x32xf32>
    %34 = tpu.matmul %32, %11, %cst_13 {dimension_numbers = #tpu.dot_dimension_numbers<[1], [0], [0], [1], [0, 0, 1, 1], [], []>, precision = #tpu.contract_precision<fp32>} : vector<1x32xf32>, vector<32x32xf32>, vector<1x32xf32> -> vector<1x32xf32>
    %35 = arith.addf %33, %34 : vector<1x32xf32>
    %36 = math.tanh %35 : vector<1x32xf32>
    %37 = vector.extract_strided_slice %10 {offsets = [6, 0], sizes = [1, 32], strides = [1, 1]} : vector<8x32xf32> to vector<1x32xf32>
    %cst_14 = arith.constant dense<0.000000e+00> : vector<1x32xf32>
    %38 = tpu.matmul %36, %11, %cst_14 {dimension_numbers = #tpu.dot_dimension_numbers<[1], [0], [0], [1], [0, 0, 1, 1], [], []>, precision = #tpu.contract_precision<fp32>} : vector<1x32xf32>, vector<32x32xf32>, vector<1x32xf32> -> vector<1x32xf32>
    %39 = arith.addf %37, %38 : vector<1x32xf32>
    %40 = math.tanh %39 : vector<1x32xf32>
    %41 = vector.extract_strided_slice %10 {offsets = [7, 0], sizes = [1, 32], strides = [1, 1]} : vector<8x32xf32> to vector<1x32xf32>
    %cst_15 = arith.constant dense<0.000000e+00> : vector<1x32xf32>
    %42 = tpu.matmul %40, %11, %cst_15 {dimension_numbers = #tpu.dot_dimension_numbers<[1], [0], [0], [1], [0, 0, 1, 1], [], []>, precision = #tpu.contract_precision<fp32>} : vector<1x32xf32>, vector<32x32xf32>, vector<1x32xf32> -> vector<1x32xf32>
    %43 = arith.addf %41, %42 : vector<1x32xf32>
    %44 = math.tanh %43 : vector<1x32xf32>
    %45 = tpu.concatenate %16, %20, %24, %28, %32, %36, %40, %44 in 0 : vector<1x32xf32>, vector<1x32xf32>, vector<1x32xf32>, vector<1x32xf32>, vector<1x32xf32>, vector<1x32xf32>, vector<1x32xf32>, vector<1x32xf32> -> vector<8x32xf32>
    %c0_16 = arith.constant 0 : index
    %c0_17 = arith.constant 0 : index
    %46 = vector.load %arg5[%c0_16, %c0_17] : memref<32x8xf32, #tpu.memory_space<vmem>>, vector<32x8xf32>
    %cst_18 = arith.constant dense<0.000000e+00> : vector<8x8xf32>
    %47 = tpu.matmul %45, %46, %cst_18 {dimension_numbers = #tpu.dot_dimension_numbers<[1], [0], [0], [1], [0, 0, 1, 1], [], []>, precision = #tpu.contract_precision<fp32>} : vector<8x32xf32>, vector<32x8xf32>, vector<8x8xf32> -> vector<8x8xf32>
    %c0_19 = arith.constant 0 : index
    %c0_20 = arith.constant 0 : index
    %48 = vector.load %arg6[%c0_19, %c0_20] : memref<1x8xf32, #tpu.memory_space<vmem>>, vector<1x8xf32>
    %49 = vector.broadcast %48 : vector<1x8xf32> to vector<8x8xf32>
    %50 = arith.addf %47, %49 : vector<8x8xf32>
    %c0_21 = arith.constant 0 : index
    %c0_22 = arith.constant 0 : index
    %51 = vector.load %arg7[%c0_21, %c0_22] : memref<8x8xf32, #tpu.memory_space<vmem>>, vector<8x8xf32>
    tpu.vector_store %arg7[%c0_21, %c0_22], %50 {strides = array<i32>} : memref<8x8xf32, #tpu.memory_space<vmem>>, vector<8x8xf32>,
    return
  }
  func.func @transform_0(%arg0: i32) -> (i32, i32) {
    %c0_i32 = arith.constant 0 : i32
    %c0_i32_0 = arith.constant 0 : i32
    %c0_i32_1 = arith.constant 0 : i32
    return %c0_i32, %c0_i32_0 : i32, i32
  }
  func.func @transform_1(%arg0: i32) -> (i32, i32) {
    %c0_i32 = arith.constant 0 : i32
    %c0_i32_0 = arith.constant 0 : i32
    %c0_i32_1 = arith.constant 0 : i32
    return %c0_i32, %c0_i32_0 : i32, i32
  }
  func.func @transform_2(%arg0: i32) -> (i32, i32) {
    %c0_i32 = arith.constant 0 : i32
    %c0_i32_0 = arith.constant 0 : i32
    %c0_i32_1 = arith.constant 0 : i32
    return %c0_i32, %c0_i32_0 : i32, i32
  }
  func.func @transform_3(%arg0: i32) -> (i32, i32) {
    %c0_i32 = arith.constant 0 : i32
    %c0_i32_0 = arith.constant 0 : i32
    %c0_i32_1 = arith.constant 0 : i32
    return %c0_i32, %c0_i32_0 : i32, i32
  }
  func.func @transform_4(%arg0: i32) -> (i32, i32) {
    %c0_i32 = arith.constant 0 : i32
    %c0_i32_0 = arith.constant 0 : i32
    %c0_i32_1 = arith.constant 0 : i32
    return %c0_i32, %c0_i32_0 : i32, i32
  }
  func.func @transform_5(%arg0: i32) -> (i32, i32) {
    %c0_i32 = arith.constant 0 : i32
    %c0_i32_0 = arith.constant 0 : i32
    %c0_i32_1 = arith.constant 0 : i32
    return %c0_i32, %c0_i32_0 : i32, i32
  }
  func.func @transform_6(%arg0: i32) -> (i32, i32) {
    %c0_i32 = arith.constant 0 : i32
    %c0_i32_0 = arith.constant 0 : i32
    %c0_i32_1 = arith.constant 0 : i32
    return %c0_i32, %c0_i32_0 : i32, i32
  }
}

</mosaic_0001>

<llo_original>
// kernel: tpu_custom_call.1
$region0: #{tpu_custom_call.1}
  #allocation0 [shape = 'u32[]', space=smem, size = 0x4, offset = 0x4, fixed_abs, tag = 'smem constant byte address 0x4 - core index']
  #allocation1 [shape = 'u32[144,128]{1,0:T(1,128)}', space=vmem, size = 0x12000, scoped, tag = 'internal scratch']
  %s0 = inlined_call_operand.vmem [shape: s32[8,1], index: 0, kind: input, shape index: {}]
  %s1 = inlined_call_operand.vmem [shape: f32[50,32], index: 1, kind: input, shape index: {}]
  %s2 = inlined_call_operand.vmem [shape: f32[32,32], index: 2, kind: input, shape index: {}]
  %s3 = inlined_call_operand.vmem [shape: f32[1,32], index: 3, kind: input, shape index: {}]
  %s4 = inlined_call_operand.vmem [shape: f32[32,8], index: 4, kind: input, shape index: {}]
  %s5 = inlined_call_operand.vmem [shape: f32[1,8], index: 5, kind: input, shape index: {}]
  %s6 = inlined_call_operand.hbm [shape: f32[8,8], index: 6, kind: output, shape index: {}]
  %s7 = sld [smem:[#allocation0]]
  $region34: #{tpu_custom_call.1} parent=0
    _
  %s9 = ssub.s32 1, %s7
  %s10 = scalar_select 0, %s9, %s7
  $region1: #{tpu_custom_call.1} parent=0
    #allocation2 [shape = 'u8[4096]{0}', space=vmem, size = 0x1000, scoped, tag = 'output window, operand 0, single buffered']
    #allocation3 [shape = 's32[1]{0}', space=sflag, size = 0x4, scoped, tag = 'scoped memory for tpu_custom_call.1']
    %11 = vsyncpa [#allocation3], 0
    // Predicated region
    $region2: #{tpu_custom_call.1} parent=1 // pred_check
      _
    $region3: #{tpu_custom_call.1} parent=1 // pred_check_branch
      %13 = sbr.rel (0) target = $region5
    $region4: #{tpu_custom_call.1} parent=1 // pred_region
      _
    $region5: #{tpu_custom_call.1} parent=1 // pred_fallthru
      _
    // Predicated region
    $region6: #{tpu_custom_call.1} parent=1 // pred_check
      _
    $region7: #{tpu_custom_call.1} parent=1 // pred_check_branch
      %15 = sbr.rel (0) target = $region9
    $region8: #{tpu_custom_call.1} parent=1 // pred_region
      _
    $region9: #{tpu_custom_call.1} parent=1 // pred_fallthru
      _
    // Predicated region
    $region10: #{tpu_custom_call.1} parent=1 // pred_check
      _
    $region11: #{tpu_custom_call.1} parent=1 // pred_check_branch
      %17 = sbr.rel (0) target = $region13
    $region12: #{tpu_custom_call.1} parent=1 // pred_region
      _
    $region13: #{tpu_custom_call.1} parent=1 // pred_fallthru
      _
    // Predicated region
    $region14: #{tpu_custom_call.1} parent=1 // pred_check
      _
    $region15: #{tpu_custom_call.1} parent=1 // pred_check_branch
      %19 = sbr.rel (0) target = $region17
    $region16: #{tpu_custom_call.1} parent=1 // pred_region
      _
    $region17: #{tpu_custom_call.1} parent=1 // pred_fallthru
      _
    // Predicated region
    $region18: #{tpu_custom_call.1} parent=1 // pred_check
      _
    $region19: #{tpu_custom_call.1} parent=1 // pred_check_branch
      %21 = sbr.rel (0) target = $region21
    $region20: #{tpu_custom_call.1} parent=1 // pred_region
      _
    $region21: #{tpu_custom_call.1} parent=1 // pred_fallthru
      _
    // Predicated region
    $region22: #{tpu_custom_call.1} parent=1 // pred_check
      _
    $region23: #{tpu_custom_call.1} parent=1 // pred_check_branch
      %23 = sbr.rel (0) target = $region25
    $region24: #{tpu_custom_call.1} parent=1 // pred_region
      _
    $region25: #{tpu_custom_call.1} parent=1 // pred_fallthru
      _
    %v24 = vld [vmem:[%s0] sm:$0xff]
    %v25 = vlaneseq
    %v26 = vand.u32 %v25, 127
    %27 = vset.pattern.permute.xlu0 0
    %28 = vperm.xlu0 %27, %v24
    %v29 = vpop.permute.xlu0 %28
    %vm30 = vcmp.eq.s32.totalorder %v26, %v29
    %v31 = vsel %vm30, 1, 0
    %v32 = vcvt.s32.f32 %v31
    %v33 = vld [vmem:[%s1] sm:$0xff]
    %v34 = vld [vmem:[%s1 + $0x8] sm:$0xff]
    %v35 = vld [vmem:[%s1 + $0x10] sm:$0xff]
    %v36 = vld [vmem:[%s1 + $0x18] sm:$0xff]
    %v37 = vld [vmem:[%s1 + $0x20] sm:$0xff]
    %v38 = vld [vmem:[%s1 + $0x28] sm:$0xff]
    %v39 = vld [vmem:[%s1 + $0x30] sm:$0x3]
    %v40 = vld [vmem:[%s3] sm:$0x1]
    %v42 = vlaneseq
    %v43 = vshrl.u32 %v42, 7
    %v44 = vsub.s32 0, %v43
    %v45 = vrot.slane %v40, %v44
    %vm47 = vcmask 408576
    %v49 = vsel %vm47, %v32, 0
    %vm51 = vcmask 1041408
    %v53 = vsel %vm51, %v39, 0
    %55 = vmatprep.subr.mxu0 0.0
    %v56 = vand.u32 %v33, 4294901760
    %57 = vmatpush1.msra.mxu0 %v56
    %58 = vmatprep.subr.mxu0 0.0
    %v59 = vand.u32 %v34, 4294901760
    %60 = vmatpush1.msra.mxu0 %v59
    %61 = vmatprep.subr.mxu0 0.0
    %v62 = vand.u32 %v35, 4294901760
    %63 = vmatpush1.msra.mxu0 %v62
    %64 = vmatprep.subr.mxu0 0.0
    %v65 = vand.u32 %v36, 4294901760
    %66 = vmatpush1.msra.mxu0 %v65
    %67 = vmatprep.subr.mxu0 0.0
    %v68 = vand.u32 %v37, 4294901760
    %69 = vmatpush1.msra.mxu0 %v68
    %70 = vmatprep.subr.mxu0 0.0
    %v71 = vand.u32 %v38, 4294901760
    %72 = vmatpush1.msra.mxu0 %v71
    %73 = vmatprep.subr.mxu0 0.0
    %v74 = vand.u32 %v53, 4294901760
    %75 = vmatpush1.msra.mxu0 %v74
    %76 = vmatprep.subr.mxu0 0.0
    %77 = vmatpush1.msra.mxu0 0.0
    %78 = vmatprep.subr.mxu0 0.0
    %79 = vmatpush1.msra.mxu0 0.0
    %80 = vmatprep.subr.mxu0 0.0
    %81 = vmatpush1.msra.mxu0 0.0
    %82 = vmatprep.subr.mxu0 0.0
    %83 = vmatpush1.msra.mxu0 0.0
    %84 = vmatprep.subr.mxu0 0.0
    %85 = vmatpush1.msra.mxu0 0.0
    %86 = vmatprep.subr.mxu0 0.0
    %87 = vmatpush1.msra.mxu0 0.0
    %88 = vmatprep.subr.mxu0 0.0
    %89 = vmatpush1.msra.mxu0 0.0
    %90 = vmatprep.subr.mxu0 0.0
    %91 = vmatpush1.msra.mxu0 0.0
    %92 = vmatprep.subr.mxu0 0.0
    %93 = vmatpush1.msra.mxu0 0.0
    %94 = vmatprep.subr.mxu0 0.0
    %95 = vmatpush1.msra.mxu0 0.0
    %96 = vmatprep.subr.mxu0 0.0
    %97 = vmatpush1.msra.mxu0 0.0
    %98 = vmatprep.subr.mxu0 0.0
    %99 = vmatpush1.msra.mxu0 0.0
    %100 = vmatprep.subr.mxu0 0.0
    %101 = vmatpush1.msra.mxu0 0.0
    %102 = vmatprep.subr.mxu0 0.0
    %103 = vmatpush1.msra.mxu0 0.0
    %104 = vmatprep.subr.mxu0 0.0
    %105 = vmatpush1.msra.mxu0 0.0
    %106 = vmatprep.subr.mxu0 0.0
    %107 = vmatpush1.msra.mxu0 0.0
    %108 = vmatprep.subr.mxu0 0.0
    %109 = vmatpush1.msra.mxu0 0.0
    %110 = vmatprep.subr.mxu0 0.0
    %111 = vmatpush1.msra.mxu0 0.0
    %112 = vmatprep.subr.mxu0 0.0
    %113 = vmatpush1.msra.mxu0 0.0
    %114 = vmatprep.subr.mxu0 0.0
    %115 = vmatpush1.msra.mxu0 0.0
    %116 = vmatprep.subr.mxu0 0.0
    %117 = vmatpush1.msra.mxu0 0.0
    %118 = vmatprep.subr.mxu0 0.0
    %119 = vmatpush1.msra.mxu0 0.0
    %120 = vmatprep.subr.mxu0 0.0
    %121 = vmatpush1.msra.mxu0 0.0
    %122 = vmatprep.subr.mxu0 0.0
    %123 = vmatpush1.msra.mxu0 0.0
    %124 = vmatprep.subr.mxu0 0.0
    %125 = vmatpush1.msra.mxu0 0.0
    %126 = vmatprep.mubr.f32.mxu0 0.0
    %v127 = vand.u32 %v49, 4294901760
    %v128 = vsub.f32 %v49, %v127
    %v129 = vand.u32 %v128, 4294901760
    %v130 = vsub.f32 %v128, %v129
    %v131 = vand.u32 %v130, 4294901760
    %132 = vmatmul.mubr.f32.gmra.mrb[0].mxu0 %v131
    %v133 = vpop.f32.mrb[0].mxu0
    %v134 = vadd.f32 %v45, %v133
    %v135 = vpop.f32.mrb[0].mxu0
    %136 = vdwg.mxu0
    %137 = vmatprep.subr.mxu0 0.0
    %v138 = vand.u32 %v33, 4294901760
    %v139 = vsub.f32 %v33, %v138
    %v140 = vand.u32 %v139, 4294901760
    %v141 = vsub.f32 %v139, %v140
    %v142 = vand.u32 %v141, 4294901760
    %143 = vmatpush1.msra.mxu0 %v142
    %144 = vmatprep.subr.mxu0 0.0
    %v145 = vand.u32 %v34, 4294901760
    %v146 = vsub.f32 %v34, %v145
    %v147 = vand.u32 %v146, 4294901760
    %v148 = vsub.f32 %v146, %v147
    %v149 = vand.u32 %v148, 4294901760
    %150 = vmatpush1.msra.mxu0 %v149
    %151 = vmatprep.subr.mxu0 0.0
    %v152 = vand.u32 %v35, 4294901760
    %v153 = vsub.f32 %v35, %v152
    %v154 = vand.u32 %v153, 4294901760
    %v155 = vsub.f32 %v153, %v154
    %v156 = vand.u32 %v155, 4294901760
    %157 = vmatpush1.msra.mxu0 %v156
    %158 = vmatprep.subr.mxu0 0.0
    %v159 = vand.u32 %v36, 4294901760
    %v160 = vsub.f32 %v36, %v159
    %v161 = vand.u32 %v160, 4294901760
    %v162 = vsub.f32 %v160, %v161
    %v163 = vand.u32 %v162, 4294901760
    %164 = vmatpush1.msra.mxu0 %v163
    %165 = vmatprep.subr.mxu0 0.0
    %v166 = vand.u32 %v37, 4294901760
    %v167 = vsub.f32 %v37, %v166
    %v168 = vand.u32 %v167, 4294901760
    %v169 = vsub.f32 %v167, %v168
    %v170 = vand.u32 %v169, 4294901760
    %171 = vmatpush1.msra.mxu0 %v170
    %172 = vmatprep.subr.mxu0 0.0
    %v173 = vand.u32 %v38, 4294901760
    %v174 = vsub.f32 %v38, %v173
    %v175 = vand.u32 %v174, 4294901760
    %v176 = vsub.f32 %v174, %v175
    %v177 = vand.u32 %v176, 4294901760
    %178 = vmatpush1.msra.mxu0 %v177
    %179 = vmatprep.subr.mxu0 0.0
    %v180 = vand.u32 %v53, 4294901760
    %v181 = vsub.f32 %v53, %v180
    %v182 = vand.u32 %v181, 4294901760
    %v183 = vsub.f32 %v181, %v182
    %v184 = vand.u32 %v183, 4294901760
    %185 = vmatpush1.msra.mxu0 %v184
    %186 = vmatprep.subr.mxu0 0.0
    %187 = vmatpush1.msra.mxu0 0.0
    %188 = vmatprep.subr.mxu0 0.0
    %189 = vmatpush1.msra.mxu0 0.0
    %190 = vmatprep.subr.mxu0 0.0
    %191 = vmatpush1.msra.mxu0 0.0
    %192 = vmatprep.subr.mxu0 0.0
    %193 = vmatpush1.msra.mxu0 0.0
    %194 = vmatprep.subr.mxu0 0.0
    %195 = vmatpush1.msra.mxu0 0.0
    %196 = vmatprep.subr.mxu0 0.0
    %197 = vmatpush1.msra.mxu0 0.0
    %198 = vmatprep.subr.mxu0 0.0
    %199 = vmatpush1.msra.mxu0 0.0
    %200 = vmatprep.subr.mxu0 0.0
    %201 = vmatpush1.msra.mxu0 0.0
    %202 = vmatprep.subr.mxu0 0.0
    %203 = vmatpush1.msra.mxu0 0.0
    %204 = vmatprep.subr.mxu0 0.0
    %205 = vmatpush1.msra.mxu0 0.0
    %206 = vmatprep.subr.mxu0 0.0
    %207 = vmatpush1.msra.mxu0 0.0
    %208 = vmatprep.subr.mxu0 0.0
    %209 = vmatpush1.msra.mxu0 0.0
    %210 = vmatprep.subr.mxu0 0.0
    %211 = vmatpush1.msra.mxu0 0.0
    %212 = vmatprep.subr.mxu0 0.0
    %213 = vmatpush1.msra.mxu0 0.0
    %214 = vmatprep.subr.mxu0 0.0
    %215 = vmatpush1.msra.mxu0 0.0
    %216 = vmatprep.subr.mxu0 0.0
    %217 = vmatpush1.msra.mxu0 0.0
    %218 = vmatprep.subr.mxu0 0.0
    %219 = vmatpush1.msra.mxu0 0.0
    %220 = vmatprep.subr.mxu0 0.0
    %221 = vmatpush1.msra.mxu0 0.0
    %222 = vmatprep.subr.mxu0 0.0
    %223 = vmatpush1.msra.mxu0 0.0
    %224 = vmatprep.subr.mxu0 0.0
    %225 = vmatpush1.msra.mxu0 0.0
    %226 = vmatprep.subr.mxu0 0.0
    %227 = vmatpush1.msra.mxu0 0.0
    %228 = vmatprep.subr.mxu0 0.0
    %229 = vmatpush1.msra.mxu0 0.0
    %230 = vmatprep.subr.mxu0 0.0
    %231 = vmatpush1.msra.mxu0 0.0
    %232 = vmatprep.subr.mxu0 0.0
    %233 = vmatpush1.msra.mxu0 0.0
    %234 = vmatprep.subr.mxu0 0.0
    %235 = vmatpush1.msra.mxu0 0.0
    %236 = vmatprep.mubr.f32.mxu0 0.0
    %v237 = vand.u32 %v49, 4294901760
    %238 = vmatmul.mubr.f32.gmra.mrb[0].mxu0 %v237
    %v239 = vpop.f32.mrb[0].mxu0
    %v240 = vadd.f32 %v134, %v239
    %v241 = vpop.f32.mrb[0].mxu0
    %242 = vdwg.mxu0
    %243 = vmatprep.subr.mxu0 0.0
    %v244 = vand.u32 %v33, 4294901760
    %v245 = vsub.f32 %v33, %v244
    %246 = vmatpush1.msra.mxu0 %v245
    %247 = vmatprep.subr.mxu0 0.0
    %v248 = vand.u32 %v34, 4294901760
    %v249 = vsub.f32 %v34, %v248
    %250 = vmatpush1.msra.mxu0 %v249
    %251 = vmatprep.subr.mxu0 0.0
    %v252 = vand.u32 %v35, 4294901760
    %v253 = vsub.f32 %v35, %v252
    %254 = vmatpush1.msra.mxu0 %v253
    %255 = vmatprep.subr.mxu0 0.0
    %v256 = vand.u32 %v36, 4294901760
    %v257 = vsub.f32 %v36, %v256
    %258 = vmatpush1.msra.mxu0 %v257
    %259 = vmatprep.subr.mxu0 0.0
    %v260 = vand.u32 %v37, 4294901760
    %v261 = vsub.f32 %v37, %v260
    %262 = vmatpush1.msra.mxu0 %v261
    %263 = vmatprep.subr.mxu0 0.0
    %v264 = vand.u32 %v38, 4294901760
    %v265 = vsub.f32 %v38, %v264
    %266 = vmatpush1.msra.mxu0 %v265
    %267 = vmatprep.subr.mxu0 0.0
    %v268 = vand.u32 %v53, 4294901760
    %v269 = vsub.f32 %v53, %v268
    %270 = vmatpush1.msra.mxu0 %v269
    %271 = vmatprep.subr.mxu0 0.0
    %272 = vmatpush1.msra.mxu0 0.0
    %273 = vmatprep.subr.mxu0 0.0
    %274 = vmatpush1.msra.mxu0 0.0
    %275 = vmatprep.subr.mxu0 0.0
    %276 = vmatpush1.msra.mxu0 0.0
    %277 = vmatprep.subr.mxu0 0.0
    %278 = vmatpush1.msra.mxu0 0.0
    %279 = vmatprep.subr.mxu0 0.0
    %280 = vmatpush1.msra.mxu0 0.0
    %281 = vmatprep.subr.mxu0 0.0
    %282 = vmatpush1.msra.mxu0 0.0
    %283 = vmatprep.subr.mxu0 0.0
    %284 = vmatpush1.msra.mxu0 0.0
    %285 = vmatprep.subr.mxu0 0.0
    %286 = vmatpush1.msra.mxu0 0.0
    %287 = vmatprep.subr.mxu0 0.0
    %288 = vmatpush1.msra.mxu0 0.0
    %289 = vmatprep.subr.mxu0 0.0
    %290 = vmatpush1.msra.mxu0 0.0
    %291 = vmatprep.subr.mxu0 0.0
    %292 = vmatpush1.msra.mxu0 0.0
    %293 = vmatprep.subr.mxu0 0.0
    %294 = vmatpush1.msra.mxu0 0.0
    %295 = vmatprep.subr.mxu0 0.0
    %296 = vmatpush1.msra.mxu0 0.0
    %297 = vmatprep.subr.mxu0 0.0
    %298 = vmatpush1.msra.mxu0 0.0
    %299 = vmatprep.subr.mxu0 0.0
    %300 = vmatpush1.msra.mxu0 0.0
    %301 = vmatprep.subr.mxu0 0.0
    %302 = vmatpush1.msra.mxu0 0.0
    %303 = vmatprep.subr.mxu0 0.0
    %304 = vmatpush1.msra.mxu0 0.0
    %305 = vmatprep.subr.mxu0 0.0
    %306 = vmatpush1.msra.mxu0 0.0
    %307 = vmatprep.subr.mxu0 0.0
    %308 = vmatpush1.msra.mxu0 0.0
    %309 = vmatprep.subr.mxu0 0.0
    %310 = vmatpush1.msra.mxu0 0.0
    %311 = vmatprep.subr.mxu0 0.0
    %312 = vmatpush1.msra.mxu0 0.0
    %313 = vmatprep.subr.mxu0 0.0
    %314 = vmatpush1.msra.mxu0 0.0
    %315 = vmatprep.subr.mxu0 0.0
    %316 = vmatpush1.msra.mxu0 0.0
    %317 = vmatprep.subr.mxu0 0.0
    %318 = vmatpush1.msra.mxu0 0.0
    %319 = vmatprep.subr.mxu0 0.0
    %320 = vmatpush1.msra.mxu0 0.0
    %321 = vmatprep.mubr.f32.mxu0 0.0
    %v322 = vand.u32 %v49, 4294901760
    %v323 = vsub.f32 %v49, %v322
    %324 = vmatmul.mubr.f32.gmra.mrb[0].mxu0 %v323
    %v325 = vpop.f32.mrb[0].mxu0
    %v326 = vadd.f32 %v240, %v325
    %v327 = vpop.f32.mrb[0].mxu0
    %328 = vdwg.mxu0
    %329 = vmatprep.subr.mxu0 0.0
    %v330 = vand.u32 %v33, 4294901760
    %331 = vmatpush1.msra.mxu0 %v330
    %332 = vmatprep.subr.mxu0 0.0
    %v333 = vand.u32 %v34, 4294901760
    %334 = vmatpush1.msra.mxu0 %v333
    %335 = vmatprep.subr.mxu0 0.0
    %v336 = vand.u32 %v35, 4294901760
    %337 = vmatpush1.msra.mxu0 %v336
    %338 = vmatprep.subr.mxu0 0.0
    %v339 = vand.u32 %v36, 4294901760
    %340 = vmatpush1.msra.mxu0 %v339
    %341 = vmatprep.subr.mxu0 0.0
    %v342 = vand.u32 %v37, 4294901760
    %343 = vmatpush1.msra.mxu0 %v342
    %344 = vmatprep.subr.mxu0 0.0
    %v345 = vand.u32 %v38, 4294901760
    %346 = vmatpush1.msra.mxu0 %v345
    %347 = vmatprep.subr.mxu0 0.0
    %v348 = vand.u32 %v53, 4294901760
    %349 = vmatpush1.msra.mxu0 %v348
    %350 = vmatprep.subr.mxu0 0.0
    %351 = vmatpush1.msra.mxu0 0.0
    %352 = vmatprep.subr.mxu0 0.0
    %353 = vmatpush1.msra.mxu0 0.0
    %354 = vmatprep.subr.mxu0 0.0
    %355 = vmatpush1.msra.mxu0 0.0
    %356 = vmatprep.subr.mxu0 0.0
    %357 = vmatpush1.msra.mxu0 0.0
    %358 = vmatprep.subr.mxu0 0.0
    %359 = vmatpush1.msra.mxu0 0.0
    %360 = vmatprep.subr.mxu0 0.0
    %361 = vmatpush1.msra.mxu0 0.0
    %362 = vmatprep.subr.mxu0 0.0
    %363 = vmatpush1.msra.mxu0 0.0
    %364 = vmatprep.subr.mxu0 0.0
    %365 = vmatpush1.msra.mxu0 0.0
    %366 = vmatprep.subr.mxu0 0.0
    %367 = vmatpush1.msra.mxu0 0.0
    %368 = vmatprep.subr.mxu0 0.0
    %369 = vmatpush1.msra.mxu0 0.0
    %370 = vmatprep.subr.mxu0 0.0
    %371 = vmatpush1.msra.mxu0 0.0
    %372 = vmatprep.subr.mxu0 0.0
    %373 = vmatpush1.msra.mxu0 0.0
    %374 = vmatprep.subr.mxu0 0.0
    %375 = vmatpush1.msra.mxu0 0.0
    %376 = vmatprep.subr.mxu0 0.0
    %377 = vmatpush1.msra.mxu0 0.0
    %378 = vmatprep.subr.mxu0 0.0
    %379 = vmatpush1.msra.mxu0 0.0
    %380 = vmatprep.subr.mxu0 0.0
    %381 = vmatpush1.msra.mxu0 0.0
    %382 = vmatprep.subr.mxu0 0.0
    %383 = vmatpush1.msra.mxu0 0.0
    %384 = vmatprep.subr.mxu0 0.0
    %385 = vmatpush1.msra.mxu0 0.0
    %386 = vmatprep.subr.mxu0 0.0
    %387 = vmatpush1.msra.mxu0 0.0
    %388 = vmatprep.subr.mxu0 0.0
    %389 = vmatpush1.msra.mxu0 0.0
    %390 = vmatprep.subr.mxu0 0.0
    %391 = vmatpush1.msra.mxu0 0.0
    %392 = vmatprep.subr.mxu0 0.0
    %393 = vmatpush1.msra.mxu0 0.0
    %394 = vmatprep.subr.mxu0 0.0
    %395 = vmatpush1.msra.mxu0 0.0
    %396 = vmatprep.subr.mxu0 0.0
    %397 = vmatpush1.msra.mxu0 0.0
    %398 = vmatprep.subr.mxu0 0.0
    %399 = vmatpush1.msra.mxu0 0.0
    %400 = vmatprep.mubr.f32.mxu0 0.0
    %v401 = vand.u32 %v49, 4294901760
    %v402 = vsub.f32 %v49, %v401
    %v403 = vand.u32 %v402, 4294901760
    %404 = vmatmul.mubr.f32.gmra.mrb[0].mxu0 %v403
    %v405 = vpop.f32.mrb[0].mxu0
    %v406 = vadd.f32 %v326, %v405
    %v407 = vpop.f32.mrb[0].mxu0
    %408 = vdwg.mxu0
    %409 = vmatprep.subr.mxu0 0.0
    %v410 = vand.u32 %v33, 4294901760
    %v411 = vsub.f32 %v33, %v410
    %v412 = vand.u32 %v411, 4294901760
    %413 = vmatpush1.msra.mxu0 %v412
    %414 = vmatprep.subr.mxu0 0.0
    %v415 = vand.u32 %v34, 4294901760
    %v416 = vsub.f32 %v34, %v415
    %v417 = vand.u32 %v416, 4294901760
    %418 = vmatpush1.msra.mxu0 %v417
    %419 = vmatprep.subr.mxu0 0.0
    %v420 = vand.u32 %v35, 4294901760
    %v421 = vsub.f32 %v35, %v420
    %v422 = vand.u32 %v421, 4294901760
    %423 = vmatpush1.msra.mxu0 %v422
    %424 = vmatprep.subr.mxu0 0.0
    %v425 = vand.u32 %v36, 4294901760
    %v426 = vsub.f32 %v36, %v425
    %v427 = vand.u32 %v426, 4294901760
    %428 = vmatpush1.msra.mxu0 %v427
    %429 = vmatprep.subr.mxu0 0.0
    %v430 = vand.u32 %v37, 4294901760
    %v431 = vsub.f32 %v37, %v430
    %v432 = vand.u32 %v431, 4294901760
    %433 = vmatpush1.msra.mxu0 %v432
    %434 = vmatprep.subr.mxu0 0.0
    %v435 = vand.u32 %v38, 4294901760
    %v436 = vsub.f32 %v38, %v435
    %v437 = vand.u32 %v436, 4294901760
    %438 = vmatpush1.msra.mxu0 %v437
    %439 = vmatprep.subr.mxu0 0.0
    %v440 = vand.u32 %v53, 4294901760
    %v441 = vsub.f32 %v53, %v440
    %v442 = vand.u32 %v441, 4294901760
    %443 = vmatpush1.msra.mxu0 %v442
    %444 = vmatprep.subr.mxu0 0.0
    %445 = vmatpush1.msra.mxu0 0.0
    %446 = vmatprep.subr.mxu0 0.0
    %447 = vmatpush1.msra.mxu0 0.0
    %448 = vmatprep.subr.mxu0 0.0
    %449 = vmatpush1.msra.mxu0 0.0
    %450 = vmatprep.subr.mxu0 0.0
    %451 = vmatpush1.msra.mxu0 0.0
    %452 = vmatprep.subr.mxu0 0.0
    %453 = vmatpush1.msra.mxu0 0.0
    %454 = vmatprep.subr.mxu0 0.0
    %455 = vmatpush1.msra.mxu0 0.0
    %456 = vmatprep.subr.mxu0 0.0
    %457 = vmatpush1.msra.mxu0 0.0
    %458 = vmatprep.subr.mxu0 0.0
    %459 = vmatpush1.msra.mxu0 0.0
    %460 = vmatprep.subr.mxu0 0.0
    %461 = vmatpush1.msra.mxu0 0.0
    %462 = vmatprep.subr.mxu0 0.0
    %463 = vmatpush1.msra.mxu0 0.0
    %464 = vmatprep.subr.mxu0 0.0
    %465 = vmatpush1.msra.mxu0 0.0
    %466 = vmatprep.subr.mxu0 0.0
    %467 = vmatpush1.msra.mxu0 0.0
    %468 = vmatprep.subr.mxu0 0.0
    %469 = vmatpush1.msra.mxu0 0.0
    %470 = vmatprep.subr.mxu0 0.0
    %471 = vmatpush1.msra.mxu0 0.0
    %472 = vmatprep.subr.mxu0 0.0
    %473 = vmatpush1.msra.mxu0 0.0
    %474 = vmatprep.subr.mxu0 0.0
    %475 = vmatpush1.msra.mxu0 0.0
    %476 = vmatprep.subr.mxu0 0.0
    %477 = vmatpush1.msra.mxu0 0.0
    %478 = vmatprep.subr.mxu0 0.0
    %479 = vmatpush1.msra.mxu0 0.0
    %480 = vmatprep.subr.mxu0 0.0
    %481 = vmatpush1.msra.mxu0 0.0
    %482 = vmatprep.subr.mxu0 0.0
    %483 = vmatpush1.msra.mxu0 0.0
    %484 = vmatprep.subr.mxu0 0.0
    %485 = vmatpush1.msra.mxu0 0.0
    %486 = vmatprep.subr.mxu0 0.0
    %487 = vmatpush1.msra.mxu0 0.0
    %488 = vmatprep.subr.mxu0 0.0
    %489 = vmatpush1.msra.mxu0 0.0
    %490 = vmatprep.subr.mxu0 0.0
    %491 = vmatpush1.msra.mxu0 0.0
    %492 = vmatprep.subr.mxu0 0.0
    %493 = vmatpush1.msra.mxu0 0.0
    %494 = vmatprep.mubr.f32.mxu0 0.0
    %v495 = vand.u32 %v49, 4294901760
    %496 = vmatmul.mubr.f32.gmra.mrb[0].mxu0 %v495
    %v497 = vpop.f32.mrb[0].mxu0
    %v498 = vadd.f32 %v406, %v497
    %v499 = vpop.f32.mrb[0].mxu0
    %500 = vdwg.mxu0
    %501 = vmatprep.subr.mxu0 0.0
    %v502 = vand.u32 %v33, 4294901760
    %503 = vmatpush1.msra.mxu0 %v502
    %504 = vmatprep.subr.mxu0 0.0
    %v505 = vand.u32 %v34, 4294901760
    %506 = vmatpush1.msra.mxu0 %v505
    %507 = vmatprep.subr.mxu0 0.0
    %v508 = vand.u32 %v35, 4294901760
    %509 = vmatpush1.msra.mxu0 %v508
    %510 = vmatprep.subr.mxu0 0.0
    %v511 = vand.u32 %v36, 4294901760
    %512 = vmatpush1.msra.mxu0 %v511
    %513 = vmatprep.subr.mxu0 0.0
    %v514 = vand.u32 %v37, 4294901760
    %515 = vmatpush1.msra.mxu0 %v514
    %516 = vmatprep.subr.mxu0 0.0
    %v517 = vand.u32 %v38, 4294901760
    %518 = vmatpush1.msra.mxu0 %v517
    %519 = vmatprep.subr.mxu0 0.0
    %v520 = vand.u32 %v53, 4294901760
    %521 = vmatpush1.msra.mxu0 %v520
    %522 = vmatprep.subr.mxu0 0.0
    %523 = vmatpush1.msra.mxu0 0.0
    %524 = vmatprep.subr.mxu0 0.0
    %525 = vmatpush1.msra.mxu0 0.0
    %526 = vmatprep.subr.mxu0 0.0
    %527 = vmatpush1.msra.mxu0 0.0
    %528 = vmatprep.subr.mxu0 0.0
    %529 = vmatpush1.msra.mxu0 0.0
    %530 = vmatprep.subr.mxu0 0.0
    %531 = vmatpush1.msra.mxu0 0.0
    %532 = vmatprep.subr.mxu0 0.0
    %533 = vmatpush1.msra.mxu0 0.0
    %534 = vmatprep.subr.mxu0 0.0
    %535 = vmatpush1.msra.mxu0 0.0
    %536 = vmatprep.subr.mxu0 0.0
    %537 = vmatpush1.msra.mxu0 0.0
    %538 = vmatprep.subr.mxu0 0.0
    %539 = vmatpush1.msra.mxu0 0.0
    %540 = vmatprep.subr.mxu0 0.0
    %541 = vmatpush1.msra.mxu0 0.0
    %542 = vmatprep.subr.mxu0 0.0
    %543 = vmatpush1.msra.mxu0 0.0
    %544 = vmatprep.subr.mxu0 0.0
    %545 = vmatpush1.msra.mxu0 0.0
    %546 = vmatprep.subr.mxu0 0.0
    %547 = vmatpush1.msra.mxu0 0.0
    %548 = vmatprep.subr.mxu0 0.0
    %549 = vmatpush1.msra.mxu0 0.0
    %550 = vmatprep.subr.mxu0 0.0
    %551 = vmatpush1.msra.mxu0 0.0
    %552 = vmatprep.subr.mxu0 0.0
    %553 = vmatpush1.msra.mxu0 0.0
    %554 = vmatprep.subr.mxu0 0.0
    %555 = vmatpush1.msra.mxu0 0.0
    %556 = vmatprep.subr.mxu0 0.0
    %557 = vmatpush1.msra.mxu0 0.0
    %558 = vmatprep.subr.mxu0 0.0
    %559 = vmatpush1.msra.mxu0 0.0
    %560 = vmatprep.subr.mxu0 0.0
    %561 = vmatpush1.msra.mxu0 0.0
    %562 = vmatprep.subr.mxu0 0.0
    %563 = vmatpush1.msra.mxu0 0.0
    %564 = vmatprep.subr.mxu0 0.0
    %565 = vmatpush1.msra.mxu0 0.0
    %566 = vmatprep.subr.mxu0 0.0
    %567 = vmatpush1.msra.mxu0 0.0
    %568 = vmatprep.subr.mxu0 0.0
    %569 = vmatpush1.msra.mxu0 0.0
    %570 = vmatprep.subr.mxu0 0.0
    %571 = vmatpush1.msra.mxu0 0.0
    %572 = vmatprep.mubr.f32.mxu0 0.0
    %v573 = vand.u32 %v49, 4294901760
    %574 = vmatmul.mubr.f32.gmra.mrb[0].mxu0 %v573
    %v575 = vpop.f32.mrb[0].mxu0
    %v576 = vadd.f32 %v498, %v575
    %v577 = vpop.f32.mrb[0].mxu0
    %578 = vdwg.mxu0
    %v579 = vld [vmem:[%s2] sm:$0xff]
    %v580 = vld [vmem:[%s2 + $0x8] sm:$0xff]
    %v581 = vld [vmem:[%s2 + $0x10] sm:$0xff]
    %v582 = vld [vmem:[%s2 + $0x18] sm:$0xff]
    %vm583 = vcmask 261120
    %v585 = vsel %vm583, 0.0, 0
    %587 = vmatprep.subr.mxu0 0.0
    %v588 = vand.u32 %v579, 4294901760
    %589 = vmatpush1.msra.mxu0 %v588
    %590 = vmatprep.subr.mxu0 0.0
    %v591 = vand.u32 %v580, 4294901760
    %592 = vmatpush1.msra.mxu0 %v591
    %593 = vmatprep.subr.mxu0 0.0
    %v594 = vand.u32 %v581, 4294901760
    %595 = vmatpush1.msra.mxu0 %v594
    %596 = vmatprep.subr.mxu0 0.0
    %v597 = vand.u32 %v582, 4294901760
    %598 = vmatpush1.msra.mxu0 %v597
    %599 = vmatprep.subr.mxu0 0.0
    %600 = vmatpush1.msra.mxu0 0.0
    %601 = vmatprep.subr.mxu0 0.0
    %602 = vmatpush1.msra.mxu0 0.0
    %603 = vmatprep.subr.mxu0 0.0
    %604 = vmatpush1.msra.mxu0 0.0
    %605 = vmatprep.subr.mxu0 0.0
    %606 = vmatpush1.msra.mxu0 0.0
    %607 = vmatprep.subr.mxu0 0.0
    %608 = vmatpush1.msra.mxu0 0.0
    %609 = vmatprep.subr.mxu0 0.0
    %610 = vmatpush1.msra.mxu0 0.0
    %611 = vmatprep.subr.mxu0 0.0
    %612 = vmatpush1.msra.mxu0 0.0
    %613 = vmatprep.subr.mxu0 0.0
    %614 = vmatpush1.msra.mxu0 0.0
    %615 = vmatprep.subr.mxu0 0.0
    %616 = vmatpush1.msra.mxu0 0.0
    %617 = vmatprep.subr.mxu0 0.0
    %618 = vmatpush1.msra.mxu0 0.0
    %619 = vmatprep.subr.mxu0 0.0
    %620 = vmatpush1.msra.mxu0 0.0
    %621 = vmatprep.subr.mxu0 0.0
    %622 = vmatpush1.msra.mxu0 0.0
    %623 = vmatprep.subr.mxu0 0.0
    %624 = vmatpush1.msra.mxu0 0.0
    %625 = vmatprep.subr.mxu0 0.0
    %626 = vmatpush1.msra.mxu0 0.0
    %627 = vmatprep.subr.mxu0 0.0
    %628 = vmatpush1.msra.mxu0 0.0
    %629 = vmatprep.subr.mxu0 0.0
    %630 = vmatpush1.msra.mxu0 0.0
    %631 = vmatprep.subr.mxu0 0.0
    %632 = vmatpush1.msra.mxu0 0.0
    %633 = vmatprep.subr.mxu0 0.0
    %634 = vmatpush1.msra.mxu0 0.0
    %635 = vmatprep.subr.mxu0 0.0
    %636 = vmatpush1.msra.mxu0 0.0
    %637 = vmatprep.subr.mxu0 0.0
    %638 = vmatpush1.msra.mxu0 0.0
    %639 = vmatprep.subr.mxu0 0.0
    %640 = vmatpush1.msra.mxu0 0.0
    %641 = vmatprep.subr.mxu0 0.0
    %642 = vmatpush1.msra.mxu0 0.0
    %643 = vmatprep.subr.mxu0 0.0
    %644 = vmatpush1.msra.mxu0 0.0
    %645 = vmatprep.subr.mxu0 0.0
    %646 = vmatpush1.msra.mxu0 0.0
    %647 = vmatprep.subr.mxu0 0.0
    %648 = vmatpush1.msra.mxu0 0.0
    %649 = vmatprep.subr.mxu0 0.0
    %650 = vmatpush1.msra.mxu0 0.0
    %651 = vmatprep.subr.mxu0 0.0
    %652 = vmatpush1.msra.mxu0 0.0
    %653 = vmatprep.subr.mxu0 0.0
    %654 = vmatpush1.msra.mxu0 0.0
    %655 = vmatprep.mubr.f32.mxu0 0.0
    %v656 = vand.u32 %v585, 4294901760
    %v657 = vsub.f32 %v585, %v656
    %v658 = vand.u32 %v657, 4294901760
    %v659 = vsub.f32 %v657, %v658
    %v660 = vand.u32 %v659, 4294901760
    %661 = vmatmul.mubr.f32.gmra.mrb[0].mxu0 %v660
    %v662 = vpop.f32.mrb[0].mxu0
    %v663 = vadd.f32 0.0, %v662
    %v664 = vpop.f32.mrb[0].mxu0
    %665 = vdwg.mxu0
    %666 = vmatprep.subr.mxu0 0.0
    %v667 = vand.u32 %v579, 4294901760
    %v668 = vsub.f32 %v579, %v667
    %v669 = vand.u32 %v668, 4294901760
    %v670 = vsub.f32 %v668, %v669
    %v671 = vand.u32 %v670, 4294901760
    %672 = vmatpush1.msra.mxu0 %v671
    %673 = vmatprep.subr.mxu0 0.0
    %v674 = vand.u32 %v580, 4294901760
    %v675 = vsub.f32 %v580, %v674
    %v676 = vand.u32 %v675, 4294901760
    %v677 = vsub.f32 %v675, %v676
    %v678 = vand.u32 %v677, 4294901760
    %679 = vmatpush1.msra.mxu0 %v678
    %680 = vmatprep.subr.mxu0 0.0
    %v681 = vand.u32 %v581, 4294901760
    %v682 = vsub.f32 %v581, %v681
    %v683 = vand.u32 %v682, 4294901760
    %v684 = vsub.f32 %v682, %v683
    %v685 = vand.u32 %v684, 4294901760
    %686 = vmatpush1.msra.mxu0 %v685
    %687 = vmatprep.subr.mxu0 0.0
    %v688 = vand.u32 %v582, 4294901760
    %v689 = vsub.f32 %v582, %v688
    %v690 = vand.u32 %v689, 4294901760
    %v691 = vsub.f32 %v689, %v690
    %v692 = vand.u32 %v691, 4294901760
    %693 = vmatpush1.msra.mxu0 %v692
    %694 = vmatprep.subr.mxu0 0.0
    %695 = vmatpush1.msra.mxu0 0.0
    %696 = vmatprep.subr.mxu0 0.0
    %697 = vmatpush1.msra.mxu0 0.0
    %698 = vmatprep.subr.mxu0 0.0
    %699 = vmatpush1.msra.mxu0 0.0
    %700 = vmatprep.subr.mxu0 0.0
    %701 = vmatpush1.msra.mxu0 0.0
    %702 = vmatprep.subr.mxu0 0.0
    %703 = vmatpush1.msra.mxu0 0.0
    %704 = vmatprep.subr.mxu0 0.0
    %705 = vmatpush1.msra.mxu0 0.0
    %706 = vmatprep.subr.mxu0 0.0
    %707 = vmatpush1.msra.mxu0 0.0
    %708 = vmatprep.subr.mxu0 0.0
    %709 = vmatpush1.msra.mxu0 0.0
    %710 = vmatprep.subr.mxu0 0.0
    %711 = vmatpush1.msra.mxu0 0.0
    %712 = vmatprep.subr.mxu0 0.0
    %713 = vmatpush1.msra.mxu0 0.0
    %714 = vmatprep.subr.mxu0 0.0
    %715 = vmatpush1.msra.mxu0 0.0
    %716 = vmatprep.subr.mxu0 0.0
    %717 = vmatpush1.msra.mxu0 0.0
    %718 = vmatprep.subr.mxu0 0.0
    %719 = vmatpush1.msra.mxu0 0.0
    %720 = vmatprep.subr.mxu0 0.0
    %721 = vmatpush1.msra.mxu0 0.0
    %722 = vmatprep.subr.mxu0 0.0
    %723 = vmatpush1.msra.mxu0 0.0
    %724 = vmatprep.subr.mxu0 0.0
    %725 = vmatpush1.msra.mxu0 0.0
    %726 = vmatprep.subr.mxu0 0.0
    %727 = vmatpush1.msra.mxu0 0.0
    %728 = vmatprep.subr.mxu0 0.0
    %729 = vmatpush1.msra.mxu0 0.0
    %730 = vmatprep.subr.mxu0 0.0
    %731 = vmatpush1.msra.mxu0 0.0
    %732 = vmatprep.subr.mxu0 0.0
    %733 = vmatpush1.msra.mxu0 0.0
    %734 = vmatprep.subr.mxu0 0.0
    %735 = vmatpush1.msra.mxu0 0.0
    %736 = vmatprep.subr.mxu0 0.0
    %737 = vmatpush1.msra.mxu0 0.0
    %738 = vmatprep.subr.mxu0 0.0
    %739 = vmatpush1.msra.mxu0 0.0
    %740 = vmatprep.subr.mxu0 0.0
    %741 = vmatpush1.msra.mxu0 0.0
    %742 = vmatprep.subr.mxu0 0.0
    %743 = vmatpush1.msra.mxu0 0.0
    %744 = vmatprep.subr.mxu0 0.0
    %745 = vmatpush1.msra.mxu0 0.0
    %746 = vmatprep.subr.mxu0 0.0
    %747 = vmatpush1.msra.mxu0 0.0
    %748 = vmatprep.subr.mxu0 0.0
    %749 = vmatpush1.msra.mxu0 0.0
    %750 = vmatprep.mubr.f32.mxu0 0.0
    %v751 = vand.u32 %v585, 4294901760
    %752 = vmatmul.mubr.f32.gmra.mrb[0].mxu0 %v751
    %v753 = vpop.f32.mrb[0].mxu0
    %v754 = vadd.f32 %v663, %v753
    %v755 = vpop.f32.mrb[0].mxu0
    %756 = vdwg.mxu0
    %757 = vmatprep.subr.mxu0 0.0
    %v758 = vand.u32 %v579, 4294901760
    %v759 = vsub.f32 %v579, %v758
    %760 = vmatpush1.msra.mxu0 %v759
    %761 = vmatprep.subr.mxu0 0.0
    %v762 = vand.u32 %v580, 4294901760
    %v763 = vsub.f32 %v580, %v762
    %764 = vmatpush1.msra.mxu0 %v763
    %765 = vmatprep.subr.mxu0 0.0
    %v766 = vand.u32 %v581, 4294901760
    %v767 = vsub.f32 %v581, %v766
    %768 = vmatpush1.msra.mxu0 %v767
    %769 = vmatprep.subr.mxu0 0.0
    %v770 = vand.u32 %v582, 4294901760
    %v771 = vsub.f32 %v582, %v770
    %772 = vmatpush1.msra.mxu0 %v771
    %773 = vmatprep.subr.mxu0 0.0
    %774 = vmatpush1.msra.mxu0 0.0
    %775 = vmatprep.subr.mxu0 0.0
    %776 = vmatpush1.msra.mxu0 0.0
    %777 = vmatprep.subr.mxu0 0.0
    %778 = vmatpush1.msra.mxu0 0.0
    %779 = vmatprep.subr.mxu0 0.0
    %780 = vmatpush1.msra.mxu0 0.0
    %781 = vmatprep.subr.mxu0 0.0
    %782 = vmatpush1.msra.mxu0 0.0
    %783 = vmatprep.subr.mxu0 0.0
    %784 = vmatpush1.msra.mxu0 0.0
    %785 = vmatprep.subr.mxu0 0.0
    %786 = vmatpush1.msra.mxu0 0.0
    %787 = vmatprep.subr.mxu0 0.0
    %788 = vmatpush1.msra.mxu0 0.0
    %789 = vmatprep.subr.mxu0 0.0
    %790 = vmatpush1.msra.mxu0 0.0
    %791 = vmatprep.subr.mxu0 0.0
    %792 = vmatpush1.msra.mxu0 0.0
    %793 = vmatprep.subr.mxu0 0.0
    %794 = vmatpush1.msra.mxu0 0.0
    %795 = vmatprep.subr.mxu0 0.0
    %796 = vmatpush1.msra.mxu0 0.0
    %797 = vmatprep.subr.mxu0 0.0
    %798 = vmatpush1.msra.mxu0 0.0
    %799 = vmatprep.subr.mxu0 0.0
    %800 = vmatpush1.msra.mxu0 0.0
    %801 = vmatprep.subr.mxu0 0.0
    %802 = vmatpush1.msra.mxu0 0.0
    %803 = vmatprep.subr.mxu0 0.0
    %804 = vmatpush1.msra.mxu0 0.0
    %805 = vmatprep.subr.mxu0 0.0
    %806 = vmatpush1.msra.mxu0 0.0
    %807 = vmatprep.subr.mxu0 0.0
    %808 = vmatpush1.msra.mxu0 0.0
    %809 = vmatprep.subr.mxu0 0.0
    %810 = vmatpush1.msra.mxu0 0.0
    %811 = vmatprep.subr.mxu0 0.0
    %812 = vmatpush1.msra.mxu0 0.0
    %813 = vmatprep.subr.mxu0 0.0
    %814 = vmatpush1.msra.mxu0 0.0
    %815 = vmatprep.subr.mxu0 0.0
    %816 = vmatpush1.msra.mxu0 0.0
    %817 = vmatprep.subr.mxu0 0.0
    %818 = vmatpush1.msra.mxu0 0.0
    %819 = vmatprep.subr.mxu0 0.0
    %820 = vmatpush1.msra.mxu0 0.0
    %821 = vmatprep.subr.mxu0 0.0
    %822 = vmatpush1.msra.mxu0 0.0
    %823 = vmatprep.subr.mxu0 0.0
    %824 = vmatpush1.msra.mxu0 0.0
    %825 = vmatprep.subr.mxu0 0.0
    %826 = vmatpush1.msra.mxu0 0.0
    %827 = vmatprep.subr.mxu0 0.0
    %828 = vmatpush1.msra.mxu0 0.0
    %829 = vmatprep.mubr.f32.mxu0 0.0
    %v830 = vand.u32 %v585, 4294901760
    %v831 = vsub.f32 %v585, %v830
    %832 = vmatmul.mubr.f32.gmra.mrb[0].mxu0 %v831
    %v833 = vpop.f32.mrb[0].mxu0
    %v834 = vadd.f32 %v754, %v833
    %v835 = vpop.f32.mrb[0].mxu0
    %836 = vdwg.mxu0
    %837 = vmatprep.subr.mxu0 0.0
    %v838 = vand.u32 %v579, 4294901760
    %839 = vmatpush1.msra.mxu0 %v838
    %840 = vmatprep.subr.mxu0 0.0
    %v841 = vand.u32 %v580, 4294901760
    %842 = vmatpush1.msra.mxu0 %v841
    %843 = vmatprep.subr.mxu0 0.0
    %v844 = vand.u32 %v581, 4294901760
    %845 = vmatpush1.msra.mxu0 %v844
    %846 = vmatprep.subr.mxu0 0.0
    %v847 = vand.u32 %v582, 4294901760
    %848 = vmatpush1.msra.mxu0 %v847
    %849 = vmatprep.subr.mxu0 0.0
    %850 = vmatpush1.msra.mxu0 0.0
    %851 = vmatprep.subr.mxu0 0.0
    %852 = vmatpush1.msra.mxu0 0.0
    %853 = vmatprep.subr.mxu0 0.0
    %854 = vmatpush1.msra.mxu0 0.0
    %855 = vmatprep.subr.mxu0 0.0
    %856 = vmatpush1.msra.mxu0 0.0
    %857 = vmatprep.subr.mxu0 0.0
    %858 = vmatpush1.msra.mxu0 0.0
    %859 = vmatprep.subr.mxu0 0.0
    %860 = vmatpush1.msra.mxu0 0.0
    %861 = vmatprep.subr.mxu0 0.0
    %862 = vmatpush1.msra.mxu0 0.0
    %863 = vmatprep.subr.mxu0 0.0
    %864 = vmatpush1.msra.mxu0 0.0
    %865 = vmatprep.subr.mxu0 0.0
    %866 = vmatpush1.msra.mxu0 0.0
    %867 = vmatprep.subr.mxu0 0.0
    %868 = vmatpush1.msra.mxu0 0.0
    %869 = vmatprep.subr.mxu0 0.0
    %870 = vmatpush1.msra.mxu0 0.0
    %871 = vmatprep.subr.mxu0 0.0
    %872 = vmatpush1.msra.mxu0 0.0
    %873 = vmatprep.subr.mxu0 0.0
    %874 = vmatpush1.msra.mxu0 0.0
    %875 = vmatprep.subr.mxu0 0.0
    %876 = vmatpush1.msra.mxu0 0.0
    %877 = vmatprep.subr.mxu0 0.0
    %878 = vmatpush1.msra.mxu0 0.0
    %879 = vmatprep.subr.mxu0 0.0
    %880 = vmatpush1.msra.mxu0 0.0
    %881 = vmatprep.subr.mxu0 0.0
    %882 = vmatpush1.msra.mxu0 0.0
    %883 = vmatprep.subr.mxu0 0.0
    %884 = vmatpush1.msra.mxu0 0.0
    %885 = vmatprep.subr.mxu0 0.0
    %886 = vmatpush1.msra.mxu0 0.0
    %887 = vmatprep.subr.mxu0 0.0
    %888 = vmatpush1.msra.mxu0 0.0
    %889 = vmatprep.subr.mxu0 0.0
    %890 = vmatpush1.msra.mxu0 0.0
    %891 = vmatprep.subr.mxu0 0.0
    %892 = vmatpush1.msra.mxu0 0.0
    %893 = vmatprep.subr.mxu0 0.0
    %894 = vmatpush1.msra.mxu0 0.0
    %895 = vmatprep.subr.mxu0 0.0
    %896 = vmatpush1.msra.mxu0 0.0
    %897 = vmatprep.subr.mxu0 0.0
    %898 = vmatpush1.msra.mxu0 0.0
    %899 = vmatprep.subr.mxu0 0.0
    %900 = vmatpush1.msra.mxu0 0.0
    %901 = vmatprep.subr.mxu0 0.0
    %902 = vmatpush1.msra.mxu0 0.0
    %903 = vmatprep.subr.mxu0 0.0
    %904 = vmatpush1.msra.mxu0 0.0
    %905 = vmatprep.mubr.f32.mxu0 0.0
    %v906 = vand.u32 %v585, 4294901760
    %v907 = vsub.f32 %v585, %v906
    %v908 = vand.u32 %v907, 4294901760
    %909 = vmatmul.mubr.f32.gmra.mrb[0].mxu0 %v908
    %v910 = vpop.f32.mrb[0].mxu0
    %v911 = vadd.f32 %v834, %v910
    %v912 = vpop.f32.mrb[0].mxu0
    %913 = vdwg.mxu0
    %914 = vmatprep.subr.mxu0 0.0
    %v915 = vand.u32 %v579, 4294901760
    %v916 = vsub.f32 %v579, %v915
    %v917 = vand.u32 %v916, 4294901760
    %918 = vmatpush1.msra.mxu0 %v917
    %919 = vmatprep.subr.mxu0 0.0
    %v920 = vand.u32 %v580, 4294901760
    %v921 = vsub.f32 %v580, %v920
    %v922 = vand.u32 %v921, 4294901760
    %923 = vmatpush1.msra.mxu0 %v922
    %924 = vmatprep.subr.mxu0 0.0
    %v925 = vand.u32 %v581, 4294901760
    %v926 = vsub.f32 %v581, %v925
    %v927 = vand.u32 %v926, 4294901760
    %928 = vmatpush1.msra.mxu0 %v927
    %929 = vmatprep.subr.mxu0 0.0
    %v930 = vand.u32 %v582, 4294901760
    %v931 = vsub.f32 %v582, %v930
    %v932 = vand.u32 %v931, 4294901760
    %933 = vmatpush1.msra.mxu0 %v932
    %934 = vmatprep.subr.mxu0 0.0
    %935 = vmatpush1.msra.mxu0 0.0
    %936 = vmatprep.subr.mxu0 0.0
    %937 = vmatpush1.msra.mxu0 0.0
    %938 = vmatprep.subr.mxu0 0.0
    %939 = vmatpush1.msra.mxu0 0.0
    %940 = vmatprep.subr.mxu0 0.0
    %941 = vmatpush1.msra.mxu0 0.0
    %942 = vmatprep.subr.mxu0 0.0
    %943 = vmatpush1.msra.mxu0 0.0
    %944 = vmatprep.subr.mxu0 0.0
    %945 = vmatpush1.msra.mxu0 0.0
    %946 = vmatprep.subr.mxu0 0.0
    %947 = vmatpush1.msra.mxu0 0.0
    %948 = vmatprep.subr.mxu0 0.0
    %949 = vmatpush1.msra.mxu0 0.0
    %950 = vmatprep.subr.mxu0 0.0
    %951 = vmatpush1.msra.mxu0 0.0
    %952 = vmatprep.subr.mxu0 0.0
    %953 = vmatpush1.msra.mxu0 0.0
    %954 = vmatprep.subr.mxu0 0.0
    %955 = vmatpush1.msra.mxu0 0.0
    %956 = vmatprep.subr.mxu0 0.0
    %957 = vmatpush1.msra.mxu0 0.0
    %958 = vmatprep.subr.mxu0 0.0
    %959 = vmatpush1.msra.mxu0 0.0
    %960 = vmatprep.subr.mxu0 0.0
    %961 = vmatpush1.msra.mxu0 0.0
    %962 = vmatprep.subr.mxu0 0.0
    %963 = vmatpush1.msra.mxu0 0.0
    %964 = vmatprep.subr.mxu0 0.0
    %965 = vmatpush1.msra.mxu0 0.0
    %966 = vmatprep.subr.mxu0 0.0
    %967 = vmatpush1.msra.mxu0 0.0
    %968 = vmatprep.subr.mxu0 0.0
    %969 = vmatpush1.msra.mxu0 0.0
    %970 = vmatprep.subr.mxu0 0.0
    %971 = vmatpush1.msra.mxu0 0.0
    %972 = vmatprep.subr.mxu0 0.0
    %973 = vmatpush1.msra.mxu0 0.0
    %974 = vmatprep.subr.mxu0 0.0
    %975 = vmatpush1.msra.mxu0 0.0
    %976 = vmatprep.subr.mxu0 0.0
    %977 = vmatpush1.msra.mxu0 0.0
    %978 = vmatprep.subr.mxu0 0.0
    %979 = vmatpush1.msra.mxu0 0.0
    %980 = vmatprep.subr.mxu0 0.0
    %981 = vmatpush1.msra.mxu0 0.0
    %982 = vmatprep.subr.mxu0 0.0
    %983 = vmatpush1.msra.mxu0 0.0
    %984 = vmatprep.subr.mxu0 0.0
    %985 = vmatpush1.msra.mxu0 0.0
    %986 = vmatprep.subr.mxu0 0.0
    %987 = vmatpush1.msra.mxu0 0.0
    %988 = vmatprep.subr.mxu0 0.0
    %989 = vmatpush1.msra.mxu0 0.0
    %990 = vmatprep.mubr.f32.mxu0 0.0
    %v991 = vand.u32 %v585, 4294901760
    %992 = vmatmul.mubr.f32.gmra.mrb[0].mxu0 %v991
    %v993 = vpop.f32.mrb[0].mxu0
    %v994 = vadd.f32 %v911, %v993
    %v995 = vpop.f32.mrb[0].mxu0
    %996 = vdwg.mxu0
    %997 = vmatprep.subr.mxu0 0.0
    %v998 = vand.u32 %v579, 4294901760
    %999 = vmatpush1.msra.mxu0 %v998
    %1000 = vmatprep.subr.mxu0 0.0
    %v1001 = vand.u32 %v580, 4294901760
    %1002 = vmatpush1.msra.mxu0 %v1001
    %1003 = vmatprep.subr.mxu0 0.0
    %v1004 = vand.u32 %v581, 4294901760
    %1005 = vmatpush1.msra.mxu0 %v1004
    %1006 = vmatprep.subr.mxu0 0.0
    %v1007 = vand.u32 %v582, 4294901760
    %1008 = vmatpush1.msra.mxu0 %v1007
    %1009 = vmatprep.subr.mxu0 0.0
    %1010 = vmatpush1.msra.mxu0 0.0
    %1011 = vmatprep.subr.mxu0 0.0
    %1012 = vmatpush1.msra.mxu0 0.0
    %1013 = vmatprep.subr.mxu0 0.0
    %1014 = vmatpush1.msra.mxu0 0.0
    %1015 = vmatprep.subr.mxu0 0.0
    %1016 = vmatpush1.msra.mxu0 0.0
    %1017 = vmatprep.subr.mxu0 0.0
    %1018 = vmatpush1.msra.mxu0 0.0
    %1019 = vmatprep.subr.mxu0 0.0
    %1020 = vmatpush1.msra.mxu0 0.0
    %1021 = vmatprep.subr.mxu0 0.0
    %1022 = vmatpush1.msra.mxu0 0.0
    %1023 = vmatprep.subr.mxu0 0.0
    %1024 = vmatpush1.msra.mxu0 0.0
    %1025 = vmatprep.subr.mxu0 0.0
    %1026 = vmatpush1.msra.mxu0 0.0
    %1027 = vmatprep.subr.mxu0 0.0
    %1028 = vmatpush1.msra.mxu0 0.0
    %1029 = vmatprep.subr.mxu0 0.0
    %1030 = vmatpush1.msra.mxu0 0.0
    %1031 = vmatprep.subr.mxu0 0.0
    %1032 = vmatpush1.msra.mxu0 0.0
    %1033 = vmatprep.subr.mxu0 0.0
    %1034 = vmatpush1.msra.mxu0 0.0
    %1035 = vmatprep.subr.mxu0 0.0
    %1036 = vmatpush1.msra.mxu0 0.0
    %1037 = vmatprep.subr.mxu0 0.0
    %1038 = vmatpush1.msra.mxu0 0.0
    %1039 = vmatprep.subr.mxu0 0.0
    %1040 = vmatpush1.msra.mxu0 0.0
    %1041 = vmatprep.subr.mxu0 0.0
    %1042 = vmatpush1.msra.mxu0 0.0
    %1043 = vmatprep.subr.mxu0 0.0
    %1044 = vmatpush1.msra.mxu0 0.0
    %1045 = vmatprep.subr.mxu0 0.0
    %1046 = vmatpush1.msra.mxu0 0.0
    %1047 = vmatprep.subr.mxu0 0.0
    %1048 = vmatpush1.msra.mxu0 0.0
    %1049 = vmatprep.subr.mxu0 0.0
    %1050 = vmatpush1.msra.mxu0 0.0
    %1051 = vmatprep.subr.mxu0 0.0
    %1052 = vmatpush1.msra.mxu0 0.0
    %1053 = vmatprep.subr.mxu0 0.0
    %1054 = vmatpush1.msra.mxu0 0.0
    %1055 = vmatprep.subr.mxu0 0.0
    %1056 = vmatpush1.msra.mxu0 0.0
    %1057 = vmatprep.subr.mxu0 0.0
    %1058 = vmatpush1.msra.mxu0 0.0
    %1059 = vmatprep.subr.mxu0 0.0
    %1060 = vmatpush1.msra.mxu0 0.0
    %1061 = vmatprep.subr.mxu0 0.0
    %1062 = vmatpush1.msra.mxu0 0.0
    %1063 = vmatprep.subr.mxu0 0.0
    %1064 = vmatpush1.msra.mxu0 0.0
    %1065 = vmatprep.mubr.f32.mxu0 0.0
    %v1066 = vand.u32 %v585, 4294901760
    %1067 = vmatmul.mubr.f32.gmra.mrb[0].mxu0 %v1066
    %v1068 = vpop.f32.mrb[0].mxu0
    %v1069 = vadd.f32 %v994, %v1068
    %v1070 = vpop.f32.mrb[0].mxu0
    %1071 = vdwg.mxu0
    %v1072 = vadd.f32 %v576, %v1069
    %v1073 = vtanh.pop %v1072
    %v1075 = vsel %vm583, %v1073, 0
    %1077 = vmatprep.subr.mxu0 0.0
    %v1078 = vand.u32 %v579, 4294901760
    %1079 = vmatpush1.msra.mxu0 %v1078
    %1080 = vmatprep.subr.mxu0 0.0
    %v1081 = vand.u32 %v580, 4294901760
    %1082 = vmatpush1.msra.mxu0 %v1081
    %1083 = vmatprep.subr.mxu0 0.0
    %v1084 = vand.u32 %v581, 4294901760
    %1085 = vmatpush1.msra.mxu0 %v1084
    %1086 = vmatprep.subr.mxu0 0.0
    %v1087 = vand.u32 %v582, 4294901760
    %1088 = vmatpush1.msra.mxu0 %v1087
    %1089 = vmatprep.subr.mxu0 0.0
    %1090 = vmatpush1.msra.mxu0 0.0
    %1091 = vmatprep.subr.mxu0 0.0
    %1092 = vmatpush1.msra.mxu0 0.0
    %1093 = vmatprep.subr.mxu0 0.0
    %1094 = vmatpush1.msra.mxu0 0.0
    %1095 = vmatprep.subr.mxu0 0.0
    %1096 = vmatpush1.msra.mxu0 0.0
    %1097 = vmatprep.subr.mxu0 0.0
    %1098 = vmatpush1.msra.mxu0 0.0
    %1099 = vmatprep.subr.mxu0 0.0
    %1100 = vmatpush1.msra.mxu0 0.0
    %1101 = vmatprep.subr.mxu0 0.0
    %1102 = vmatpush1.msra.mxu0 0.0
    %1103 = vmatprep.subr.mxu0 0.0
    %1104 = vmatpush1.msra.mxu0 0.0
    %1105 = vmatprep.subr.mxu0 0.0
    %1106 = vmatpush1.msra.mxu0 0.0
    %1107 = vmatprep.subr.mxu0 0.0
    %1108 = vmatpush1.msra.mxu0 0.0
    %1109 = vmatprep.subr.mxu0 0.0
    %1110 = vmatpush1.msra.mxu0 0.0
    %1111 = vmatprep.subr.mxu0 0.0
    %1112 = vmatpush1.msra.mxu0 0.0
    %1113 = vmatprep.subr.mxu0 0.0
    %1114 = vmatpush1.msra.mxu0 0.0
    %1115 = vmatprep.subr.mxu0 0.0
    %1116 = vmatpush1.msra.mxu0 0.0
    %1117 = vmatprep.subr.mxu0 0.0
    %1118 = vmatpush1.msra.mxu0 0.0
    %1119 = vmatprep.subr.mxu0 0.0
    %1120 = vmatpush1.msra.mxu0 0.0
    %1121 = vmatprep.subr.mxu0 0.0
    %1122 = vmatpush1.msra.mxu0 0.0
    %1123 = vmatprep.subr.mxu0 0.0
    %1124 = vmatpush1.msra.mxu0 0.0
    %1125 = vmatprep.subr.mxu0 0.0
    %1126 = vmatpush1.msra.mxu0 0.0
    %1127 = vmatprep.subr.mxu0 0.0
    %1128 = vmatpush1.msra.mxu0 0.0
    %1129 = vmatprep.subr.mxu0 0.0
    %1130 = vmatpush1.msra.mxu0 0.0
    %1131 = vmatprep.subr.mxu0 0.0
    %1132 = vmatpush1.msra.mxu0 0.0
    %1133 = vmatprep.subr.mxu0 0.0
    %1134 = vmatpush1.msra.mxu0 0.0
    %1135 = vmatprep.subr.mxu0 0.0
    %1136 = vmatpush1.msra.mxu0 0.0
    %1137 = vmatprep.subr.mxu0 0.0
    %1138 = vmatpush1.msra.mxu0 0.0
    %1139 = vmatprep.subr.mxu0 0.0
    %1140 = vmatpush1.msra.mxu0 0.0
    %1141 = vmatprep.subr.mxu0 0.0
    %1142 = vmatpush1.msra.mxu0 0.0
    %1143 = vmatprep.subr.mxu0 0.0
    %1144 = vmatpush1.msra.mxu0 0.0
    %1145 = vmatprep.mubr.f32.mxu0 0.0
    %v1146 = vand.u32 %v1075, 4294901760
    %v1147 = vsub.f32 %v1075, %v1146
    %v1148 = vand.u32 %v1147, 4294901760
    %v1149 = vsub.f32 %v1147, %v1148
    %v1150 = vand.u32 %v1149, 4294901760
    %1151 = vmatmul.mubr.f32.gmra.mrb[0].mxu0 %v1150
    %v1152 = vpop.f32.mrb[0].mxu0
    %v1153 = vadd.f32 0.0, %v1152
    %v1154 = vpop.f32.mrb[0].mxu0
    %1155 = vdwg.mxu0
    %1156 = vmatprep.subr.mxu0 0.0
    %v1157 = vand.u32 %v579, 4294901760
    %v1158 = vsub.f32 %v579, %v1157
    %v1159 = vand.u32 %v1158, 4294901760
    %v1160 = vsub.f32 %v1158, %v1159
    %v1161 = vand.u32 %v1160, 4294901760
    %1162 = vmatpush1.msra.mxu0 %v1161
    %1163 = vmatprep.subr.mxu0 0.0
    %v1164 = vand.u32 %v580, 4294901760
    %v1165 = vsub.f32 %v580, %v1164
    %v1166 = vand.u32 %v1165, 4294901760
    %v1167 = vsub.f32 %v1165, %v1166
    %v1168 = vand.u32 %v1167, 4294901760
    %1169 = vmatpush1.msra.mxu0 %v1168
    %1170 = vmatprep.subr.mxu0 0.0
    %v1171 = vand.u32 %v581, 4294901760
    %v1172 = vsub.f32 %v581, %v1171
    %v1173 = vand.u32 %v1172, 4294901760
    %v1174 = vsub.f32 %v1172, %v1173
    %v1175 = vand.u32 %v1174, 4294901760
    %1176 = vmatpush1.msra.mxu0 %v1175
    %1177 = vmatprep.subr.mxu0 0.0
    %v1178 = vand.u32 %v582, 4294901760
    %v1179 = vsub.f32 %v582, %v1178
    %v1180 = vand.u32 %v1179, 4294901760
    %v1181 = vsub.f32 %v1179, %v1180
    %v1182 = vand.u32 %v1181, 4294901760
    %1183 = vmatpush1.msra.mxu0 %v1182
    %1184 = vmatprep.subr.mxu0 0.0
    %1185 = vmatpush1.msra.mxu0 0.0
    %1186 = vmatprep.subr.mxu0 0.0
    %1187 = vmatpush1.msra.mxu0 0.0
    %1188 = vmatprep.subr.mxu0 0.0
    %1189 = vmatpush1.msra.mxu0 0.0
    %1190 = vmatprep.subr.mxu0 0.0
    %1191 = vmatpush1.msra.mxu0 0.0
    %1192 = vmatprep.subr.mxu0 0.0
    %1193 = vmatpush1.msra.mxu0 0.0
    %1194 = vmatprep.subr.mxu0 0.0
    %1195 = vmatpush1.msra.mxu0 0.0
    %1196 = vmatprep.subr.mxu0 0.0
    %1197 = vmatpush1.msra.mxu0 0.0
    %1198 = vmatprep.subr.mxu0 0.0
    %1199 = vmatpush1.msra.mxu0 0.0
    %1200 = vmatprep.subr.mxu0 0.0
    %1201 = vmatpush1.msra.mxu0 0.0
    %1202 = vmatprep.subr.mxu0 0.0
    %1203 = vmatpush1.msra.mxu0 0.0
    %1204 = vmatprep.subr.mxu0 0.0
    %1205 = vmatpush1.msra.mxu0 0.0
    %1206 = vmatprep.subr.mxu0 0.0
    %1207 = vmatpush1.msra.mxu0 0.0
    %1208 = vmatprep.subr.mxu0 0.0
    %1209 = vmatpush1.msra.mxu0 0.0
    %1210 = vmatprep.subr.mxu0 0.0
    %1211 = vmatpush1.msra.mxu0 0.0
    %1212 = vmatprep.subr.mxu0 0.0
    %1213 = vmatpush1.msra.mxu0 0.0
    %1214 = vmatprep.subr.mxu0 0.0
    %1215 = vmatpush1.msra.mxu0 0.0
    %1216 = vmatprep.subr.mxu0 0.0
    %1217 = vmatpush1.msra.mxu0 0.0
    %1218 = vmatprep.subr.mxu0 0.0
    %1219 = vmatpush1.msra.mxu0 0.0
    %1220 = vmatprep.subr.mxu0 0.0
    %1221 = vmatpush1.msra.mxu0 0.0
    %1222 = vmatprep.subr.mxu0 0.0
    %1223 = vmatpush1.msra.mxu0 0.0
    %1224 = vmatprep.subr.mxu0 0.0
    %1225 = vmatpush1.msra.mxu0 0.0
    %1226 = vmatprep.subr.mxu0 0.0
    %1227 = vmatpush1.msra.mxu0 0.0
    %1228 = vmatprep.subr.mxu0 0.0
    %1229 = vmatpush1.msra.mxu0 0.0
    %1230 = vmatprep.subr.mxu0 0.0
    %1231 = vmatpush1.msra.mxu0 0.0
    %1232 = vmatprep.subr.mxu0 0.0
    %1233 = vmatpush1.msra.mxu0 0.0
    %1234 = vmatprep.subr.mxu0 0.0
    %1235 = vmatpush1.msra.mxu0 0.0
    %1236 = vmatprep.subr.mxu0 0.0
    %1237 = vmatpush1.msra.mxu0 0.0
    %1238 = vmatprep.subr.mxu0 0.0
    %1239 = vmatpush1.msra.mxu0 0.0
    %1240 = vmatprep.mubr.f32.mxu0 0.0
    %v1241 = vand.u32 %v1075, 4294901760
    %1242 = vmatmul.mubr.f32.gmra.mrb[0].mxu0 %v1241
    %v1243 = vpop.f32.mrb[0].mxu0
    %v1244 = vadd.f32 %v1153, %v1243
    %v1245 = vpop.f32.mrb[0].mxu0
    %1246 = vdwg.mxu0
    %1247 = vmatprep.subr.mxu0 0.0
    %v1248 = vand.u32 %v579, 4294901760
    %v1249 = vsub.f32 %v579, %v1248
    %1250 = vmatpush1.msra.mxu0 %v1249
    %1251 = vmatprep.subr.mxu0 0.0
    %v1252 = vand.u32 %v580, 4294901760
    %v1253 = vsub.f32 %v580, %v1252
    %1254 = vmatpush1.msra.mxu0 %v1253
    %1255 = vmatprep.subr.mxu0 0.0
    %v1256 = vand.u32 %v581, 4294901760
    %v1257 = vsub.f32 %v581, %v1256
    %1258 = vmatpush1.msra.mxu0 %v1257
    %1259 = vmatprep.subr.mxu0 0.0
    %v1260 = vand.u32 %v582, 4294901760
    %v1261 = vsub.f32 %v582, %v1260
    %1262 = vmatpush1.msra.mxu0 %v1261
    %1263 = vmatprep.subr.mxu0 0.0
    %1264 = vmatpush1.msra.mxu0 0.0
    %1265 = vmatprep.subr.mxu0 0.0
    %1266 = vmatpush1.msra.mxu0 0.0
    %1267 = vmatprep.subr.mxu0 0.0
    %1268 = vmatpush1.msra.mxu0 0.0
    %1269 = vmatprep.subr.mxu0 0.0
    %1270 = vmatpush1.msra.mxu0 0.0
    %1271 = vmatprep.subr.mxu0 0.0
    %1272 = vmatpush1.msra.mxu0 0.0
    %1273 = vmatprep.subr.mxu0 0.0
    %1274 = vmatpush1.msra.mxu0 0.0
    %1275 = vmatprep.subr.mxu0 0.0
    %1276 = vmatpush1.msra.mxu0 0.0
    %1277 = vmatprep.subr.mxu0 0.0
    %1278 = vmatpush1.msra.mxu0 0.0
    %1279 = vmatprep.subr.mxu0 0.0
    %1280 = vmatpush1.msra.mxu0 0.0
    %1281 = vmatprep.subr.mxu0 0.0
    %1282 = vmatpush1.msra.mxu0 0.0
    %1283 = vmatprep.subr.mxu0 0.0
    %1284 = vmatpush1.msra.mxu0 0.0
    %1285 = vmatprep.subr.mxu0 0.0
    %1286 = vmatpush1.msra.mxu0 0.0
    %1287 = vmatprep.subr.mxu0 0.0
    %1288 = vmatpush1.msra.mxu0 0.0
    %1289 = vmatprep.subr.mxu0 0.0
    %1290 = vmatpush1.msra.mxu0 0.0
    %1291 = vmatprep.subr.mxu0 0.0
    %1292 = vmatpush1.msra.mxu0 0.0
    %1293 = vmatprep.subr.mxu0 0.0
    %1294 = vmatpush1.msra.mxu0 0.0
    %1295 = vmatprep.subr.mxu0 0.0
    %1296 = vmatpush1.msra.mxu0 0.0
    %1297 = vmatprep.subr.mxu0 0.0
    %1298 = vmatpush1.msra.mxu0 0.0
    %1299 = vmatprep.subr.mxu0 0.0
    %1300 = vmatpush1.msra.mxu0 0.0
    %1301 = vmatprep.subr.mxu0 0.0
    %1302 = vmatpush1.msra.mxu0 0.0
    %1303 = vmatprep.subr.mxu0 0.0
    %1304 = vmatpush1.msra.mxu0 0.0
    %1305 = vmatprep.subr.mxu0 0.0
    %1306 = vmatpush1.msra.mxu0 0.0
    %1307 = vmatprep.subr.mxu0 0.0
    %1308 = vmatpush1.msra.mxu0 0.0
    %1309 = vmatprep.subr.mxu0 0.0
    %1310 = vmatpush1.msra.mxu0 0.0
    %1311 = vmatprep.subr.mxu0 0.0
    %1312 = vmatpush1.msra.mxu0 0.0
    %1313 = vmatprep.subr.mxu0 0.0
    %1314 = vmatpush1.msra.mxu0 0.0
    %1315 = vmatprep.subr.mxu0 0.0
    %1316 = vmatpush1.msra.mxu0 0.0
    %1317 = vmatprep.subr.mxu0 0.0
    %1318 = vmatpush1.msra.mxu0 0.0
    %1319 = vmatprep.mubr.f32.mxu0 0.0
    %v1320 = vand.u32 %v1075, 4294901760
    %v1321 = vsub.f32 %v1075, %v1320
    %1322 = vmatmul.mubr.f32.gmra.mrb[0].mxu0 %v1321
    %v1323 = vpop.f32.mrb[0].mxu0
    %v1324 = vadd.f32 %v1244, %v1323
    %v1325 = vpop.f32.mrb[0].mxu0
    %1326 = vdwg.mxu0
    %1327 = vmatprep.subr.mxu0 0.0
    %v1328 = vand.u32 %v579, 4294901760
    %1329 = vmatpush1.msra.mxu0 %v1328
    %1330 = vmatprep.subr.mxu0 0.0
    %v1331 = vand.u32 %v580, 4294901760
    %1332 = vmatpush1.msra.mxu0 %v1331
    %1333 = vmatprep.subr.mxu0 0.0
    %v1334 = vand.u32 %v581, 4294901760
    %1335 = vmatpush1.msra.mxu0 %v1334
    %1336 = vmatprep.subr.mxu0 0.0
    %v1337 = vand.u32 %v582, 4294901760
    %1338 = vmatpush1.msra.mxu0 %v1337
    %1339 = vmatprep.subr.mxu0 0.0
    %1340 = vmatpush1.msra.mxu0 0.0
    %1341 = vmatprep.subr.mxu0 0.0
    %1342 = vmatpush1.msra.mxu0 0.0
    %1343 = vmatprep.subr.mxu0 0.0
    %1344 = vmatpush1.msra.mxu0 0.0
    %1345 = vmatprep.subr.mxu0 0.0
    %1346 = vmatpush1.msra.mxu0 0.0
    %1347 = vmatprep.subr.mxu0 0.0
    %1348 = vmatpush1.msra.mxu0 0.0
    %1349 = vmatprep.subr.mxu0 0.0
    %1350 = vmatpush1.msra.mxu0 0.0
    %1351 = vmatprep.subr.mxu0 0.0
    %1352 = vmatpush1.msra.mxu0 0.0
    %1353 = vmatprep.subr.mxu0 0.0
    %1354 = vmatpush1.msra.mxu0 0.0
    %1355 = vmatprep.subr.mxu0 0.0
    %1356 = vmatpush1.msra.mxu0 0.0
    %1357 = vmatprep.subr.mxu0 0.0
    %1358 = vmatpush1.msra.mxu0 0.0
    %1359 = vmatprep.subr.mxu0 0.0
    %1360 = vmatpush1.msra.mxu0 0.0
    %1361 = vmatprep.subr.mxu0 0.0
    %1362 = vmatpush1.msra.mxu0 0.0
    %1363 = vmatprep.subr.mxu0 0.0
    %1364 = vmatpush1.msra.mxu0 0.0
    %1365 = vmatprep.subr.mxu0 0.0
    %1366 = vmatpush1.msra.mxu0 0.0
    %1367 = vmatprep.subr.mxu0 0.0
    %1368 = vmatpush1.msra.mxu0 0.0
    %1369 = vmatprep.subr.mxu0 0.0
    %1370 = vmatpush1.msra.mxu0 0.0
    %1371 = vmatprep.subr.mxu0 0.0
    %1372 = vmatpush1.msra.mxu0 0.0
    %1373 = vmatprep.subr.mxu0 0.0
    %1374 = vmatpush1.msra.mxu0 0.0
    %1375 = vmatprep.subr.mxu0 0.0
    %1376 = vmatpush1.msra.mxu0 0.0
    %1377 = vmatprep.subr.mxu0 0.0
    %1378 = vmatpush1.msra.mxu0 0.0
    %1379 = vmatprep.subr.mxu0 0.0
    %1380 = vmatpush1.msra.mxu0 0.0
    %1381 = vmatprep.subr.mxu0 0.0
    %1382 = vmatpush1.msra.mxu0 0.0
    %1383 = vmatprep.subr.mxu0 0.0
    %1384 = vmatpush1.msra.mxu0 0.0
    %1385 = vmatprep.subr.mxu0 0.0
    %1386 = vmatpush1.msra.mxu0 0.0
    %1387 = vmatprep.subr.mxu0 0.0
    %1388 = vmatpush1.msra.mxu0 0.0
    %1389 = vmatprep.subr.mxu0 0.0
    %1390 = vmatpush1.msra.mxu0 0.0
    %1391 = vmatprep.subr.mxu0 0.0
    %1392 = vmatpush1.msra.mxu0 0.0
    %1393 = vmatprep.subr.mxu0 0.0
    %1394 = vmatpush1.msra.mxu0 0.0
    %1395 = vmatprep.mubr.f32.mxu0 0.0
    %v1396 = vand.u32 %v1075, 4294901760
    %v1397 = vsub.f32 %v1075, %v1396
    %v1398 = vand.u32 %v1397, 4294901760
    %1399 = vmatmul.mubr.f32.gmra.mrb[0].mxu0 %v1398
    %v1400 = vpop.f32.mrb[0].mxu0
    %v1401 = vadd.f32 %v1324, %v1400
    %v1402 = vpop.f32.mrb[0].mxu0
    %1403 = vdwg.mxu0
    %1404 = vmatprep.subr.mxu0 0.0
    %v1405 = vand.u32 %v579, 4294901760
    %v1406 = vsub.f32 %v579, %v1405
    %v1407 = vand.u32 %v1406, 4294901760
    %1408 = vmatpush1.msra.mxu0 %v1407
    %1409 = vmatprep.subr.mxu0 0.0
    %v1410 = vand.u32 %v580, 4294901760
    %v1411 = vsub.f32 %v580, %v1410
    %v1412 = vand.u32 %v1411, 4294901760
    %1413 = vmatpush1.msra.mxu0 %v1412
    %1414 = vmatprep.subr.mxu0 0.0
    %v1415 = vand.u32 %v581, 4294901760
    %v1416 = vsub.f32 %v581, %v1415
    %v1417 = vand.u32 %v1416, 4294901760
    %1418 = vmatpush1.msra.mxu0 %v1417
    %1419 = vmatprep.subr.mxu0 0.0
    %v1420 = vand.u32 %v582, 4294901760
    %v1421 = vsub.f32 %v582, %v1420
    %v1422 = vand.u32 %v1421, 4294901760
    %1423 = vmatpush1.msra.mxu0 %v1422
    %1424 = vmatprep.subr.mxu0 0.0
    %1425 = vmatpush1.msra.mxu0 0.0
    %1426 = vmatprep.subr.mxu0 0.0
    %1427 = vmatpush1.msra.mxu0 0.0
    %1428 = vmatprep.subr.mxu0 0.0
    %1429 = vmatpush1.msra.mxu0 0.0
    %1430 = vmatprep.subr.mxu0 0.0
    %1431 = vmatpush1.msra.mxu0 0.0
    %1432 = vmatprep.subr.mxu0 0.0
    %1433 = vmatpush1.msra.mxu0 0.0
    %1434 = vmatprep.subr.mxu0 0.0
    %1435 = vmatpush1.msra.mxu0 0.0
    %1436 = vmatprep.subr.mxu0 0.0
    %1437 = vmatpush1.msra.mxu0 0.0
    %1438 = vmatprep.subr.mxu0 0.0
    %1439 = vmatpush1.msra.mxu0 0.0
    %1440 = vmatprep.subr.mxu0 0.0
    %1441 = vmatpush1.msra.mxu0 0.0
    %1442 = vmatprep.subr.mxu0 0.0
    %1443 = vmatpush1.msra.mxu0 0.0
    %1444 = vmatprep.subr.mxu0 0.0
    %1445 = vmatpush1.msra.mxu0 0.0
    %1446 = vmatprep.subr.mxu0 0.0
    %1447 = vmatpush1.msra.mxu0 0.0
    %1448 = vmatprep.subr.mxu0 0.0
    %1449 = vmatpush1.msra.mxu0 0.0
    %1450 = vmatprep.subr.mxu0 0.0
    %1451 = vmatpush1.msra.mxu0 0.0
    %1452 = vmatprep.subr.mxu0 0.0
    %1453 = vmatpush1.msra.mxu0 0.0
    %1454 = vmatprep.subr.mxu0 0.0
    %1455 = vmatpush1.msra.mxu0 0.0
    %1456 = vmatprep.subr.mxu0 0.0
    %1457 = vmatpush1.msra.mxu0 0.0
    %1458 = vmatprep.subr.mxu0 0.0
    %1459 = vmatpush1.msra.mxu0 0.0
    %1460 = vmatprep.subr.mxu0 0.0
    %1461 = vmatpush1.msra.mxu0 0.0
    %1462 = vmatprep.subr.mxu0 0.0
    %1463 = vmatpush1.msra.mxu0 0.0
    %1464 = vmatprep.subr.mxu0 0.0
    %1465 = vmatpush1.msra.mxu0 0.0
    %1466 = vmatprep.subr.mxu0 0.0
    %1467 = vmatpush1.msra.mxu0 0.0
    %1468 = vmatprep.subr.mxu0 0.0
    %1469 = vmatpush1.msra.mxu0 0.0
    %1470 = vmatprep.subr.mxu0 0.0
    %1471 = vmatpush1.msra.mxu0 0.0
    %1472 = vmatprep.subr.mxu0 0.0
    %1473 = vmatpush1.msra.mxu0 0.0
    %1474 = vmatprep.subr.mxu0 0.0
    %1475 = vmatpush1.msra.mxu0 0.0
    %1476 = vmatprep.subr.mxu0 0.0
    %1477 = vmatpush1.msra.mxu0 0.0
    %1478 = vmatprep.subr.mxu0 0.0
    %1479 = vmatpush1.msra.mxu0 0.0
    %1480 = vmatprep.mubr.f32.mxu0 0.0
    %v1481 = vand.u32 %v1075, 4294901760
    %1482 = vmatmul.mubr.f32.gmra.mrb[0].mxu0 %v1481
    %v1483 = vpop.f32.mrb[0].mxu0
    %v1484 = vadd.f32 %v1401, %v1483
    %v1485 = vpop.f32.mrb[0].mxu0
    %1486 = vdwg.mxu0
    %1487 = vmatprep.subr.mxu0 0.0
    %v1488 = vand.u32 %v579, 4294901760
    %1489 = vmatpush1.msra.mxu0 %v1488
    %1490 = vmatprep.subr.mxu0 0.0
    %v1491 = vand.u32 %v580, 4294901760
    %1492 = vmatpush1.msra.mxu0 %v1491
    %1493 = vmatprep.subr.mxu0 0.0
    %v1494 = vand.u32 %v581, 4294901760
    %1495 = vmatpush1.msra.mxu0 %v1494
    %1496 = vmatprep.subr.mxu0 0.0
    %v1497 = vand.u32 %v582, 4294901760
    %1498 = vmatpush1.msra.mxu0 %v1497
    %1499 = vmatprep.subr.mxu0 0.0
    %1500 = vmatpush1.msra.mxu0 0.0
    %1501 = vmatprep.subr.mxu0 0.0
    %1502 = vmatpush1.msra.mxu0 0.0
    %1503 = vmatprep.subr.mxu0 0.0
    %1504 = vmatpush1.msra.mxu0 0.0
    %1505 = vmatprep.subr.mxu0 0.0
    %1506 = vmatpush1.msra.mxu0 0.0
    %1507 = vmatprep.subr.mxu0 0.0
    %1508 = vmatpush1.msra.mxu0 0.0
    %1509 = vmatprep.subr.mxu0 0.0
    %1510 = vmatpush1.msra.mxu0 0.0
    %1511 = vmatprep.subr.mxu0 0.0
    %1512 = vmatpush1.msra.mxu0 0.0
    %1513 = vmatprep.subr.mxu0 0.0
    %1514 = vmatpush1.msra.mxu0 0.0
    %1515 = vmatprep.subr.mxu0 0.0
    %1516 = vmatpush1.msra.mxu0 0.0
    %1517 = vmatprep.subr.mxu0 0.0
    %1518 = vmatpush1.msra.mxu0 0.0
    %1519 = vmatprep.subr.mxu0 0.0
    %1520 = vmatpush1.msra.mxu0 0.0
    %1521 = vmatprep.subr.mxu0 0.0
    %1522 = vmatpush1.msra.mxu0 0.0
    %1523 = vmatprep.subr.mxu0 0.0
    %1524 = vmatpush1.msra.mxu0 0.0
    %1525 = vmatprep.subr.mxu0 0.0
    %1526 = vmatpush1.msra.mxu0 0.0
    %1527 = vmatprep.subr.mxu0 0.0
    %1528 = vmatpush1.msra.mxu0 0.0
    %1529 = vmatprep.subr.mxu0 0.0
    %1530 = vmatpush1.msra.mxu0 0.0
    %1531 = vmatprep.subr.mxu0 0.0
    %1532 = vmatpush1.msra.mxu0 0.0
    %1533 = vmatprep.subr.mxu0 0.0
    %1534 = vmatpush1.msra.mxu0 0.0
    %1535 = vmatprep.subr.mxu0 0.0
    %1536 = vmatpush1.msra.mxu0 0.0
    %1537 = vmatprep.subr.mxu0 0.0
    %1538 = vmatpush1.msra.mxu0 0.0
    %1539 = vmatprep.subr.mxu0 0.0
    %1540 = vmatpush1.msra.mxu0 0.0
    %1541 = vmatprep.subr.mxu0 0.0
    %1542 = vmatpush1.msra.mxu0 0.0
    %1543 = vmatprep.subr.mxu0 0.0
    %1544 = vmatpush1.msra.mxu0 0.0
    %1545 = vmatprep.subr.mxu0 0.0
    %1546 = vmatpush1.msra.mxu0 0.0
    %1547 = vmatprep.subr.mxu0 0.0
    %1548 = vmatpush1.msra.mxu0 0.0
    %1549 = vmatprep.subr.mxu0 0.0
    %1550 = vmatpush1.msra.mxu0 0.0
    %1551 = vmatprep.subr.mxu0 0.0
    %1552 = vmatpush1.msra.mxu0 0.0
    %1553 = vmatprep.subr.mxu0 0.0
    %1554 = vmatpush1.msra.mxu0 0.0
    %1555 = vmatprep.mubr.f32.mxu0 0.0
    %v1556 = vand.u32 %v1075, 4294901760
    %1557 = vmatmul.mubr.f32.gmra.mrb[0].mxu0 %v1556
    %v1558 = vpop.f32.mrb[0].mxu0
    %v1559 = vadd.f32 %v1484, %v1558
    %v1560 = vpop.f32.mrb[0].mxu0
    %1561 = vdwg.mxu0
    %v1563 = vrot.slane %v1559, 7
    %v1565 = vadd.f32 %v576, %v1563
    %v1566 = vtanh.pop %v1565
    %v1568 = vrot.slane %v1566, 1
    %v1569 = vsel %vm583, %v1568, 0
    %1571 = vmatprep.subr.mxu0 0.0
    %v1572 = vand.u32 %v579, 4294901760
    %1573 = vmatpush1.msra.mxu0 %v1572
    %1574 = vmatprep.subr.mxu0 0.0
    %v1575 = vand.u32 %v580, 4294901760
    %1576 = vmatpush1.msra.mxu0 %v1575
    %1577 = vmatprep.subr.mxu0 0.0
    %v1578 = vand.u32 %v581, 4294901760
    %1579 = vmatpush1.msra.mxu0 %v1578
    %1580 = vmatprep.subr.mxu0 0.0
    %v1581 = vand.u32 %v582, 4294901760
    %1582 = vmatpush1.msra.mxu0 %v1581
    %1583 = vmatprep.subr.mxu0 0.0
    %1584 = vmatpush1.msra.mxu0 0.0
    %1585 = vmatprep.subr.mxu0 0.0
    %1586 = vmatpush1.msra.mxu0 0.0
    %1587 = vmatprep.subr.mxu0 0.0
    %1588 = vmatpush1.msra.mxu0 0.0
    %1589 = vmatprep.subr.mxu0 0.0
    %1590 = vmatpush1.msra.mxu0 0.0
    %1591 = vmatprep.subr.mxu0 0.0
    %1592 = vmatpush1.msra.mxu0 0.0
    %1593 = vmatprep.subr.mxu0 0.0
    %1594 = vmatpush1.msra.mxu0 0.0
    %1595 = vmatprep.subr.mxu0 0.0
    %1596 = vmatpush1.msra.mxu0 0.0
    %1597 = vmatprep.subr.mxu0 0.0
    %1598 = vmatpush1.msra.mxu0 0.0
    %1599 = vmatprep.subr.mxu0 0.0
    %1600 = vmatpush1.msra.mxu0 0.0
    %1601 = vmatprep.subr.mxu0 0.0
    %1602 = vmatpush1.msra.mxu0 0.0
    %1603 = vmatprep.subr.mxu0 0.0
    %1604 = vmatpush1.msra.mxu0 0.0
    %1605 = vmatprep.subr.mxu0 0.0
    %1606 = vmatpush1.msra.mxu0 0.0
    %1607 = vmatprep.subr.mxu0 0.0
    %1608 = vmatpush1.msra.mxu0 0.0
    %1609 = vmatprep.subr.mxu0 0.0
    %1610 = vmatpush1.msra.mxu0 0.0
    %1611 = vmatprep.subr.mxu0 0.0
    %1612 = vmatpush1.msra.mxu0 0.0
    %1613 = vmatprep.subr.mxu0 0.0
    %1614 = vmatpush1.msra.mxu0 0.0
    %1615 = vmatprep.subr.mxu0 0.0
    %1616 = vmatpush1.msra.mxu0 0.0
    %1617 = vmatprep.subr.mxu0 0.0
    %1618 = vmatpush1.msra.mxu0 0.0
    %1619 = vmatprep.subr.mxu0 0.0
    %1620 = vmatpush1.msra.mxu0 0.0
    %1621 = vmatprep.subr.mxu0 0.0
    %1622 = vmatpush1.msra.mxu0 0.0
    %1623 = vmatprep.subr.mxu0 0.0
    %1624 = vmatpush1.msra.mxu0 0.0
    %1625 = vmatprep.subr.mxu0 0.0
    %1626 = vmatpush1.msra.mxu0 0.0
    %1627 = vmatprep.subr.mxu0 0.0
    %1628 = vmatpush1.msra.mxu0 0.0
    %1629 = vmatprep.subr.mxu0 0.0
    %1630 = vmatpush1.msra.mxu0 0.0
    %1631 = vmatprep.subr.mxu0 0.0
    %1632 = vmatpush1.msra.mxu0 0.0
    %1633 = vmatprep.subr.mxu0 0.0
    %1634 = vmatpush1.msra.mxu0 0.0
    %1635 = vmatprep.subr.mxu0 0.0
    %1636 = vmatpush1.msra.mxu0 0.0
    %1637 = vmatprep.subr.mxu0 0.0
    %1638 = vmatpush1.msra.mxu0 0.0
    %1639 = vmatprep.mubr.f32.mxu0 0.0
    %v1640 = vand.u32 %v1569, 4294901760
    %v1641 = vsub.f32 %v1569, %v1640
    %v1642 = vand.u32 %v1641, 4294901760
    %v1643 = vsub.f32 %v1641, %v1642
    %v1644 = vand.u32 %v1643, 4294901760
    %1645 = vmatmul.mubr.f32.gmra.mrb[0].mxu0 %v1644
    %v1646 = vpop.f32.mrb[0].mxu0
    %v1647 = vadd.f32 0.0, %v1646
    %v1648 = vpop.f32.mrb[0].mxu0
    %1649 = vdwg.mxu0
    %1650 = vmatprep.subr.mxu0 0.0
    %v1651 = vand.u32 %v579, 4294901760
    %v1652 = vsub.f32 %v579, %v1651
    %v1653 = vand.u32 %v1652, 4294901760
    %v1654 = vsub.f32 %v1652, %v1653
    %v1655 = vand.u32 %v1654, 4294901760
    %1656 = vmatpush1.msra.mxu0 %v1655
    %1657 = vmatprep.subr.mxu0 0.0
    %v1658 = vand.u32 %v580, 4294901760
    %v1659 = vsub.f32 %v580, %v1658
    %v1660 = vand.u32 %v1659, 4294901760
    %v1661 = vsub.f32 %v1659, %v1660
    %v1662 = vand.u32 %v1661, 4294901760
    %1663 = vmatpush1.msra.mxu0 %v1662
    %1664 = vmatprep.subr.mxu0 0.0
    %v1665 = vand.u32 %v581, 4294901760
    %v1666 = vsub.f32 %v581, %v1665
    %v1667 = vand.u32 %v1666, 4294901760
    %v1668 = vsub.f32 %v1666, %v1667
    %v1669 = vand.u32 %v1668, 4294901760
    %1670 = vmatpush1.msra.mxu0 %v1669
    %1671 = vmatprep.subr.mxu0 0.0
    %v1672 = vand.u32 %v582, 4294901760
    %v1673 = vsub.f32 %v582, %v1672
    %v1674 = vand.u32 %v1673, 4294901760
    %v1675 = vsub.f32 %v1673, %v1674
    %v1676 = vand.u32 %v1675, 4294901760
    %1677 = vmatpush1.msra.mxu0 %v1676
    %1678 = vmatprep.subr.mxu0 0.0
    %1679 = vmatpush1.msra.mxu0 0.0
    %1680 = vmatprep.subr.mxu0 0.0
    %1681 = vmatpush1.msra.mxu0 0.0
    %1682 = vmatprep.subr.mxu0 0.0
    %1683 = vmatpush1.msra.mxu0 0.0
    %1684 = vmatprep.subr.mxu0 0.0
    %1685 = vmatpush1.msra.mxu0 0.0
    %1686 = vmatprep.subr.mxu0 0.0
    %1687 = vmatpush1.msra.mxu0 0.0
    %1688 = vmatprep.subr.mxu0 0.0
    %1689 = vmatpush1.msra.mxu0 0.0
    %1690 = vmatprep.subr.mxu0 0.0
    %1691 = vmatpush1.msra.mxu0 0.0
    %1692 = vmatprep.subr.mxu0 0.0
    %1693 = vmatpush1.msra.mxu0 0.0
    %1694 = vmatprep.subr.mxu0 0.0
    %1695 = vmatpush1.msra.mxu0 0.0
    %1696 = vmatprep.subr.mxu0 0.0
    %1697 = vmatpush1.msra.mxu0 0.0
    %1698 = vmatprep.subr.mxu0 0.0
    %1699 = vmatpush1.msra.mxu0 0.0
    %1700 = vmatprep.subr.mxu0 0.0
    %1701 = vmatpush1.msra.mxu0 0.0
    %1702 = vmatprep.subr.mxu0 0.0
    %1703 = vmatpush1.msra.mxu0 0.0
    %1704 = vmatprep.subr.mxu0 0.0
    %1705 = vmatpush1.msra.mxu0 0.0
    %1706 = vmatprep.subr.mxu0 0.0
    %1707 = vmatpush1.msra.mxu0 0.0
    %1708 = vmatprep.subr.mxu0 0.0
    %1709 = vmatpush1.msra.mxu0 0.0
    %1710 = vmatprep.subr.mxu0 0.0
    %1711 = vmatpush1.msra.mxu0 0.0
    %1712 = vmatprep.subr.mxu0 0.0
    %1713 = vmatpush1.msra.mxu0 0.0
    %1714 = vmatprep.subr.mxu0 0.0
    %1715 = vmatpush1.msra.mxu0 0.0
    %1716 = vmatprep.subr.mxu0 0.0
    %1717 = vmatpush1.msra.mxu0 0.0
    %1718 = vmatprep.subr.mxu0 0.0
    %1719 = vmatpush1.msra.mxu0 0.0
    %1720 = vmatprep.subr.mxu0 0.0
    %1721 = vmatpush1.msra.mxu0 0.0
    %1722 = vmatprep.subr.mxu0 0.0
    %1723 = vmatpush1.msra.mxu0 0.0
    %1724 = vmatprep.subr.mxu0 0.0
    %1725 = vmatpush1.msra.mxu0 0.0
    %1726 = vmatprep.subr.mxu0 0.0
    %1727 = vmatpush1.msra.mxu0 0.0
    %1728 = vmatprep.subr.mxu0 0.0
    %1729 = vmatpush1.msra.mxu0 0.0
    %1730 = vmatprep.subr.mxu0 0.0
    %1731 = vmatpush1.msra.mxu0 0.0
    %1732 = vmatprep.subr.mxu0 0.0
    %1733 = vmatpush1.msra.mxu0 0.0
    %1734 = vmatprep.mubr.f32.mxu0 0.0
    %v1735 = vand.u32 %v1569, 4294901760
    %1736 = vmatmul.mubr.f32.gmra.mrb[0].mxu0 %v1735
    %v1737 = vpop.f32.mrb[0].mxu0
    %v1738 = vadd.f32 %v1647, %v1737
    %v1739 = vpop.f32.mrb[0].mxu0
    %1740 = vdwg.mxu0
    %1741 = vmatprep.subr.mxu0 0.0
    %v1742 = vand.u32 %v579, 4294901760
    %v1743 = vsub.f32 %v579, %v1742
    %1744 = vmatpush1.msra.mxu0 %v1743
    %1745 = vmatprep.subr.mxu0 0.0
    %v1746 = vand.u32 %v580, 4294901760
    %v1747 = vsub.f32 %v580, %v1746
    %1748 = vmatpush1.msra.mxu0 %v1747
    %1749 = vmatprep.subr.mxu0 0.0
    %v1750 = vand.u32 %v581, 4294901760
    %v1751 = vsub.f32 %v581, %v1750
    %1752 = vmatpush1.msra.mxu0 %v1751
    %1753 = vmatprep.subr.mxu0 0.0
    %v1754 = vand.u32 %v582, 4294901760
    %v1755 = vsub.f32 %v582, %v1754
    %1756 = vmatpush1.msra.mxu0 %v1755
    %1757 = vmatprep.subr.mxu0 0.0
    %1758 = vmatpush1.msra.mxu0 0.0
    %1759 = vmatprep.subr.mxu0 0.0
    %1760 = vmatpush1.msra.mxu0 0.0
    %1761 = vmatprep.subr.mxu0 0.0
    %1762 = vmatpush1.msra.mxu0 0.0
    %1763 = vmatprep.subr.mxu0 0.0
    %1764 = vmatpush1.msra.mxu0 0.0
    %1765 = vmatprep.subr.mxu0 0.0
    %1766 = vmatpush1.msra.mxu0 0.0
    %1767 = vmatprep.subr.mxu0 0.0
    %1768 = vmatpush1.msra.mxu0 0.0
    %1769 = vmatprep.subr.mxu0 0.0
    %1770 = vmatpush1.msra.mxu0 0.0
    %1771 = vmatprep.subr.mxu0 0.0
    %1772 = vmatpush1.msra.mxu0 0.0
    %1773 = vmatprep.subr.mxu0 0.0
    %1774 = vmatpush1.msra.mxu0 0.0
    %1775 = vmatprep.subr.mxu0 0.0
    %1776 = vmatpush1.msra.mxu0 0.0
    %1777 = vmatprep.subr.mxu0 0.0
    %1778 = vmatpush1.msra.mxu0 0.0
    %1779 = vmatprep.subr.mxu0 0.0
    %1780 = vmatpush1.msra.mxu0 0.0
    %1781 = vmatprep.subr.mxu0 0.0
    %1782 = vmatpush1.msra.mxu0 0.0
    %1783 = vmatprep.subr.mxu0 0.0
    %1784 = vmatpush1.msra.mxu0 0.0
    %1785 = vmatprep.subr.mxu0 0.0
    %1786 = vmatpush1.msra.mxu0 0.0
    %1787 = vmatprep.subr.mxu0 0.0
    %1788 = vmatpush1.msra.mxu0 0.0
    %1789 = vmatprep.subr.mxu0 0.0
    %1790 = vmatpush1.msra.mxu0 0.0
    %1791 = vmatprep.subr.mxu0 0.0
    %1792 = vmatpush1.msra.mxu0 0.0
    %1793 = vmatprep.subr.mxu0 0.0
    %1794 = vmatpush1.msra.mxu0 0.0
    %1795 = vmatprep.subr.mxu0 0.0
    %1796 = vmatpush1.msra.mxu0 0.0
    %1797 = vmatprep.subr.mxu0 0.0
    %1798 = vmatpush1.msra.mxu0 0.0
    %1799 = vmatprep.subr.mxu0 0.0
    %1800 = vmatpush1.msra.mxu0 0.0
    %1801 = vmatprep.subr.mxu0 0.0
    %1802 = vmatpush1.msra.mxu0 0.0
    %1803 = vmatprep.subr.mxu0 0.0
    %1804 = vmatpush1.msra.mxu0 0.0
    %1805 = vmatprep.subr.mxu0 0.0
    %1806 = vmatpush1.msra.mxu0 0.0
    %1807 = vmatprep.subr.mxu0 0.0
    %1808 = vmatpush1.msra.mxu0 0.0
    %1809 = vmatprep.subr.mxu0 0.0
    %1810 = vmatpush1.msra.mxu0 0.0
    %1811 = vmatprep.subr.mxu0 0.0
    %1812 = vmatpush1.msra.mxu0 0.0
    %1813 = vmatprep.mubr.f32.mxu0 0.0
    %v1814 = vand.u32 %v1569, 4294901760
    %v1815 = vsub.f32 %v1569, %v1814
    %1816 = vmatmul.mubr.f32.gmra.mrb[0].mxu0 %v1815
    %v1817 = vpop.f32.mrb[0].mxu0
    %v1818 = vadd.f32 %v1738, %v1817
    %v1819 = vpop.f32.mrb[0].mxu0
    %1820 = vdwg.mxu0
    %1821 = vmatprep.subr.mxu0 0.0
    %v1822 = vand.u32 %v579, 4294901760
    %1823 = vmatpush1.msra.mxu0 %v1822
    %1824 = vmatprep.subr.mxu0 0.0
    %v1825 = vand.u32 %v580, 4294901760
    %1826 = vmatpush1.msra.mxu0 %v1825
    %1827 = vmatprep.subr.mxu0 0.0
    %v1828 = vand.u32 %v581, 4294901760
    %1829 = vmatpush1.msra.mxu0 %v1828
    %1830 = vmatprep.subr.mxu0 0.0
    %v1831 = vand.u32 %v582, 4294901760
    %1832 = vmatpush1.msra.mxu0 %v1831
    %1833 = vmatprep.subr.mxu0 0.0
    %1834 = vmatpush1.msra.mxu0 0.0
    %1835 = vmatprep.subr.mxu0 0.0
    %1836 = vmatpush1.msra.mxu0 0.0
    %1837 = vmatprep.subr.mxu0 0.0
    %1838 = vmatpush1.msra.mxu0 0.0
    %1839 = vmatprep.subr.mxu0 0.0
    %1840 = vmatpush1.msra.mxu0 0.0
    %1841 = vmatprep.subr.mxu0 0.0
    %1842 = vmatpush1.msra.mxu0 0.0
    %1843 = vmatprep.subr.mxu0 0.0
    %1844 = vmatpush1.msra.mxu0 0.0
    %1845 = vmatprep.subr.mxu0 0.0
    %1846 = vmatpush1.msra.mxu0 0.0
    %1847 = vmatprep.subr.mxu0 0.0
    %1848 = vmatpush1.msra.mxu0 0.0
    %1849 = vmatprep.subr.mxu0 0.0
    %1850 = vmatpush1.msra.mxu0 0.0
    %1851 = vmatprep.subr.mxu0 0.0
    %1852 = vmatpush1.msra.mxu0 0.0
    %1853 = vmatprep.subr.mxu0 0.0
    %1854 = vmatpush1.msra.mxu0 0.0
    %1855 = vmatprep.subr.mxu0 0.0
    %1856 = vmatpush1.msra.mxu0 0.0
    %1857 = vmatprep.subr.mxu0 0.0
    %1858 = vmatpush1.msra.mxu0 0.0
    %1859 = vmatprep.subr.mxu0 0.0
    %1860 = vmatpush1.msra.mxu0 0.0
    %1861 = vmatprep.subr.mxu0 0.0
    %1862 = vmatpush1.msra.mxu0 0.0
    %1863 = vmatprep.subr.mxu0 0.0
    %1864 = vmatpush1.msra.mxu0 0.0
    %1865 = vmatprep.subr.mxu0 0.0
    %1866 = vmatpush1.msra.mxu0 0.0
    %1867 = vmatprep.subr.mxu0 0.0
    %1868 = vmatpush1.msra.mxu0 0.0
    %1869 = vmatprep.subr.mxu0 0.0
    %1870 = vmatpush1.msra.mxu0 0.0
    %1871 = vmatprep.subr.mxu0 0.0
    %1872 = vmatpush1.msra.mxu0 0.0
    %1873 = vmatprep.subr.mxu0 0.0
    %1874 = vmatpush1.msra.mxu0 0.0
    %1875 = vmatprep.subr.mxu0 0.0
    %1876 = vmatpush1.msra.mxu0 0.0
    %1877 = vmatprep.subr.mxu0 0.0
    %1878 = vmatpush1.msra.mxu0 0.0
    %1879 = vmatprep.subr.mxu0 0.0
    %1880 = vmatpush1.msra.mxu0 0.0
    %1881 = vmatprep.subr.mxu0 0.0
    %1882 = vmatpush1.msra.mxu0 0.0
    %1883 = vmatprep.subr.mxu0 0.0
    %1884 = vmatpush1.msra.mxu0 0.0
    %1885 = vmatprep.subr.mxu0 0.0
    %1886 = vmatpush1.msra.mxu0 0.0
    %1887 = vmatprep.subr.mxu0 0.0
    %1888 = vmatpush1.msra.mxu0 0.0
    %1889 = vmatprep.mubr.f32.mxu0 0.0
    %v1890 = vand.u32 %v1569, 4294901760
    %v1891 = vsub.f32 %v1569, %v1890
    %v1892 = vand.u32 %v1891, 4294901760
    %1893 = vmatmul.mubr.f32.gmra.mrb[0].mxu0 %v1892
    %v1894 = vpop.f32.mrb[0].mxu0
    %v1895 = vadd.f32 %v1818, %v1894
    %v1896 = vpop.f32.mrb[0].mxu0
    %1897 = vdwg.mxu0
    %1898 = vmatprep.subr.mxu0 0.0
    %v1899 = vand.u32 %v579, 4294901760
    %v1900 = vsub.f32 %v579, %v1899
    %v1901 = vand.u32 %v1900, 4294901760
    %1902 = vmatpush1.msra.mxu0 %v1901
    %1903 = vmatprep.subr.mxu0 0.0
    %v1904 = vand.u32 %v580, 4294901760
    %v1905 = vsub.f32 %v580, %v1904
    %v1906 = vand.u32 %v1905, 4294901760
    %1907 = vmatpush1.msra.mxu0 %v1906
    %1908 = vmatprep.subr.mxu0 0.0
    %v1909 = vand.u32 %v581, 4294901760
    %v1910 = vsub.f32 %v581, %v1909
    %v1911 = vand.u32 %v1910, 4294901760
    %1912 = vmatpush1.msra.mxu0 %v1911
    %1913 = vmatprep.subr.mxu0 0.0
    %v1914 = vand.u32 %v582, 4294901760
    %v1915 = vsub.f32 %v582, %v1914
    %v1916 = vand.u32 %v1915, 4294901760
    %1917 = vmatpush1.msra.mxu0 %v1916
    %1918 = vmatprep.subr.mxu0 0.0
    %1919 = vmatpush1.msra.mxu0 0.0
    %1920 = vmatprep.subr.mxu0 0.0
    %1921 = vmatpush1.msra.mxu0 0.0
    %1922 = vmatprep.subr.mxu0 0.0
    %1923 = vmatpush1.msra.mxu0 0.0
    %1924 = vmatprep.subr.mxu0 0.0
    %1925 = vmatpush1.msra.mxu0 0.0
    %1926 = vmatprep.subr.mxu0 0.0
    %1927 = vmatpush1.msra.mxu0 0.0
    %1928 = vmatprep.subr.mxu0 0.0
    %1929 = vmatpush1.msra.mxu0 0.0
    %1930 = vmatprep.subr.mxu0 0.0
    %1931 = vmatpush1.msra.mxu0 0.0
    %1932 = vmatprep.subr.mxu0 0.0
    %1933 = vmatpush1.msra.mxu0 0.0
    %1934 = vmatprep.subr.mxu0 0.0
    %1935 = vmatpush1.msra.mxu0 0.0
    %1936 = vmatprep.subr.mxu0 0.0
    %1937 = vmatpush1.msra.mxu0 0.0
    %1938 = vmatprep.subr.mxu0 0.0
    %1939 = vmatpush1.msra.mxu0 0.0
    %1940 = vmatprep.subr.mxu0 0.0
    %1941 = vmatpush1.msra.mxu0 0.0
    %1942 = vmatprep.subr.mxu0 0.0
    %1943 = vmatpush1.msra.mxu0 0.0
    %1944 = vmatprep.subr.mxu0 0.0
    %1945 = vmatpush1.msra.mxu0 0.0
    %1946 = vmatprep.subr.mxu0 0.0
    %1947 = vmatpush1.msra.mxu0 0.0
    %1948 = vmatprep.subr.mxu0 0.0
    %1949 = vmatpush1.msra.mxu0 0.0
    %1950 = vmatprep.subr.mxu0 0.0
    %1951 = vmatpush1.msra.mxu0 0.0
    %1952 = vmatprep.subr.mxu0 0.0
    %1953 = vmatpush1.msra.mxu0 0.0
    %1954 = vmatprep.subr.mxu0 0.0
    %1955 = vmatpush1.msra.mxu0 0.0
    %1956 = vmatprep.subr.mxu0 0.0
    %1957 = vmatpush1.msra.mxu0 0.0
    %1958 = vmatprep.subr.mxu0 0.0
    %1959 = vmatpush1.msra.mxu0 0.0
    %1960 = vmatprep.subr.mxu0 0.0
    %1961 = vmatpush1.msra.mxu0 0.0
    %1962 = vmatprep.subr.mxu0 0.0
    %1963 = vmatpush1.msra.mxu0 0.0
    %1964 = vmatprep.subr.mxu0 0.0
    %1965 = vmatpush1.msra.mxu0 0.0
    %1966 = vmatprep.subr.mxu0 0.0
    %1967 = vmatpush1.msra.mxu0 0.0
    %1968 = vmatprep.subr.mxu0 0.0
    %1969 = vmatpush1.msra.mxu0 0.0
    %1970 = vmatprep.subr.mxu0 0.0
    %1971 = vmatpush1.msra.mxu0 0.0
    %1972 = vmatprep.subr.mxu0 0.0
    %1973 = vmatpush1.msra.mxu0 0.0
    %1974 = vmatprep.mubr.f32.mxu0 0.0
    %v1975 = vand.u32 %v1569, 4294901760
    %1976 = vmatmul.mubr.f32.gmra.mrb[0].mxu0 %v1975
    %v1977 = vpop.f32.mrb[0].mxu0
    %v1978 = vadd.f32 %v1895, %v1977
    %v1979 = vpop.f32.mrb[0].mxu0
    %1980 = vdwg.mxu0
    %1981 = vmatprep.subr.mxu0 0.0
    %v1982 = vand.u32 %v579, 4294901760
    %1983 = vmatpush1.msra.mxu0 %v1982
    %1984 = vmatprep.subr.mxu0 0.0
    %v1985 = vand.u32 %v580, 4294901760
    %1986 = vmatpush1.msra.mxu0 %v1985
    %1987 = vmatprep.subr.mxu0 0.0
    %v1988 = vand.u32 %v581, 4294901760
    %1989 = vmatpush1.msra.mxu0 %v1988
    %1990 = vmatprep.subr.mxu0 0.0
    %v1991 = vand.u32 %v582, 4294901760
    %1992 = vmatpush1.msra.mxu0 %v1991
    %1993 = vmatprep.subr.mxu0 0.0
    %1994 = vmatpush1.msra.mxu0 0.0
    %1995 = vmatprep.subr.mxu0 0.0
    %1996 = vmatpush1.msra.mxu0 0.0
    %1997 = vmatprep.subr.mxu0 0.0
    %1998 = vmatpush1.msra.mxu0 0.0
    %1999 = vmatprep.subr.mxu0 0.0
    %2000 = vmatpush1.msra.mxu0 0.0
    %2001 = vmatprep.subr.mxu0 0.0
    %2002 = vmatpush1.msra.mxu0 0.0
    %2003 = vmatprep.subr.mxu0 0.0
    %2004 = vmatpush1.msra.mxu0 0.0
    %2005 = vmatprep.subr.mxu0 0.0
    %2006 = vmatpush1.msra.mxu0 0.0
    %2007 = vmatprep.subr.mxu0 0.0
    %2008 = vmatpush1.msra.mxu0 0.0
    %2009 = vmatprep.subr.mxu0 0.0
    %2010 = vmatpush1.msra.mxu0 0.0
    %2011 = vmatprep.subr.mxu0 0.0
    %2012 = vmatpush1.msra.mxu0 0.0
    %2013 = vmatprep.subr.mxu0 0.0
    %2014 = vmatpush1.msra.mxu0 0.0
    %2015 = vmatprep.subr.mxu0 0.0
    %2016 = vmatpush1.msra.mxu0 0.0
    %2017 = vmatprep.subr.mxu0 0.0
    %2018 = vmatpush1.msra.mxu0 0.0
    %2019 = vmatprep.subr.mxu0 0.0
    %2020 = vmatpush1.msra.mxu0 0.0
    %2021 = vmatprep.subr.mxu0 0.0
    %2022 = vmatpush1.msra.mxu0 0.0
    %2023 = vmatprep.subr.mxu0 0.0
    %2024 = vmatpush1.msra.mxu0 0.0
    %2025 = vmatprep.subr.mxu0 0.0
    %2026 = vmatpush1.msra.mxu0 0.0
    %2027 = vmatprep.subr.mxu0 0.0
    %2028 = vmatpush1.msra.mxu0 0.0
    %2029 = vmatprep.subr.mxu0 0.0
    %2030 = vmatpush1.msra.mxu0 0.0
    %2031 = vmatprep.subr.mxu0 0.0
    %2032 = vmatpush1.msra.mxu0 0.0
    %2033 = vmatprep.subr.mxu0 0.0
    %2034 = vmatpush1.msra.mxu0 0.0
    %2035 = vmatprep.subr.mxu0 0.0
    %2036 = vmatpush1.msra.mxu0 0.0
    %2037 = vmatprep.subr.mxu0 0.0
    %2038 = vmatpush1.msra.mxu0 0.0
    %2039 = vmatprep.subr.mxu0 0.0
    %2040 = vmatpush1.msra.mxu0 0.0
    %2041 = vmatprep.subr.mxu0 0.0
    %2042 = vmatpush1.msra.mxu0 0.0
    %2043 = vmatprep.subr.mxu0 0.0
    %2044 = vmatpush1.msra.mxu0 0.0
    %2045 = vmatprep.subr.mxu0 0.0
    %2046 = vmatpush1.msra.mxu0 0.0
    %2047 = vmatprep.subr.mxu0 0.0
    %2048 = vmatpush1.msra.mxu0 0.0
    %2049 = vmatprep.mubr.f32.mxu0 0.0
    %v2050 = vand.u32 %v1569, 4294901760
    %2051 = vmatmul.mubr.f32.gmra.mrb[0].mxu0 %v2050
    %v2052 = vpop.f32.mrb[0].mxu0
    %v2053 = vadd.f32 %v1978, %v2052
    %v2054 = vpop.f32.mrb[0].mxu0
    %2055 = vdwg.mxu0
    %v2057 = vrot.slane %v2053, 6
    %v2059 = vadd.f32 %v576, %v2057
    %v2060 = vtanh.pop %v2059
    %v2062 = vrot.slane %v2060, 2
    %v2063 = vsel %vm583, %v2062, 0
    %2065 = vmatprep.subr.mxu0 0.0
    %v2066 = vand.u32 %v579, 4294901760
    %2067 = vmatpush1.msra.mxu0 %v2066
    %2068 = vmatprep.subr.mxu0 0.0
    %v2069 = vand.u32 %v580, 4294901760
    %2070 = vmatpush1.msra.mxu0 %v2069
    %2071 = vmatprep.subr.mxu0 0.0
    %v2072 = vand.u32 %v581, 4294901760
    %2073 = vmatpush1.msra.mxu0 %v2072
    %2074 = vmatprep.subr.mxu0 0.0
    %v2075 = vand.u32 %v582, 4294901760
    %2076 = vmatpush1.msra.mxu0 %v2075
    %2077 = vmatprep.subr.mxu0 0.0
    %2078 = vmatpush1.msra.mxu0 0.0
    %2079 = vmatprep.subr.mxu0 0.0
    %2080 = vmatpush1.msra.mxu0 0.0
    %2081 = vmatprep.subr.mxu0 0.0
    %2082 = vmatpush1.msra.mxu0 0.0
    %2083 = vmatprep.subr.mxu0 0.0
    %2084 = vmatpush1.msra.mxu0 0.0
    %2085 = vmatprep.subr.mxu0 0.0
    %2086 = vmatpush1.msra.mxu0 0.0
    %2087 = vmatprep.subr.mxu0 0.0
    %2088 = vmatpush1.msra.mxu0 0.0
    %2089 = vmatprep.subr.mxu0 0.0
    %2090 = vmatpush1.msra.mxu0 0.0
    %2091 = vmatprep.subr.mxu0 0.0
    %2092 = vmatpush1.msra.mxu0 0.0
    %2093 = vmatprep.subr.mxu0 0.0
    %2094 = vmatpush1.msra.mxu0 0.0
    %2095 = vmatprep.subr.mxu0 0.0
    %2096 = vmatpush1.msra.mxu0 0.0
    %2097 = vmatprep.subr.mxu0 0.0
    %2098 = vmatpush1.msra.mxu0 0.0
    %2099 = vmatprep.subr.mxu0 0.0
    %2100 = vmatpush1.msra.mxu0 0.0
    %2101 = vmatprep.subr.mxu0 0.0
    %2102 = vmatpush1.msra.mxu0 0.0
    %2103 = vmatprep.subr.mxu0 0.0
    %2104 = vmatpush1.msra.mxu0 0.0
    %2105 = vmatprep.subr.mxu0 0.0
    %2106 = vmatpush1.msra.mxu0 0.0
    %2107 = vmatprep.subr.mxu0 0.0
    %2108 = vmatpush1.msra.mxu0 0.0
    %2109 = vmatprep.subr.mxu0 0.0
    %2110 = vmatpush1.msra.mxu0 0.0
    %2111 = vmatprep.subr.mxu0 0.0
    %2112 = vmatpush1.msra.mxu0 0.0
    %2113 = vmatprep.subr.mxu0 0.0
    %2114 = vmatpush1.msra.mxu0 0.0
    %2115 = vmatprep.subr.mxu0 0.0
    %2116 = vmatpush1.msra.mxu0 0.0
    %2117 = vmatprep.subr.mxu0 0.0
    %2118 = vmatpush1.msra.mxu0 0.0
    %2119 = vmatprep.subr.mxu0 0.0
    %2120 = vmatpush1.msra.mxu0 0.0
    %2121 = vmatprep.subr.mxu0 0.0
    %2122 = vmatpush1.msra.mxu0 0.0
    %2123 = vmatprep.subr.mxu0 0.0
    %2124 = vmatpush1.msra.mxu0 0.0
    %2125 = vmatprep.subr.mxu0 0.0
    %2126 = vmatpush1.msra.mxu0 0.0
    %2127 = vmatprep.subr.mxu0 0.0
    %2128 = vmatpush1.msra.mxu0 0.0
    %2129 = vmatprep.subr.mxu0 0.0
    %2130 = vmatpush1.msra.mxu0 0.0
    %2131 = vmatprep.subr.mxu0 0.0
    %2132 = vmatpush1.msra.mxu0 0.0
    %2133 = vmatprep.mubr.f32.mxu0 0.0
    %v2134 = vand.u32 %v2063, 4294901760
    %v2135 = vsub.f32 %v2063, %v2134
    %v2136 = vand.u32 %v2135, 4294901760
    %v2137 = vsub.f32 %v2135, %v2136
    %v2138 = vand.u32 %v2137, 4294901760
    %2139 = vmatmul.mubr.f32.gmra.mrb[0].mxu0 %v2138
    %v2140 = vpop.f32.mrb[0].mxu0
    %v2141 = vadd.f32 0.0, %v2140
    %v2142 = vpop.f32.mrb[0].mxu0
    %2143 = vdwg.mxu0
    %2144 = vmatprep.subr.mxu0 0.0
    %v2145 = vand.u32 %v579, 4294901760
    %v2146 = vsub.f32 %v579, %v2145
    %v2147 = vand.u32 %v2146, 4294901760
    %v2148 = vsub.f32 %v2146, %v2147
    %v2149 = vand.u32 %v2148, 4294901760
    %2150 = vmatpush1.msra.mxu0 %v2149
    %2151 = vmatprep.subr.mxu0 0.0
    %v2152 = vand.u32 %v580, 4294901760
    %v2153 = vsub.f32 %v580, %v2152
    %v2154 = vand.u32 %v2153, 4294901760
    %v2155 = vsub.f32 %v2153, %v2154
    %v2156 = vand.u32 %v2155, 4294901760
    %2157 = vmatpush1.msra.mxu0 %v2156
    %2158 = vmatprep.subr.mxu0 0.0
    %v2159 = vand.u32 %v581, 4294901760
    %v2160 = vsub.f32 %v581, %v2159
    %v2161 = vand.u32 %v2160, 4294901760
    %v2162 = vsub.f32 %v2160, %v2161
    %v2163 = vand.u32 %v2162, 4294901760
    %2164 = vmatpush1.msra.mxu0 %v2163
    %2165 = vmatprep.subr.mxu0 0.0
    %v2166 = vand.u32 %v582, 4294901760
    %v2167 = vsub.f32 %v582, %v2166
    %v2168 = vand.u32 %v2167, 4294901760
    %v2169 = vsub.f32 %v2167, %v2168
    %v2170 = vand.u32 %v2169, 4294901760
    %2171 = vmatpush1.msra.mxu0 %v2170
    %2172 = vmatprep.subr.mxu0 0.0
    %2173 = vmatpush1.msra.mxu0 0.0
    %2174 = vmatprep.subr.mxu0 0.0
    %2175 = vmatpush1.msra.mxu0 0.0
    %2176 = vmatprep.subr.mxu0 0.0
    %2177 = vmatpush1.msra.mxu0 0.0
    %2178 = vmatprep.subr.mxu0 0.0
    %2179 = vmatpush1.msra.mxu0 0.0
    %2180 = vmatprep.subr.mxu0 0.0
    %2181 = vmatpush1.msra.mxu0 0.0
    %2182 = vmatprep.subr.mxu0 0.0
    %2183 = vmatpush1.msra.mxu0 0.0
    %2184 = vmatprep.subr.mxu0 0.0
    %2185 = vmatpush1.msra.mxu0 0.0
    %2186 = vmatprep.subr.mxu0 0.0
    %2187 = vmatpush1.msra.mxu0 0.0
    %2188 = vmatprep.subr.mxu0 0.0
    %2189 = vmatpush1.msra.mxu0 0.0
    %2190 = vmatprep.subr.mxu0 0.0
    %2191 = vmatpush1.msra.mxu0 0.0
    %2192 = vmatprep.subr.mxu0 0.0
    %2193 = vmatpush1.msra.mxu0 0.0
    %2194 = vmatprep.subr.mxu0 0.0
    %2195 = vmatpush1.msra.mxu0 0.0
    %2196 = vmatprep.subr.mxu0 0.0
    %2197 = vmatpush1.msra.mxu0 0.0
    %2198 = vmatprep.subr.mxu0 0.0
    %2199 = vmatpush1.msra.mxu0 0.0
    %2200 = vmatprep.subr.mxu0 0.0
    %2201 = vmatpush1.msra.mxu0 0.0
    %2202 = vmatprep.subr.mxu0 0.0
    %2203 = vmatpush1.msra.mxu0 0.0
    %2204 = vmatprep.subr.mxu0 0.0
    %2205 = vmatpush1.msra.mxu0 0.0
    %2206 = vmatprep.subr.mxu0 0.0
    %2207 = vmatpush1.msra.mxu0 0.0
    %2208 = vmatprep.subr.mxu0 0.0
    %2209 = vmatpush1.msra.mxu0 0.0
    %2210 = vmatprep.subr.mxu0 0.0
    %2211 = vmatpush1.msra.mxu0 0.0
    %2212 = vmatprep.subr.mxu0 0.0
    %2213 = vmatpush1.msra.mxu0 0.0
    %2214 = vmatprep.subr.mxu0 0.0
    %2215 = vmatpush1.msra.mxu0 0.0
    %2216 = vmatprep.subr.mxu0 0.0
    %2217 = vmatpush1.msra.mxu0 0.0
    %2218 = vmatprep.subr.mxu0 0.0
    %2219 = vmatpush1.msra.mxu0 0.0
    %2220 = vmatprep.subr.mxu0 0.0
    %2221 = vmatpush1.msra.mxu0 0.0
    %2222 = vmatprep.subr.mxu0 0.0
    %2223 = vmatpush1.msra.mxu0 0.0
    %2224 = vmatprep.subr.mxu0 0.0
    %2225 = vmatpush1.msra.mxu0 0.0
    %2226 = vmatprep.subr.mxu0 0.0
    %2227 = vmatpush1.msra.mxu0 0.0
    %2228 = vmatprep.mubr.f32.mxu0 0.0
    %v2229 = vand.u32 %v2063, 4294901760
    %2230 = vmatmul.mubr.f32.gmra.mrb[0].mxu0 %v2229
    %v2231 = vpop.f32.mrb[0].mxu0
    %v2232 = vadd.f32 %v2141, %v2231
    %v2233 = vpop.f32.mrb[0].mxu0
    %2234 = vdwg.mxu0
    %2235 = vmatprep.subr.mxu0 0.0
    %v2236 = vand.u32 %v579, 4294901760
    %v2237 = vsub.f32 %v579, %v2236
    %2238 = vmatpush1.msra.mxu0 %v2237
    %2239 = vmatprep.subr.mxu0 0.0
    %v2240 = vand.u32 %v580, 4294901760
    %v2241 = vsub.f32 %v580, %v2240
    %2242 = vmatpush1.msra.mxu0 %v2241
    %2243 = vmatprep.subr.mxu0 0.0
    %v2244 = vand.u32 %v581, 4294901760
    %v2245 = vsub.f32 %v581, %v2244
    %2246 = vmatpush1.msra.mxu0 %v2245
    %2247 = vmatprep.subr.mxu0 0.0
    %v2248 = vand.u32 %v582, 4294901760
    %v2249 = vsub.f32 %v582, %v2248
    %2250 = vmatpush1.msra.mxu0 %v2249
    %2251 = vmatprep.subr.mxu0 0.0
    %2252 = vmatpush1.msra.mxu0 0.0
    %2253 = vmatprep.subr.mxu0 0.0
    %2254 = vmatpush1.msra.mxu0 0.0
    %2255 = vmatprep.subr.mxu0 0.0
    %2256 = vmatpush1.msra.mxu0 0.0
    %2257 = vmatprep.subr.mxu0 0.0
    %2258 = vmatpush1.msra.mxu0 0.0
    %2259 = vmatprep.subr.mxu0 0.0
    %2260 = vmatpush1.msra.mxu0 0.0
    %2261 = vmatprep.subr.mxu0 0.0
    %2262 = vmatpush1.msra.mxu0 0.0
    %2263 = vmatprep.subr.mxu0 0.0
    %2264 = vmatpush1.msra.mxu0 0.0
    %2265 = vmatprep.subr.mxu0 0.0
    %2266 = vmatpush1.msra.mxu0 0.0
    %2267 = vmatprep.subr.mxu0 0.0
    %2268 = vmatpush1.msra.mxu0 0.0
    %2269 = vmatprep.subr.mxu0 0.0
    %2270 = vmatpush1.msra.mxu0 0.0
    %2271 = vmatprep.subr.mxu0 0.0
    %2272 = vmatpush1.msra.mxu0 0.0
    %2273 = vmatprep.subr.mxu0 0.0
    %2274 = vmatpush1.msra.mxu0 0.0
    %2275 = vmatprep.subr.mxu0 0.0
    %2276 = vmatpush1.msra.mxu0 0.0
    %2277 = vmatprep.subr.mxu0 0.0
    %2278 = vmatpush1.msra.mxu0 0.0
    %2279 = vmatprep.subr.mxu0 0.0
    %2280 = vmatpush1.msra.mxu0 0.0
    %2281 = vmatprep.subr.mxu0 0.0
    %2282 = vmatpush1.msra.mxu0 0.0
    %2283 = vmatprep.subr.mxu0 0.0
    %2284 = vmatpush1.msra.mxu0 0.0
    %2285 = vmatprep.subr.mxu0 0.0
    %2286 = vmatpush1.msra.mxu0 0.0
    %2287 = vmatprep.subr.mxu0 0.0
    %2288 = vmatpush1.msra.mxu0 0.0
    %2289 = vmatprep.subr.mxu0 0.0
    %2290 = vmatpush1.msra.mxu0 0.0
    %2291 = vmatprep.subr.mxu0 0.0
    %2292 = vmatpush1.msra.mxu0 0.0
    %2293 = vmatprep.subr.mxu0 0.0
    %2294 = vmatpush1.msra.mxu0 0.0
    %2295 = vmatprep.subr.mxu0 0.0
    %2296 = vmatpush1.msra.mxu0 0.0
    %2297 = vmatprep.subr.mxu0 0.0
    %2298 = vmatpush1.msra.mxu0 0.0
    %2299 = vmatprep.subr.mxu0 0.0
    %2300 = vmatpush1.msra.mxu0 0.0
    %2301 = vmatprep.subr.mxu0 0.0
    %2302 = vmatpush1.msra.mxu0 0.0
    %2303 = vmatprep.subr.mxu0 0.0
    %2304 = vmatpush1.msra.mxu0 0.0
    %2305 = vmatprep.subr.mxu0 0.0
    %2306 = vmatpush1.msra.mxu0 0.0
    %2307 = vmatprep.mubr.f32.mxu0 0.0
    %v2308 = vand.u32 %v2063, 4294901760
    %v2309 = vsub.f32 %v2063, %v2308
    %2310 = vmatmul.mubr.f32.gmra.mrb[0].mxu0 %v2309
    %v2311 = vpop.f32.mrb[0].mxu0
    %v2312 = vadd.f32 %v2232, %v2311
    %v2313 = vpop.f32.mrb[0].mxu0
    %2314 = vdwg.mxu0
    %2315 = vmatprep.subr.mxu0 0.0
    %v2316 = vand.u32 %v579, 4294901760
    %2317 = vmatpush1.msra.mxu0 %v2316
    %2318 = vmatprep.subr.mxu0 0.0
    %v2319 = vand.u32 %v580, 4294901760
    %2320 = vmatpush1.msra.mxu0 %v2319
    %2321 = vmatprep.subr.mxu0 0.0
    %v2322 = vand.u32 %v581, 4294901760
    %2323 = vmatpush1.msra.mxu0 %v2322
    %2324 = vmatprep.subr.mxu0 0.0
    %v2325 = vand.u32 %v582, 4294901760
    %2326 = vmatpush1.msra.mxu0 %v2325
    %2327 = vmatprep.subr.mxu0 0.0
    %2328 = vmatpush1.msra.mxu0 0.0
    %2329 = vmatprep.subr.mxu0 0.0
    %2330 = vmatpush1.msra.mxu0 0.0
    %2331 = vmatprep.subr.mxu0 0.0
    %2332 = vmatpush1.msra.mxu0 0.0
    %2333 = vmatprep.subr.mxu0 0.0
    %2334 = vmatpush1.msra.mxu0 0.0
    %2335 = vmatprep.subr.mxu0 0.0
    %2336 = vmatpush1.msra.mxu0 0.0
    %2337 = vmatprep.subr.mxu0 0.0
    %2338 = vmatpush1.msra.mxu0 0.0
    %2339 = vmatprep.subr.mxu0 0.0
    %2340 = vmatpush1.msra.mxu0 0.0
    %2341 = vmatprep.subr.mxu0 0.0
    %2342 = vmatpush1.msra.mxu0 0.0
    %2343 = vmatprep.subr.mxu0 0.0
    %2344 = vmatpush1.msra.mxu0 0.0
    %2345 = vmatprep.subr.mxu0 0.0
    %2346 = vmatpush1.msra.mxu0 0.0
    %2347 = vmatprep.subr.mxu0 0.0
    %2348 = vmatpush1.msra.mxu0 0.0
    %2349 = vmatprep.subr.mxu0 0.0
    %2350 = vmatpush1.msra.mxu0 0.0
    %2351 = vmatprep.subr.mxu0 0.0
    %2352 = vmatpush1.msra.mxu0 0.0
    %2353 = vmatprep.subr.mxu0 0.0
    %2354 = vmatpush1.msra.mxu0 0.0
    %2355 = vmatprep.subr.mxu0 0.0
    %2356 = vmatpush1.msra.mxu0 0.0
    %2357 = vmatprep.subr.mxu0 0.0
    %2358 = vmatpush1.msra.mxu0 0.0
    %2359 = vmatprep.subr.mxu0 0.0
    %2360 = vmatpush1.msra.mxu0 0.0
    %2361 = vmatprep.subr.mxu0 0.0
    %2362 = vmatpush1.msra.mxu0 0.0
    %2363 = vmatprep.subr.mxu0 0.0
    %2364 = vmatpush1.msra.mxu0 0.0
    %2365 = vmatprep.subr.mxu0 0.0
    %2366 = vmatpush1.msra.mxu0 0.0
    %2367 = vmatprep.subr.mxu0 0.0
    %2368 = vmatpush1.msra.mxu0 0.0
    %2369 = vmatprep.subr.mxu0 0.0
    %2370 = vmatpush1.msra.mxu0 0.0
    %2371 = vmatprep.subr.mxu0 0.0
    %2372 = vmatpush1.msra.mxu0 0.0
    %2373 = vmatprep.subr.mxu0 0.0
    %2374 = vmatpush1.msra.mxu0 0.0
    %2375 = vmatprep.subr.mxu0 0.0
    %2376 = vmatpush1.msra.mxu0 0.0
    %2377 = vmatprep.subr.mxu0 0.0
    %2378 = vmatpush1.msra.mxu0 0.0
    %2379 = vmatprep.subr.mxu0 0.0
    %2380 = vmatpush1.msra.mxu0 0.0
    %2381 = vmatprep.subr.mxu0 0.0
    %2382 = vmatpush1.msra.mxu0 0.0
    %2383 = vmatprep.mubr.f32.mxu0 0.0
    %v2384 = vand.u32 %v2063, 4294901760
    %v2385 = vsub.f32 %v2063, %v2384
    %v2386 = vand.u32 %v2385, 4294901760
    %2387 = vmatmul.mubr.f32.gmra.mrb[0].mxu0 %v2386
    %v2388 = vpop.f32.mrb[0].mxu0
    %v2389 = vadd.f32 %v2312, %v2388
    %v2390 = vpop.f32.mrb[0].mxu0
    %2391 = vdwg.mxu0
    %2392 = vmatprep.subr.mxu0 0.0
    %v2393 = vand.u32 %v579, 4294901760
    %v2394 = vsub.f32 %v579, %v2393
    %v2395 = vand.u32 %v2394, 4294901760
    %2396 = vmatpush1.msra.mxu0 %v2395
    %2397 = vmatprep.subr.mxu0 0.0
    %v2398 = vand.u32 %v580, 4294901760
    %v2399 = vsub.f32 %v580, %v2398
    %v2400 = vand.u32 %v2399, 4294901760
    %2401 = vmatpush1.msra.mxu0 %v2400
    %2402 = vmatprep.subr.mxu0 0.0
    %v2403 = vand.u32 %v581, 4294901760
    %v2404 = vsub.f32 %v581, %v2403
    %v2405 = vand.u32 %v2404, 4294901760
    %2406 = vmatpush1.msra.mxu0 %v2405
    %2407 = vmatprep.subr.mxu0 0.0
    %v2408 = vand.u32 %v582, 4294901760
    %v2409 = vsub.f32 %v582, %v2408
    %v2410 = vand.u32 %v2409, 4294901760
    %2411 = vmatpush1.msra.mxu0 %v2410
    %2412 = vmatprep.subr.mxu0 0.0
    %2413 = vmatpush1.msra.mxu0 0.0
    %2414 = vmatprep.subr.mxu0 0.0
    %2415 = vmatpush1.msra.mxu0 0.0
    %2416 = vmatprep.subr.mxu0 0.0
    %2417 = vmatpush1.msra.mxu0 0.0
    %2418 = vmatprep.subr.mxu0 0.0
    %2419 = vmatpush1.msra.mxu0 0.0
    %2420 = vmatprep.subr.mxu0 0.0
    %2421 = vmatpush1.msra.mxu0 0.0
    %2422 = vmatprep.subr.mxu0 0.0
    %2423 = vmatpush1.msra.mxu0 0.0
    %2424 = vmatprep.subr.mxu0 0.0
    %2425 = vmatpush1.msra.mxu0 0.0
    %2426 = vmatprep.subr.mxu0 0.0
    %2427 = vmatpush1.msra.mxu0 0.0
    %2428 = vmatprep.subr.mxu0 0.0
    %2429 = vmatpush1.msra.mxu0 0.0
    %2430 = vmatprep.subr.mxu0 0.0
    %2431 = vmatpush1.msra.mxu0 0.0
    %2432 = vmatprep.subr.mxu0 0.0
    %2433 = vmatpush1.msra.mxu0 0.0
    %2434 = vmatprep.subr.mxu0 0.0
    %2435 = vmatpush1.msra.mxu0 0.0
    %2436 = vmatprep.subr.mxu0 0.0
    %2437 = vmatpush1.msra.mxu0 0.0
    %2438 = vmatprep.subr.mxu0 0.0
    %2439 = vmatpush1.msra.mxu0 0.0
    %2440 = vmatprep.subr.mxu0 0.0
    %2441 = vmatpush1.msra.mxu0 0.0
    %2442 = vmatprep.subr.mxu0 0.0
    %2443 = vmatpush1.msra.mxu0 0.0
    %2444 = vmatprep.subr.mxu0 0.0
    %2445 = vmatpush1.msra.mxu0 0.0
    %2446 = vmatprep.subr.mxu0 0.0
    %2447 = vmatpush1.msra.mxu0 0.0
    %2448 = vmatprep.subr.mxu0 0.0
    %2449 = vmatpush1.msra.mxu0 0.0
    %2450 = vmatprep.subr.mxu0 0.0
    %2451 = vmatpush1.msra.mxu0 0.0
    %2452 = vmatprep.subr.mxu0 0.0
    %2453 = vmatpush1.msra.mxu0 0.0
    %2454 = vmatprep.subr.mxu0 0.0
    %2455 = vmatpush1.msra.mxu0 0.0
    %2456 = vmatprep.subr.mxu0 0.0
    %2457 = vmatpush1.msra.mxu0 0.0
    %2458 = vmatprep.subr.mxu0 0.0
    %2459 = vmatpush1.msra.mxu0 0.0
    %2460 = vmatprep.subr.mxu0 0.0
    %2461 = vmatpush1.msra.mxu0 0.0
    %2462 = vmatprep.subr.mxu0 0.0
    %2463 = vmatpush1.msra.mxu0 0.0
    %2464 = vmatprep.subr.mxu0 0.0
    %2465 = vmatpush1.msra.mxu0 0.0
    %2466 = vmatprep.subr.mxu0 0.0
    %2467 = vmatpush1.msra.mxu0 0.0
    %2468 = vmatprep.mubr.f32.mxu0 0.0
    %v2469 = vand.u32 %v2063, 4294901760
    %2470 = vmatmul.mubr.f32.gmra.mrb[0].mxu0 %v2469
    %v2471 = vpop.f32.mrb[0].mxu0
    %v2472 = vadd.f32 %v2389, %v2471
    %v2473 = vpop.f32.mrb[0].mxu0
    %2474 = vdwg.mxu0
    %2475 = vmatprep.subr.mxu0 0.0
    %v2476 = vand.u32 %v579, 4294901760
    %2477 = vmatpush1.msra.mxu0 %v2476
    %2478 = vmatprep.subr.mxu0 0.0
    %v2479 = vand.u32 %v580, 4294901760
    %2480 = vmatpush1.msra.mxu0 %v2479
    %2481 = vmatprep.subr.mxu0 0.0
    %v2482 = vand.u32 %v581, 4294901760
    %2483 = vmatpush1.msra.mxu0 %v2482
    %2484 = vmatprep.subr.mxu0 0.0
    %v2485 = vand.u32 %v582, 4294901760
    %2486 = vmatpush1.msra.mxu0 %v2485
    %2487 = vmatprep.subr.mxu0 0.0
    %2488 = vmatpush1.msra.mxu0 0.0
    %2489 = vmatprep.subr.mxu0 0.0
    %2490 = vmatpush1.msra.mxu0 0.0
    %2491 = vmatprep.subr.mxu0 0.0
    %2492 = vmatpush1.msra.mxu0 0.0
    %2493 = vmatprep.subr.mxu0 0.0
    %2494 = vmatpush1.msra.mxu0 0.0
    %2495 = vmatprep.subr.mxu0 0.0
    %2496 = vmatpush1.msra.mxu0 0.0
    %2497 = vmatprep.subr.mxu0 0.0
    %2498 = vmatpush1.msra.mxu0 0.0
    %2499 = vmatprep.subr.mxu0 0.0
    %2500 = vmatpush1.msra.mxu0 0.0
    %2501 = vmatprep.subr.mxu0 0.0
    %2502 = vmatpush1.msra.mxu0 0.0
    %2503 = vmatprep.subr.mxu0 0.0
    %2504 = vmatpush1.msra.mxu0 0.0
    %2505 = vmatprep.subr.mxu0 0.0
    %2506 = vmatpush1.msra.mxu0 0.0
    %2507 = vmatprep.subr.mxu0 0.0
    %2508 = vmatpush1.msra.mxu0 0.0
    %2509 = vmatprep.subr.mxu0 0.0
    %2510 = vmatpush1.msra.mxu0 0.0
    %2511 = vmatprep.subr.mxu0 0.0
    %2512 = vmatpush1.msra.mxu0 0.0
    %2513 = vmatprep.subr.mxu0 0.0
    %2514 = vmatpush1.msra.mxu0 0.0
    %2515 = vmatprep.subr.mxu0 0.0
    %2516 = vmatpush1.msra.mxu0 0.0
    %2517 = vmatprep.subr.mxu0 0.0
    %2518 = vmatpush1.msra.mxu0 0.0
    %2519 = vmatprep.subr.mxu0 0.0
    %2520 = vmatpush1.msra.mxu0 0.0
    %2521 = vmatprep.subr.mxu0 0.0
    %2522 = vmatpush1.msra.mxu0 0.0
    %2523 = vmatprep.subr.mxu0 0.0
    %2524 = vmatpush1.msra.mxu0 0.0
    %2525 = vmatprep.subr.mxu0 0.0
    %2526 = vmatpush1.msra.mxu0 0.0
    %2527 = vmatprep.subr.mxu0 0.0
    %2528 = vmatpush1.msra.mxu0 0.0
    %2529 = vmatprep.subr.mxu0 0.0
    %2530 = vmatpush1.msra.mxu0 0.0
    %2531 = vmatprep.subr.mxu0 0.0
    %2532 = vmatpush1.msra.mxu0 0.0
    %2533 = vmatprep.subr.mxu0 0.0
    %2534 = vmatpush1.msra.mxu0 0.0
    %2535 = vmatprep.subr.mxu0 0.0
    %2536 = vmatpush1.msra.mxu0 0.0
    %2537 = vmatprep.subr.mxu0 0.0
    %2538 = vmatpush1.msra.mxu0 0.0
    %2539 = vmatprep.subr.mxu0 0.0
    %2540 = vmatpush1.msra.mxu0 0.0
    %2541 = vmatprep.subr.mxu0 0.0
    %2542 = vmatpush1.msra.mxu0 0.0
    %2543 = vmatprep.mubr.f32.mxu0 0.0
    %v2544 = vand.u32 %v2063, 4294901760
    %2545 = vmatmul.mubr.f32.gmra.mrb[0].mxu0 %v2544
    %v2546 = vpop.f32.mrb[0].mxu0
    %v2547 = vadd.f32 %v2472, %v2546
    %v2548 = vpop.f32.mrb[0].mxu0
    %2549 = vdwg.mxu0
    %v2551 = vrot.slane %v2547, 5
    %v2553 = vadd.f32 %v576, %v2551
    %v2554 = vtanh.pop %v2553
    %v2556 = vrot.slane %v2554, 3
    %v2557 = vsel %vm583, %v2556, 0
    %2559 = vmatprep.subr.mxu0 0.0
    %v2560 = vand.u32 %v579, 4294901760
    %2561 = vmatpush1.msra.mxu0 %v2560
    %2562 = vmatprep.subr.mxu0 0.0
    %v2563 = vand.u32 %v580, 4294901760
    %2564 = vmatpush1.msra.mxu0 %v2563
    %2565 = vmatprep.subr.mxu0 0.0
    %v2566 = vand.u32 %v581, 4294901760
    %2567 = vmatpush1.msra.mxu0 %v2566
    %2568 = vmatprep.subr.mxu0 0.0
    %v2569 = vand.u32 %v582, 4294901760
    %2570 = vmatpush1.msra.mxu0 %v2569
    %2571 = vmatprep.subr.mxu0 0.0
    %2572 = vmatpush1.msra.mxu0 0.0
    %2573 = vmatprep.subr.mxu0 0.0
    %2574 = vmatpush1.msra.mxu0 0.0
    %2575 = vmatprep.subr.mxu0 0.0
    %2576 = vmatpush1.msra.mxu0 0.0
    %2577 = vmatprep.subr.mxu0 0.0
    %2578 = vmatpush1.msra.mxu0 0.0
    %2579 = vmatprep.subr.mxu0 0.0
    %2580 = vmatpush1.msra.mxu0 0.0
    %2581 = vmatprep.subr.mxu0 0.0
    %2582 = vmatpush1.msra.mxu0 0.0
    %2583 = vmatprep.subr.mxu0 0.0
    %2584 = vmatpush1.msra.mxu0 0.0
    %2585 = vmatprep.subr.mxu0 0.0
    %2586 = vmatpush1.msra.mxu0 0.0
    %2587 = vmatprep.subr.mxu0 0.0
    %2588 = vmatpush1.msra.mxu0 0.0
    %2589 = vmatprep.subr.mxu0 0.0
    %2590 = vmatpush1.msra.mxu0 0.0
    %2591 = vmatprep.subr.mxu0 0.0
    %2592 = vmatpush1.msra.mxu0 0.0
    %2593 = vmatprep.subr.mxu0 0.0
    %2594 = vmatpush1.msra.mxu0 0.0
    %2595 = vmatprep.subr.mxu0 0.0
    %2596 = vmatpush1.msra.mxu0 0.0
    %2597 = vmatprep.subr.mxu0 0.0
    %2598 = vmatpush1.msra.mxu0 0.0
    %2599 = vmatprep.subr.mxu0 0.0
    %2600 = vmatpush1.msra.mxu0 0.0
    %2601 = vmatprep.subr.mxu0 0.0
    %2602 = vmatpush1.msra.mxu0 0.0
    %2603 = vmatprep.subr.mxu0 0.0
    %2604 = vmatpush1.msra.mxu0 0.0
    %2605 = vmatprep.subr.mxu0 0.0
    %2606 = vmatpush1.msra.mxu0 0.0
    %2607 = vmatprep.subr.mxu0 0.0
    %2608 = vmatpush1.msra.mxu0 0.0
    %2609 = vmatprep.subr.mxu0 0.0
    %2610 = vmatpush1.msra.mxu0 0.0
    %2611 = vmatprep.subr.mxu0 0.0
    %2612 = vmatpush1.msra.mxu0 0.0
    %2613 = vmatprep.subr.mxu0 0.0
    %2614 = vmatpush1.msra.mxu0 0.0
    %2615 = vmatprep.subr.mxu0 0.0
    %2616 = vmatpush1.msra.mxu0 0.0
    %2617 = vmatprep.subr.mxu0 0.0
    %2618 = vmatpush1.msra.mxu0 0.0
    %2619 = vmatprep.subr.mxu0 0.0
    %2620 = vmatpush1.msra.mxu0 0.0
    %2621 = vmatprep.subr.mxu0 0.0
    %2622 = vmatpush1.msra.mxu0 0.0
    %2623 = vmatprep.subr.mxu0 0.0
    %2624 = vmatpush1.msra.mxu0 0.0
    %2625 = vmatprep.subr.mxu0 0.0
    %2626 = vmatpush1.msra.mxu0 0.0
    %2627 = vmatprep.mubr.f32.mxu0 0.0
    %v2628 = vand.u32 %v2557, 4294901760
    %v2629 = vsub.f32 %v2557, %v2628
    %v2630 = vand.u32 %v2629, 4294901760
    %v2631 = vsub.f32 %v2629, %v2630
    %v2632 = vand.u32 %v2631, 4294901760
    %2633 = vmatmul.mubr.f32.gmra.mrb[0].mxu0 %v2632
    %v2634 = vpop.f32.mrb[0].mxu0
    %v2635 = vadd.f32 0.0, %v2634
    %v2636 = vpop.f32.mrb[0].mxu0
    %2637 = vdwg.mxu0
    %2638 = vmatprep.subr.mxu0 0.0
    %v2639 = vand.u32 %v579, 4294901760
    %v2640 = vsub.f32 %v579, %v2639
    %v2641 = vand.u32 %v2640, 4294901760
    %v2642 = vsub.f32 %v2640, %v2641
    %v2643 = vand.u32 %v2642, 4294901760
    %2644 = vmatpush1.msra.mxu0 %v2643
    %2645 = vmatprep.subr.mxu0 0.0
    %v2646 = vand.u32 %v580, 4294901760
    %v2647 = vsub.f32 %v580, %v2646
    %v2648 = vand.u32 %v2647, 4294901760
    %v2649 = vsub.f32 %v2647, %v2648
    %v2650 = vand.u32 %v2649, 4294901760
    %2651 = vmatpush1.msra.mxu0 %v2650
    %2652 = vmatprep.subr.mxu0 0.0
    %v2653 = vand.u32 %v581, 4294901760
    %v2654 = vsub.f32 %v581, %v2653
    %v2655 = vand.u32 %v2654, 4294901760
    %v2656 = vsub.f32 %v2654, %v2655
    %v2657 = vand.u32 %v2656, 4294901760
    %2658 = vmatpush1.msra.mxu0 %v2657
    %2659 = vmatprep.subr.mxu0 0.0
    %v2660 = vand.u32 %v582, 4294901760
    %v2661 = vsub.f32 %v582, %v2660
    %v2662 = vand.u32 %v2661, 4294901760
    %v2663 = vsub.f32 %v2661, %v2662
    %v2664 = vand.u32 %v2663, 4294901760
    %2665 = vmatpush1.msra.mxu0 %v2664
    %2666 = vmatprep.subr.mxu0 0.0
    %2667 = vmatpush1.msra.mxu0 0.0
    %2668 = vmatprep.subr.mxu0 0.0
    %2669 = vmatpush1.msra.mxu0 0.0
    %2670 = vmatprep.subr.mxu0 0.0
    %2671 = vmatpush1.msra.mxu0 0.0
    %2672 = vmatprep.subr.mxu0 0.0
    %2673 = vmatpush1.msra.mxu0 0.0
    %2674 = vmatprep.subr.mxu0 0.0
    %2675 = vmatpush1.msra.mxu0 0.0
    %2676 = vmatprep.subr.mxu0 0.0
    %2677 = vmatpush1.msra.mxu0 0.0
    %2678 = vmatprep.subr.mxu0 0.0
    %2679 = vmatpush1.msra.mxu0 0.0
    %2680 = vmatprep.subr.mxu0 0.0
    %2681 = vmatpush1.msra.mxu0 0.0
    %2682 = vmatprep.subr.mxu0 0.0
    %2683 = vmatpush1.msra.mxu0 0.0
    %2684 = vmatprep.subr.mxu0 0.0
    %2685 = vmatpush1.msra.mxu0 0.0
    %2686 = vmatprep.subr.mxu0 0.0
    %2687 = vmatpush1.msra.mxu0 0.0
    %2688 = vmatprep.subr.mxu0 0.0
    %2689 = vmatpush1.msra.mxu0 0.0
    %2690 = vmatprep.subr.mxu0 0.0
    %2691 = vmatpush1.msra.mxu0 0.0
    %2692 = vmatprep.subr.mxu0 0.0
    %2693 = vmatpush1.msra.mxu0 0.0
    %2694 = vmatprep.subr.mxu0 0.0
    %2695 = vmatpush1.msra.mxu0 0.0
    %2696 = vmatprep.subr.mxu0 0.0
    %2697 = vmatpush1.msra.mxu0 0.0
    %2698 = vmatprep.subr.mxu0 0.0
    %2699 = vmatpush1.msra.mxu0 0.0
    %2700 = vmatprep.subr.mxu0 0.0
    %2701 = vmatpush1.msra.mxu0 0.0
    %2702 = vmatprep.subr.mxu0 0.0
    %2703 = vmatpush1.msra.mxu0 0.0
    %2704 = vmatprep.subr.mxu0 0.0
    %2705 = vmatpush1.msra.mxu0 0.0
    %2706 = vmatprep.subr.mxu0 0.0
    %2707 = vmatpush1.msra.mxu0 0.0
    %2708 = vmatprep.subr.mxu0 0.0
    %2709 = vmatpush1.msra.mxu0 0.0
    %2710 = vmatprep.subr.mxu0 0.0
    %2711 = vmatpush1.msra.mxu0 0.0
    %2712 = vmatprep.subr.mxu0 0.0
    %2713 = vmatpush1.msra.mxu0 0.0
    %2714 = vmatprep.subr.mxu0 0.0
    %2715 = vmatpush1.msra.mxu0 0.0
    %2716 = vmatprep.subr.mxu0 0.0
    %2717 = vmatpush1.msra.mxu0 0.0
    %2718 = vmatprep.subr.mxu0 0.0
    %2719 = vmatpush1.msra.mxu0 0.0
    %2720 = vmatprep.subr.mxu0 0.0
    %2721 = vmatpush1.msra.mxu0 0.0
    %2722 = vmatprep.mubr.f32.mxu0 0.0
    %v2723 = vand.u32 %v2557, 4294901760
    %2724 = vmatmul.mubr.f32.gmra.mrb[0].mxu0 %v2723
    %v2725 = vpop.f32.mrb[0].mxu0
    %v2726 = vadd.f32 %v2635, %v2725
    %v2727 = vpop.f32.mrb[0].mxu0
    %2728 = vdwg.mxu0
    %2729 = vmatprep.subr.mxu0 0.0
    %v2730 = vand.u32 %v579, 4294901760
    %v2731 = vsub.f32 %v579, %v2730
    %2732 = vmatpush1.msra.mxu0 %v2731
    %2733 = vmatprep.subr.mxu0 0.0
    %v2734 = vand.u32 %v580, 4294901760
    %v2735 = vsub.f32 %v580, %v2734
    %2736 = vmatpush1.msra.mxu0 %v2735
    %2737 = vmatprep.subr.mxu0 0.0
    %v2738 = vand.u32 %v581, 4294901760
    %v2739 = vsub.f32 %v581, %v2738
    %2740 = vmatpush1.msra.mxu0 %v2739
    %2741 = vmatprep.subr.mxu0 0.0
    %v2742 = vand.u32 %v582, 4294901760
    %v2743 = vsub.f32 %v582, %v2742
    %2744 = vmatpush1.msra.mxu0 %v2743
    %2745 = vmatprep.subr.mxu0 0.0
    %2746 = vmatpush1.msra.mxu0 0.0
    %2747 = vmatprep.subr.mxu0 0.0
    %2748 = vmatpush1.msra.mxu0 0.0
    %2749 = vmatprep.subr.mxu0 0.0
    %2750 = vmatpush1.msra.mxu0 0.0
    %2751 = vmatprep.subr.mxu0 0.0
    %2752 = vmatpush1.msra.mxu0 0.0
    %2753 = vmatprep.subr.mxu0 0.0
    %2754 = vmatpush1.msra.mxu0 0.0
    %2755 = vmatprep.subr.mxu0 0.0
    %2756 = vmatpush1.msra.mxu0 0.0
    %2757 = vmatprep.subr.mxu0 0.0
    %2758 = vmatpush1.msra.mxu0 0.0
    %2759 = vmatprep.subr.mxu0 0.0
    %2760 = vmatpush1.msra.mxu0 0.0
    %2761 = vmatprep.subr.mxu0 0.0
    %2762 = vmatpush1.msra.mxu0 0.0
    %2763 = vmatprep.subr.mxu0 0.0
    %2764 = vmatpush1.msra.mxu0 0.0
    %2765 = vmatprep.subr.mxu0 0.0
    %2766 = vmatpush1.msra.mxu0 0.0
    %2767 = vmatprep.subr.mxu0 0.0
    %2768 = vmatpush1.msra.mxu0 0.0
    %2769 = vmatprep.subr.mxu0 0.0
    %2770 = vmatpush1.msra.mxu0 0.0
    %2771 = vmatprep.subr.mxu0 0.0
    %2772 = vmatpush1.msra.mxu0 0.0
    %2773 = vmatprep.subr.mxu0 0.0
    %2774 = vmatpush1.msra.mxu0 0.0
    %2775 = vmatprep.subr.mxu0 0.0
    %2776 = vmatpush1.msra.mxu0 0.0
    %2777 = vmatprep.subr.mxu0 0.0
    %2778 = vmatpush1.msra.mxu0 0.0
    %2779 = vmatprep.subr.mxu0 0.0
    %2780 = vmatpush1.msra.mxu0 0.0
    %2781 = vmatprep.subr.mxu0 0.0
    %2782 = vmatpush1.msra.mxu0 0.0
    %2783 = vmatprep.subr.mxu0 0.0
    %2784 = vmatpush1.msra.mxu0 0.0
    %2785 = vmatprep.subr.mxu0 0.0
    %2786 = vmatpush1.msra.mxu0 0.0
    %2787 = vmatprep.subr.mxu0 0.0
    %2788 = vmatpush1.msra.mxu0 0.0
    %2789 = vmatprep.subr.mxu0 0.0
    %2790 = vmatpush1.msra.mxu0 0.0
    %2791 = vmatprep.subr.mxu0 0.0
    %2792 = vmatpush1.msra.mxu0 0.0
    %2793 = vmatprep.subr.mxu0 0.0
    %2794 = vmatpush1.msra.mxu0 0.0
    %2795 = vmatprep.subr.mxu0 0.0
    %2796 = vmatpush1.msra.mxu0 0.0
    %2797 = vmatprep.subr.mxu0 0.0
    %2798 = vmatpush1.msra.mxu0 0.0
    %2799 = vmatprep.subr.mxu0 0.0
    %2800 = vmatpush1.msra.mxu0 0.0
    %2801 = vmatprep.mubr.f32.mxu0 0.0
    %v2802 = vand.u32 %v2557, 4294901760
    %v2803 = vsub.f32 %v2557, %v2802
    %2804 = vmatmul.mubr.f32.gmra.mrb[0].mxu0 %v2803
    %v2805 = vpop.f32.mrb[0].mxu0
    %v2806 = vadd.f32 %v2726, %v2805
    %v2807 = vpop.f32.mrb[0].mxu0
    %2808 = vdwg.mxu0
    %2809 = vmatprep.subr.mxu0 0.0
    %v2810 = vand.u32 %v579, 4294901760
    %2811 = vmatpush1.msra.mxu0 %v2810
    %2812 = vmatprep.subr.mxu0 0.0
    %v2813 = vand.u32 %v580, 4294901760
    %2814 = vmatpush1.msra.mxu0 %v2813
    %2815 = vmatprep.subr.mxu0 0.0
    %v2816 = vand.u32 %v581, 4294901760
    %2817 = vmatpush1.msra.mxu0 %v2816
    %2818 = vmatprep.subr.mxu0 0.0
    %v2819 = vand.u32 %v582, 4294901760
    %2820 = vmatpush1.msra.mxu0 %v2819
    %2821 = vmatprep.subr.mxu0 0.0
    %2822 = vmatpush1.msra.mxu0 0.0
    %2823 = vmatprep.subr.mxu0 0.0
    %2824 = vmatpush1.msra.mxu0 0.0
    %2825 = vmatprep.subr.mxu0 0.0
    %2826 = vmatpush1.msra.mxu0 0.0
    %2827 = vmatprep.subr.mxu0 0.0
    %2828 = vmatpush1.msra.mxu0 0.0
    %2829 = vmatprep.subr.mxu0 0.0
    %2830 = vmatpush1.msra.mxu0 0.0
    %2831 = vmatprep.subr.mxu0 0.0
    %2832 = vmatpush1.msra.mxu0 0.0
    %2833 = vmatprep.subr.mxu0 0.0
    %2834 = vmatpush1.msra.mxu0 0.0
    %2835 = vmatprep.subr.mxu0 0.0
    %2836 = vmatpush1.msra.mxu0 0.0
    %2837 = vmatprep.subr.mxu0 0.0
    %2838 = vmatpush1.msra.mxu0 0.0
    %2839 = vmatprep.subr.mxu0 0.0
    %2840 = vmatpush1.msra.mxu0 0.0
    %2841 = vmatprep.subr.mxu0 0.0
    %2842 = vmatpush1.msra.mxu0 0.0
    %2843 = vmatprep.subr.mxu0 0.0
    %2844 = vmatpush1.msra.mxu0 0.0
    %2845 = vmatprep.subr.mxu0 0.0
    %2846 = vmatpush1.msra.mxu0 0.0
    %2847 = vmatprep.subr.mxu0 0.0
    %2848 = vmatpush1.msra.mxu0 0.0
    %2849 = vmatprep.subr.mxu0 0.0
    %2850 = vmatpush1.msra.mxu0 0.0
    %2851 = vmatprep.subr.mxu0 0.0
    %2852 = vmatpush1.msra.mxu0 0.0
    %2853 = vmatprep.subr.mxu0 0.0
    %2854 = vmatpush1.msra.mxu0 0.0
    %2855 = vmatprep.subr.mxu0 0.0
    %2856 = vmatpush1.msra.mxu0 0.0
    %2857 = vmatprep.subr.mxu0 0.0
    %2858 = vmatpush1.msra.mxu0 0.0
    %2859 = vmatprep.subr.mxu0 0.0
    %2860 = vmatpush1.msra.mxu0 0.0
    %2861 = vmatprep.subr.mxu0 0.0
    %2862 = vmatpush1.msra.mxu0 0.0
    %2863 = vmatprep.subr.mxu0 0.0
    %2864 = vmatpush1.msra.mxu0 0.0
    %2865 = vmatprep.subr.mxu0 0.0
    %2866 = vmatpush1.msra.mxu0 0.0
    %2867 = vmatprep.subr.mxu0 0.0
    %2868 = vmatpush1.msra.mxu0 0.0
    %2869 = vmatprep.subr.mxu0 0.0
    %2870 = vmatpush1.msra.mxu0 0.0
    %2871 = vmatprep.subr.mxu0 0.0
    %2872 = vmatpush1.msra.mxu0 0.0
    %2873 = vmatprep.subr.mxu0 0.0
    %2874 = vmatpush1.msra.mxu0 0.0
    %2875 = vmatprep.subr.mxu0 0.0
    %2876 = vmatpush1.msra.mxu0 0.0
    %2877 = vmatprep.mubr.f32.mxu0 0.0
    %v2878 = vand.u32 %v2557, 4294901760
    %v2879 = vsub.f32 %v2557, %v2878
    %v2880 = vand.u32 %v2879, 4294901760
    %2881 = vmatmul.mubr.f32.gmra.mrb[0].mxu0 %v2880
    %v2882 = vpop.f32.mrb[0].mxu0
    %v2883 = vadd.f32 %v2806, %v2882
    %v2884 = vpop.f32.mrb[0].mxu0
    %2885 = vdwg.mxu0
    %2886 = vmatprep.subr.mxu0 0.0
    %v2887 = vand.u32 %v579, 4294901760
    %v2888 = vsub.f32 %v579, %v2887
    %v2889 = vand.u32 %v2888, 4294901760
    %2890 = vmatpush1.msra.mxu0 %v2889
    %2891 = vmatprep.subr.mxu0 0.0
    %v2892 = vand.u32 %v580, 4294901760
    %v2893 = vsub.f32 %v580, %v2892
    %v2894 = vand.u32 %v2893, 4294901760
    %2895 = vmatpush1.msra.mxu0 %v2894
    %2896 = vmatprep.subr.mxu0 0.0
    %v2897 = vand.u32 %v581, 4294901760
    %v2898 = vsub.f32 %v581, %v2897
    %v2899 = vand.u32 %v2898, 4294901760
    %2900 = vmatpush1.msra.mxu0 %v2899
    %2901 = vmatprep.subr.mxu0 0.0
    %v2902 = vand.u32 %v582, 4294901760
    %v2903 = vsub.f32 %v582, %v2902
    %v2904 = vand.u32 %v2903, 4294901760
    %2905 = vmatpush1.msra.mxu0 %v2904
    %2906 = vmatprep.subr.mxu0 0.0
    %2907 = vmatpush1.msra.mxu0 0.0
    %2908 = vmatprep.subr.mxu0 0.0
    %2909 = vmatpush1.msra.mxu0 0.0
    %2910 = vmatprep.subr.mxu0 0.0
    %2911 = vmatpush1.msra.mxu0 0.0
    %2912 = vmatprep.subr.mxu0 0.0
    %2913 = vmatpush1.msra.mxu0 0.0
    %2914 = vmatprep.subr.mxu0 0.0
    %2915 = vmatpush1.msra.mxu0 0.0
    %2916 = vmatprep.subr.mxu0 0.0
    %2917 = vmatpush1.msra.mxu0 0.0
    %2918 = vmatprep.subr.mxu0 0.0
    %2919 = vmatpush1.msra.mxu0 0.0
    %2920 = vmatprep.subr.mxu0 0.0
    %2921 = vmatpush1.msra.mxu0 0.0
    %2922 = vmatprep.subr.mxu0 0.0
    %2923 = vmatpush1.msra.mxu0 0.0
    %2924 = vmatprep.subr.mxu0 0.0
    %2925 = vmatpush1.msra.mxu0 0.0
    %2926 = vmatprep.subr.mxu0 0.0
    %2927 = vmatpush1.msra.mxu0 0.0
    %2928 = vmatprep.subr.mxu0 0.0
    %2929 = vmatpush1.msra.mxu0 0.0
    %2930 = vmatprep.subr.mxu0 0.0
    %2931 = vmatpush1.msra.mxu0 0.0
    %2932 = vmatprep.subr.mxu0 0.0
    %2933 = vmatpush1.msra.mxu0 0.0
    %2934 = vmatprep.subr.mxu0 0.0
    %2935 = vmatpush1.msra.mxu0 0.0
    %2936 = vmatprep.subr.mxu0 0.0
    %2937 = vmatpush1.msra.mxu0 0.0
    %2938 = vmatprep.subr.mxu0 0.0
    %2939 = vmatpush1.msra.mxu0 0.0
    %2940 = vmatprep.subr.mxu0 0.0
    %2941 = vmatpush1.msra.mxu0 0.0
    %2942 = vmatprep.subr.mxu0 0.0
    %2943 = vmatpush1.msra.mxu0 0.0
    %2944 = vmatprep.subr.mxu0 0.0
    %2945 = vmatpush1.msra.mxu0 0.0
    %2946 = vmatprep.subr.mxu0 0.0
    %2947 = vmatpush1.msra.mxu0 0.0
    %2948 = vmatprep.subr.mxu0 0.0
    %2949 = vmatpush1.msra.mxu0 0.0
    %2950 = vmatprep.subr.mxu0 0.0
    %2951 = vmatpush1.msra.mxu0 0.0
    %2952 = vmatprep.subr.mxu0 0.0
    %2953 = vmatpush1.msra.mxu0 0.0
    %2954 = vmatprep.subr.mxu0 0.0
    %2955 = vmatpush1.msra.mxu0 0.0
    %2956 = vmatprep.subr.mxu0 0.0
    %2957 = vmatpush1.msra.mxu0 0.0
    %2958 = vmatprep.subr.mxu0 0.0
    %2959 = vmatpush1.msra.mxu0 0.0
    %2960 = vmatprep.subr.mxu0 0.0
    %2961 = vmatpush1.msra.mxu0 0.0
    %2962 = vmatprep.mubr.f32.mxu0 0.0
    %v2963 = vand.u32 %v2557, 4294901760
    %2964 = vmatmul.mubr.f32.gmra.mrb[0].mxu0 %v2963
    %v2965 = vpop.f32.mrb[0].mxu0
    %v2966 = vadd.f32 %v2883, %v2965
    %v2967 = vpop.f32.mrb[0].mxu0
    %2968 = vdwg.mxu0
    %2969 = vmatprep.subr.mxu0 0.0
    %v2970 = vand.u32 %v579, 4294901760
    %2971 = vmatpush1.msra.mxu0 %v2970
    %2972 = vmatprep.subr.mxu0 0.0
    %v2973 = vand.u32 %v580, 4294901760
    %2974 = vmatpush1.msra.mxu0 %v2973
    %2975 = vmatprep.subr.mxu0 0.0
    %v2976 = vand.u32 %v581, 4294901760
    %2977 = vmatpush1.msra.mxu0 %v2976
    %2978 = vmatprep.subr.mxu0 0.0
    %v2979 = vand.u32 %v582, 4294901760
    %2980 = vmatpush1.msra.mxu0 %v2979
    %2981 = vmatprep.subr.mxu0 0.0
    %2982 = vmatpush1.msra.mxu0 0.0
    %2983 = vmatprep.subr.mxu0 0.0
    %2984 = vmatpush1.msra.mxu0 0.0
    %2985 = vmatprep.subr.mxu0 0.0
    %2986 = vmatpush1.msra.mxu0 0.0
    %2987 = vmatprep.subr.mxu0 0.0
    %2988 = vmatpush1.msra.mxu0 0.0
    %2989 = vmatprep.subr.mxu0 0.0
    %2990 = vmatpush1.msra.mxu0 0.0
    %2991 = vmatprep.subr.mxu0 0.0
    %2992 = vmatpush1.msra.mxu0 0.0
    %2993 = vmatprep.subr.mxu0 0.0
    %2994 = vmatpush1.msra.mxu0 0.0
    %2995 = vmatprep.subr.mxu0 0.0
    %2996 = vmatpush1.msra.mxu0 0.0
    %2997 = vmatprep.subr.mxu0 0.0
    %2998 = vmatpush1.msra.mxu0 0.0
    %2999 = vmatprep.subr.mxu0 0.0
    %3000 = vmatpush1.msra.mxu0 0.0
    %3001 = vmatprep.subr.mxu0 0.0
    %3002 = vmatpush1.msra.mxu0 0.0
    %3003 = vmatprep.subr.mxu0 0.0
    %3004 = vmatpush1.msra.mxu0 0.0
    %3005 = vmatprep.subr.mxu0 0.0
    %3006 = vmatpush1.msra.mxu0 0.0
    %3007 = vmatprep.subr.mxu0 0.0
    %3008 = vmatpush1.msra.mxu0 0.0
    %3009 = vmatprep.subr.mxu0 0.0
    %3010 = vmatpush1.msra.mxu0 0.0
    %3011 = vmatprep.subr.mxu0 0.0
    %3012 = vmatpush1.msra.mxu0 0.0
    %3013 = vmatprep.subr.mxu0 0.0
    %3014 = vmatpush1.msra.mxu0 0.0
    %3015 = vmatprep.subr.mxu0 0.0
    %3016 = vmatpush1.msra.mxu0 0.0
    %3017 = vmatprep.subr.mxu0 0.0
    %3018 = vmatpush1.msra.mxu0 0.0
    %3019 = vmatprep.subr.mxu0 0.0
    %3020 = vmatpush1.msra.mxu0 0.0
    %3021 = vmatprep.subr.mxu0 0.0
    %3022 = vmatpush1.msra.mxu0 0.0
    %3023 = vmatprep.subr.mxu0 0.0
    %3024 = vmatpush1.msra.mxu0 0.0
    %3025 = vmatprep.subr.mxu0 0.0
    %3026 = vmatpush1.msra.mxu0 0.0
    %3027 = vmatprep.subr.mxu0 0.0
    %3028 = vmatpush1.msra.mxu0 0.0
    %3029 = vmatprep.subr.mxu0 0.0
    %3030 = vmatpush1.msra.mxu0 0.0
    %3031 = vmatprep.subr.mxu0 0.0
    %3032 = vmatpush1.msra.mxu0 0.0
    %3033 = vmatprep.subr.mxu0 0.0
    %3034 = vmatpush1.msra.mxu0 0.0
    %3035 = vmatprep.subr.mxu0 0.0
    %3036 = vmatpush1.msra.mxu0 0.0
    %3037 = vmatprep.mubr.f32.mxu0 0.0
    %v3038 = vand.u32 %v2557, 4294901760
    %3039 = vmatmul.mubr.f32.gmra.mrb[0].mxu0 %v3038
    %v3040 = vpop.f32.mrb[0].mxu0
    %v3041 = vadd.f32 %v2966, %v3040
    %v3042 = vpop.f32.mrb[0].mxu0
    %3043 = vdwg.mxu0
    %v3045 = vrot.slane %v3041, 4
    %v3047 = vadd.f32 %v576, %v3045
    %v3048 = vtanh.pop %v3047
    %v3050 = vrot.slane %v3048, 4
    %v3051 = vsel %vm583, %v3050, 0
    %3053 = vmatprep.subr.mxu0 0.0
    %v3054 = vand.u32 %v579, 4294901760
    %3055 = vmatpush1.msra.mxu0 %v3054
    %3056 = vmatprep.subr.mxu0 0.0
    %v3057 = vand.u32 %v580, 4294901760
    %3058 = vmatpush1.msra.mxu0 %v3057
    %3059 = vmatprep.subr.mxu0 0.0
    %v3060 = vand.u32 %v581, 4294901760
    %3061 = vmatpush1.msra.mxu0 %v3060
    %3062 = vmatprep.subr.mxu0 0.0
    %v3063 = vand.u32 %v582, 4294901760
    %3064 = vmatpush1.msra.mxu0 %v3063
    %3065 = vmatprep.subr.mxu0 0.0
    %3066 = vmatpush1.msra.mxu0 0.0
    %3067 = vmatprep.subr.mxu0 0.0
    %3068 = vmatpush1.msra.mxu0 0.0
    %3069 = vmatprep.subr.mxu0 0.0
    %3070 = vmatpush1.msra.mxu0 0.0
    %3071 = vmatprep.subr.mxu0 0.0
    %3072 = vmatpush1.msra.mxu0 0.0
    %3073 = vmatprep.subr.mxu0 0.0
    %3074 = vmatpush1.msra.mxu0 0.0
    %3075 = vmatprep.subr.mxu0 0.0
    %3076 = vmatpush1.msra.mxu0 0.0
    %3077 = vmatprep.subr.mxu0 0.0
    %3078 = vmatpush1.msra.mxu0 0.0
    %3079 = vmatprep.subr.mxu0 0.0
    %3080 = vmatpush1.msra.mxu0 0.0
    %3081 = vmatprep.subr.mxu0 0.0
    %3082 = vmatpush1.msra.mxu0 0.0
    %3083 = vmatprep.subr.mxu0 0.0
    %3084 = vmatpush1.msra.mxu0 0.0
    %3085 = vmatprep.subr.mxu0 0.0
    %3086 = vmatpush1.msra.mxu0 0.0
    %3087 = vmatprep.subr.mxu0 0.0
    %3088 = vmatpush1.msra.mxu0 0.0
    %3089 = vmatprep.subr.mxu0 0.0
    %3090 = vmatpush1.msra.mxu0 0.0
    %3091 = vmatprep.subr.mxu0 0.0
    %3092 = vmatpush1.msra.mxu0 0.0
    %3093 = vmatprep.subr.mxu0 0.0
    %3094 = vmatpush1.msra.mxu0 0.0
    %3095 = vmatprep.subr.mxu0 0.0
    %3096 = vmatpush1.msra.mxu0 0.0
    %3097 = vmatprep.subr.mxu0 0.0
    %3098 = vmatpush1.msra.mxu0 0.0
    %3099 = vmatprep.subr.mxu0 0.0
    %3100 = vmatpush1.msra.mxu0 0.0
    %3101 = vmatprep.subr.mxu0 0.0
    %3102 = vmatpush1.msra.mxu0 0.0
    %3103 = vmatprep.subr.mxu0 0.0
    %3104 = vmatpush1.msra.mxu0 0.0
    %3105 = vmatprep.subr.mxu0 0.0
    %3106 = vmatpush1.msra.mxu0 0.0
    %3107 = vmatprep.subr.mxu0 0.0
    %3108 = vmatpush1.msra.mxu0 0.0
    %3109 = vmatprep.subr.mxu0 0.0
    %3110 = vmatpush1.msra.mxu0 0.0
    %3111 = vmatprep.subr.mxu0 0.0
    %3112 = vmatpush1.msra.mxu0 0.0
    %3113 = vmatprep.subr.mxu0 0.0
    %3114 = vmatpush1.msra.mxu0 0.0
    %3115 = vmatprep.subr.mxu0 0.0
    %3116 = vmatpush1.msra.mxu0 0.0
    %3117 = vmatprep.subr.mxu0 0.0
    %3118 = vmatpush1.msra.mxu0 0.0
    %3119 = vmatprep.subr.mxu0 0.0
    %3120 = vmatpush1.msra.mxu0 0.0
    %3121 = vmatprep.mubr.f32.mxu0 0.0
    %v3122 = vand.u32 %v3051, 4294901760
    %v3123 = vsub.f32 %v3051, %v3122
    %v3124 = vand.u32 %v3123, 4294901760
    %v3125 = vsub.f32 %v3123, %v3124
    %v3126 = vand.u32 %v3125, 4294901760
    %3127 = vmatmul.mubr.f32.gmra.mrb[0].mxu0 %v3126
    %v3128 = vpop.f32.mrb[0].mxu0
    %v3129 = vadd.f32 0.0, %v3128
    %v3130 = vpop.f32.mrb[0].mxu0
    %3131 = vdwg.mxu0
    %3132 = vmatprep.subr.mxu0 0.0
    %v3133 = vand.u32 %v579, 4294901760
    %v3134 = vsub.f32 %v579, %v3133
    %v3135 = vand.u32 %v3134, 4294901760
    %v3136 = vsub.f32 %v3134, %v3135
    %v3137 = vand.u32 %v3136, 4294901760
    %3138 = vmatpush1.msra.mxu0 %v3137
    %3139 = vmatprep.subr.mxu0 0.0
    %v3140 = vand.u32 %v580, 4294901760
    %v3141 = vsub.f32 %v580, %v3140
    %v3142 = vand.u32 %v3141, 4294901760
    %v3143 = vsub.f32 %v3141, %v3142
    %v3144 = vand.u32 %v3143, 4294901760
    %3145 = vmatpush1.msra.mxu0 %v3144
    %3146 = vmatprep.subr.mxu0 0.0
    %v3147 = vand.u32 %v581, 4294901760
    %v3148 = vsub.f32 %v581, %v3147
    %v3149 = vand.u32 %v3148, 4294901760
    %v3150 = vsub.f32 %v3148, %v3149
    %v3151 = vand.u32 %v3150, 4294901760
    %3152 = vmatpush1.msra.mxu0 %v3151
    %3153 = vmatprep.subr.mxu0 0.0
    %v3154 = vand.u32 %v582, 4294901760
    %v3155 = vsub.f32 %v582, %v3154
    %v3156 = vand.u32 %v3155, 4294901760
    %v3157 = vsub.f32 %v3155, %v3156
    %v3158 = vand.u32 %v3157, 4294901760
    %3159 = vmatpush1.msra.mxu0 %v3158
    %3160 = vmatprep.subr.mxu0 0.0
    %3161 = vmatpush1.msra.mxu0 0.0
    %3162 = vmatprep.subr.mxu0 0.0
    %3163 = vmatpush1.msra.mxu0 0.0
    %3164 = vmatprep.subr.mxu0 0.0
    %3165 = vmatpush1.msra.mxu0 0.0
    %3166 = vmatprep.subr.mxu0 0.0
    %3167 = vmatpush1.msra.mxu0 0.0
    %3168 = vmatprep.subr.mxu0 0.0
    %3169 = vmatpush1.msra.mxu0 0.0
    %3170 = vmatprep.subr.mxu0 0.0
    %3171 = vmatpush1.msra.mxu0 0.0
    %3172 = vmatprep.subr.mxu0 0.0
    %3173 = vmatpush1.msra.mxu0 0.0
    %3174 = vmatprep.subr.mxu0 0.0
    %3175 = vmatpush1.msra.mxu0 0.0
    %3176 = vmatprep.subr.mxu0 0.0
    %3177 = vmatpush1.msra.mxu0 0.0
    %3178 = vmatprep.subr.mxu0 0.0
    %3179 = vmatpush1.msra.mxu0 0.0
    %3180 = vmatprep.subr.mxu0 0.0
    %3181 = vmatpush1.msra.mxu0 0.0
    %3182 = vmatprep.subr.mxu0 0.0
    %3183 = vmatpush1.msra.mxu0 0.0
    %3184 = vmatprep.subr.mxu0 0.0
    %3185 = vmatpush1.msra.mxu0 0.0
    %3186 = vmatprep.subr.mxu0 0.0
    %3187 = vmatpush1.msra.mxu0 0.0
    %3188 = vmatprep.subr.mxu0 0.0
    %3189 = vmatpush1.msra.mxu0 0.0
    %3190 = vmatprep.subr.mxu0 0.0
    %3191 = vmatpush1.msra.mxu0 0.0
    %3192 = vmatprep.subr.mxu0 0.0
    %3193 = vmatpush1.msra.mxu0 0.0
    %3194 = vmatprep.subr.mxu0 0.0
    %3195 = vmatpush1.msra.mxu0 0.0
    %3196 = vmatprep.subr.mxu0 0.0
    %3197 = vmatpush1.msra.mxu0 0.0
    %3198 = vmatprep.subr.mxu0 0.0
    %3199 = vmatpush1.msra.mxu0 0.0
    %3200 = vmatprep.subr.mxu0 0.0
    %3201 = vmatpush1.msra.mxu0 0.0
    %3202 = vmatprep.subr.mxu0 0.0
    %3203 = vmatpush1.msra.mxu0 0.0
    %3204 = vmatprep.subr.mxu0 0.0
    %3205 = vmatpush1.msra.mxu0 0.0
    %3206 = vmatprep.subr.mxu0 0.0
    %3207 = vmatpush1.msra.mxu0 0.0
    %3208 = vmatprep.subr.mxu0 0.0
    %3209 = vmatpush1.msra.mxu0 0.0
    %3210 = vmatprep.subr.mxu0 0.0
    %3211 = vmatpush1.msra.mxu0 0.0
    %3212 = vmatprep.subr.mxu0 0.0
    %3213 = vmatpush1.msra.mxu0 0.0
    %3214 = vmatprep.subr.mxu0 0.0
    %3215 = vmatpush1.msra.mxu0 0.0
    %3216 = vmatprep.mubr.f32.mxu0 0.0
    %v3217 = vand.u32 %v3051, 4294901760
    %3218 = vmatmul.mubr.f32.gmra.mrb[0].mxu0 %v3217
    %v3219 = vpop.f32.mrb[0].mxu0
    %v3220 = vadd.f32 %v3129, %v3219
    %v3221 = vpop.f32.mrb[0].mxu0
    %3222 = vdwg.mxu0
    %3223 = vmatprep.subr.mxu0 0.0
    %v3224 = vand.u32 %v579, 4294901760
    %v3225 = vsub.f32 %v579, %v3224
    %3226 = vmatpush1.msra.mxu0 %v3225
    %3227 = vmatprep.subr.mxu0 0.0
    %v3228 = vand.u32 %v580, 4294901760
    %v3229 = vsub.f32 %v580, %v3228
    %3230 = vmatpush1.msra.mxu0 %v3229
    %3231 = vmatprep.subr.mxu0 0.0
    %v3232 = vand.u32 %v581, 4294901760
    %v3233 = vsub.f32 %v581, %v3232
    %3234 = vmatpush1.msra.mxu0 %v3233
    %3235 = vmatprep.subr.mxu0 0.0
    %v3236 = vand.u32 %v582, 4294901760
    %v3237 = vsub.f32 %v582, %v3236
    %3238 = vmatpush1.msra.mxu0 %v3237
    %3239 = vmatprep.subr.mxu0 0.0
    %3240 = vmatpush1.msra.mxu0 0.0
    %3241 = vmatprep.subr.mxu0 0.0
    %3242 = vmatpush1.msra.mxu0 0.0
    %3243 = vmatprep.subr.mxu0 0.0
    %3244 = vmatpush1.msra.mxu0 0.0
    %3245 = vmatprep.subr.mxu0 0.0
    %3246 = vmatpush1.msra.mxu0 0.0
    %3247 = vmatprep.subr.mxu0 0.0
    %3248 = vmatpush1.msra.mxu0 0.0
    %3249 = vmatprep.subr.mxu0 0.0
    %3250 = vmatpush1.msra.mxu0 0.0
    %3251 = vmatprep.subr.mxu0 0.0
    %3252 = vmatpush1.msra.mxu0 0.0
    %3253 = vmatprep.subr.mxu0 0.0
    %3254 = vmatpush1.msra.mxu0 0.0
    %3255 = vmatprep.subr.mxu0 0.0
    %3256 = vmatpush1.msra.mxu0 0.0
    %3257 = vmatprep.subr.mxu0 0.0
    %3258 = vmatpush1.msra.mxu0 0.0
    %3259 = vmatprep.subr.mxu0 0.0
    %3260 = vmatpush1.msra.mxu0 0.0
    %3261 = vmatprep.subr.mxu0 0.0
    %3262 = vmatpush1.msra.mxu0 0.0
    %3263 = vmatprep.subr.mxu0 0.0
    %3264 = vmatpush1.msra.mxu0 0.0
    %3265 = vmatprep.subr.mxu0 0.0
    %3266 = vmatpush1.msra.mxu0 0.0
    %3267 = vmatprep.subr.mxu0 0.0
    %3268 = vmatpush1.msra.mxu0 0.0
    %3269 = vmatprep.subr.mxu0 0.0
    %3270 = vmatpush1.msra.mxu0 0.0
    %3271 = vmatprep.subr.mxu0 0.0
    %3272 = vmatpush1.msra.mxu0 0.0
    %3273 = vmatprep.subr.mxu0 0.0
    %3274 = vmatpush1.msra.mxu0 0.0
    %3275 = vmatprep.subr.mxu0 0.0
    %3276 = vmatpush1.msra.mxu0 0.0
    %3277 = vmatprep.subr.mxu0 0.0
    %3278 = vmatpush1.msra.mxu0 0.0
    %3279 = vmatprep.subr.mxu0 0.0
    %3280 = vmatpush1.msra.mxu0 0.0
    %3281 = vmatprep.subr.mxu0 0.0
    %3282 = vmatpush1.msra.mxu0 0.0
    %3283 = vmatprep.subr.mxu0 0.0
    %3284 = vmatpush1.msra.mxu0 0.0
    %3285 = vmatprep.subr.mxu0 0.0
    %3286 = vmatpush1.msra.mxu0 0.0
    %3287 = vmatprep.subr.mxu0 0.0
    %3288 = vmatpush1.msra.mxu0 0.0
    %3289 = vmatprep.subr.mxu0 0.0
    %3290 = vmatpush1.msra.mxu0 0.0
    %3291 = vmatprep.subr.mxu0 0.0
    %3292 = vmatpush1.msra.mxu0 0.0
    %3293 = vmatprep.subr.mxu0 0.0
    %3294 = vmatpush1.msra.mxu0 0.0
    %3295 = vmatprep.mubr.f32.mxu0 0.0
    %v3296 = vand.u32 %v3051, 4294901760
    %v3297 = vsub.f32 %v3051, %v3296
    %3298 = vmatmul.mubr.f32.gmra.mrb[0].mxu0 %v3297
    %v3299 = vpop.f32.mrb[0].mxu0
    %v3300 = vadd.f32 %v3220, %v3299
    %v3301 = vpop.f32.mrb[0].mxu0
    %3302 = vdwg.mxu0
    %3303 = vmatprep.subr.mxu0 0.0
    %v3304 = vand.u32 %v579, 4294901760
    %3305 = vmatpush1.msra.mxu0 %v3304
    %3306 = vmatprep.subr.mxu0 0.0
    %v3307 = vand.u32 %v580, 4294901760
    %3308 = vmatpush1.msra.mxu0 %v3307
    %3309 = vmatprep.subr.mxu0 0.0
    %v3310 = vand.u32 %v581, 4294901760
    %3311 = vmatpush1.msra.mxu0 %v3310
    %3312 = vmatprep.subr.mxu0 0.0
    %v3313 = vand.u32 %v582, 4294901760
    %3314 = vmatpush1.msra.mxu0 %v3313
    %3315 = vmatprep.subr.mxu0 0.0
    %3316 = vmatpush1.msra.mxu0 0.0
    %3317 = vmatprep.subr.mxu0 0.0
    %3318 = vmatpush1.msra.mxu0 0.0
    %3319 = vmatprep.subr.mxu0 0.0
    %3320 = vmatpush1.msra.mxu0 0.0
    %3321 = vmatprep.subr.mxu0 0.0
    %3322 = vmatpush1.msra.mxu0 0.0
    %3323 = vmatprep.subr.mxu0 0.0
    %3324 = vmatpush1.msra.mxu0 0.0
    %3325 = vmatprep.subr.mxu0 0.0
    %3326 = vmatpush1.msra.mxu0 0.0
    %3327 = vmatprep.subr.mxu0 0.0
    %3328 = vmatpush1.msra.mxu0 0.0
    %3329 = vmatprep.subr.mxu0 0.0
    %3330 = vmatpush1.msra.mxu0 0.0
    %3331 = vmatprep.subr.mxu0 0.0
    %3332 = vmatpush1.msra.mxu0 0.0
    %3333 = vmatprep.subr.mxu0 0.0
    %3334 = vmatpush1.msra.mxu0 0.0
    %3335 = vmatprep.subr.mxu0 0.0
    %3336 = vmatpush1.msra.mxu0 0.0
    %3337 = vmatprep.subr.mxu0 0.0
    %3338 = vmatpush1.msra.mxu0 0.0
    %3339 = vmatprep.subr.mxu0 0.0
    %3340 = vmatpush1.msra.mxu0 0.0
    %3341 = vmatprep.subr.mxu0 0.0
    %3342 = vmatpush1.msra.mxu0 0.0
    %3343 = vmatprep.subr.mxu0 0.0
    %3344 = vmatpush1.msra.mxu0 0.0
    %3345 = vmatprep.subr.mxu0 0.0
    %3346 = vmatpush1.msra.mxu0 0.0
    %3347 = vmatprep.subr.mxu0 0.0
    %3348 = vmatpush1.msra.mxu0 0.0
    %3349 = vmatprep.subr.mxu0 0.0
    %3350 = vmatpush1.msra.mxu0 0.0
    %3351 = vmatprep.subr.mxu0 0.0
    %3352 = vmatpush1.msra.mxu0 0.0
    %3353 = vmatprep.subr.mxu0 0.0
    %3354 = vmatpush1.msra.mxu0 0.0
    %3355 = vmatprep.subr.mxu0 0.0
    %3356 = vmatpush1.msra.mxu0 0.0
    %3357 = vmatprep.subr.mxu0 0.0
    %3358 = vmatpush1.msra.mxu0 0.0
    %3359 = vmatprep.subr.mxu0 0.0
    %3360 = vmatpush1.msra.mxu0 0.0
    %3361 = vmatprep.subr.mxu0 0.0
    %3362 = vmatpush1.msra.mxu0 0.0
    %3363 = vmatprep.subr.mxu0 0.0
    %3364 = vmatpush1.msra.mxu0 0.0
    %3365 = vmatprep.subr.mxu0 0.0
    %3366 = vmatpush1.msra.mxu0 0.0
    %3367 = vmatprep.subr.mxu0 0.0
    %3368 = vmatpush1.msra.mxu0 0.0
    %3369 = vmatprep.subr.mxu0 0.0
    %3370 = vmatpush1.msra.mxu0 0.0
    %3371 = vmatprep.mubr.f32.mxu0 0.0
    %v3372 = vand.u32 %v3051, 4294901760
    %v3373 = vsub.f32 %v3051, %v3372
    %v3374 = vand.u32 %v3373, 4294901760
    %3375 = vmatmul.mubr.f32.gmra.mrb[0].mxu0 %v3374
    %v3376 = vpop.f32.mrb[0].mxu0
    %v3377 = vadd.f32 %v3300, %v3376
    %v3378 = vpop.f32.mrb[0].mxu0
    %3379 = vdwg.mxu0
    %3380 = vmatprep.subr.mxu0 0.0
    %v3381 = vand.u32 %v579, 4294901760
    %v3382 = vsub.f32 %v579, %v3381
    %v3383 = vand.u32 %v3382, 4294901760
    %3384 = vmatpush1.msra.mxu0 %v3383
    %3385 = vmatprep.subr.mxu0 0.0
    %v3386 = vand.u32 %v580, 4294901760
    %v3387 = vsub.f32 %v580, %v3386
    %v3388 = vand.u32 %v3387, 4294901760
    %3389 = vmatpush1.msra.mxu0 %v3388
    %3390 = vmatprep.subr.mxu0 0.0
    %v3391 = vand.u32 %v581, 4294901760
    %v3392 = vsub.f32 %v581, %v3391
    %v3393 = vand.u32 %v3392, 4294901760
    %3394 = vmatpush1.msra.mxu0 %v3393
    %3395 = vmatprep.subr.mxu0 0.0
    %v3396 = vand.u32 %v582, 4294901760
    %v3397 = vsub.f32 %v582, %v3396
    %v3398 = vand.u32 %v3397, 4294901760
    %3399 = vmatpush1.msra.mxu0 %v3398
    %3400 = vmatprep.subr.mxu0 0.0
    %3401 = vmatpush1.msra.mxu0 0.0
    %3402 = vmatprep.subr.mxu0 0.0
    %3403 = vmatpush1.msra.mxu0 0.0
    %3404 = vmatprep.subr.mxu0 0.0
    %3405 = vmatpush1.msra.mxu0 0.0
    %3406 = vmatprep.subr.mxu0 0.0
    %3407 = vmatpush1.msra.mxu0 0.0
    %3408 = vmatprep.subr.mxu0 0.0
    %3409 = vmatpush1.msra.mxu0 0.0
    %3410 = vmatprep.subr.mxu0 0.0
    %3411 = vmatpush1.msra.mxu0 0.0
    %3412 = vmatprep.subr.mxu0 0.0
    %3413 = vmatpush1.msra.mxu0 0.0
    %3414 = vmatprep.subr.mxu0 0.0
    %3415 = vmatpush1.msra.mxu0 0.0
    %3416 = vmatprep.subr.mxu0 0.0
    %3417 = vmatpush1.msra.mxu0 0.0
    %3418 = vmatprep.subr.mxu0 0.0
    %3419 = vmatpush1.msra.mxu0 0.0
    %3420 = vmatprep.subr.mxu0 0.0
    %3421 = vmatpush1.msra.mxu0 0.0
    %3422 = vmatprep.subr.mxu0 0.0
    %3423 = vmatpush1.msra.mxu0 0.0
    %3424 = vmatprep.subr.mxu0 0.0
    %3425 = vmatpush1.msra.mxu0 0.0
    %3426 = vmatprep.subr.mxu0 0.0
    %3427 = vmatpush1.msra.mxu0 0.0
    %3428 = vmatprep.subr.mxu0 0.0
    %3429 = vmatpush1.msra.mxu0 0.0
    %3430 = vmatprep.subr.mxu0 0.0
    %3431 = vmatpush1.msra.mxu0 0.0
    %3432 = vmatprep.subr.mxu0 0.0
    %3433 = vmatpush1.msra.mxu0 0.0
    %3434 = vmatprep.subr.mxu0 0.0
    %3435 = vmatpush1.msra.mxu0 0.0
    %3436 = vmatprep.subr.mxu0 0.0
    %3437 = vmatpush1.msra.mxu0 0.0
    %3438 = vmatprep.subr.mxu0 0.0
    %3439 = vmatpush1.msra.mxu0 0.0
    %3440 = vmatprep.subr.mxu0 0.0
    %3441 = vmatpush1.msra.mxu0 0.0
    %3442 = vmatprep.subr.mxu0 0.0
    %3443 = vmatpush1.msra.mxu0 0.0
    %3444 = vmatprep.subr.mxu0 0.0
    %3445 = vmatpush1.msra.mxu0 0.0
    %3446 = vmatprep.subr.mxu0 0.0
    %3447 = vmatpush1.msra.mxu0 0.0
    %3448 = vmatprep.subr.mxu0 0.0
    %3449 = vmatpush1.msra.mxu0 0.0
    %3450 = vmatprep.subr.mxu0 0.0
    %3451 = vmatpush1.msra.mxu0 0.0
    %3452 = vmatprep.subr.mxu0 0.0
    %3453 = vmatpush1.msra.mxu0 0.0
    %3454 = vmatprep.subr.mxu0 0.0
    %3455 = vmatpush1.msra.mxu0 0.0
    %3456 = vmatprep.mubr.f32.mxu0 0.0
    %v3457 = vand.u32 %v3051, 4294901760
    %3458 = vmatmul.mubr.f32.gmra.mrb[0].mxu0 %v3457
    %v3459 = vpop.f32.mrb[0].mxu0
    %v3460 = vadd.f32 %v3377, %v3459
    %v3461 = vpop.f32.mrb[0].mxu0
    %3462 = vdwg.mxu0
    %3463 = vmatprep.subr.mxu0 0.0
    %v3464 = vand.u32 %v579, 4294901760
    %3465 = vmatpush1.msra.mxu0 %v3464
    %3466 = vmatprep.subr.mxu0 0.0
    %v3467 = vand.u32 %v580, 4294901760
    %3468 = vmatpush1.msra.mxu0 %v3467
    %3469 = vmatprep.subr.mxu0 0.0
    %v3470 = vand.u32 %v581, 4294901760
    %3471 = vmatpush1.msra.mxu0 %v3470
    %3472 = vmatprep.subr.mxu0 0.0
    %v3473 = vand.u32 %v582, 4294901760
    %3474 = vmatpush1.msra.mxu0 %v3473
    %3475 = vmatprep.subr.mxu0 0.0
    %3476 = vmatpush1.msra.mxu0 0.0
    %3477 = vmatprep.subr.mxu0 0.0
    %3478 = vmatpush1.msra.mxu0 0.0
    %3479 = vmatprep.subr.mxu0 0.0
    %3480 = vmatpush1.msra.mxu0 0.0
    %3481 = vmatprep.subr.mxu0 0.0
    %3482 = vmatpush1.msra.mxu0 0.0
    %3483 = vmatprep.subr.mxu0 0.0
    %3484 = vmatpush1.msra.mxu0 0.0
    %3485 = vmatprep.subr.mxu0 0.0
    %3486 = vmatpush1.msra.mxu0 0.0
    %3487 = vmatprep.subr.mxu0 0.0
    %3488 = vmatpush1.msra.mxu0 0.0
    %3489 = vmatprep.subr.mxu0 0.0
    %3490 = vmatpush1.msra.mxu0 0.0
    %3491 = vmatprep.subr.mxu0 0.0
    %3492 = vmatpush1.msra.mxu0 0.0
    %3493 = vmatprep.subr.mxu0 0.0
    %3494 = vmatpush1.msra.mxu0 0.0
    %3495 = vmatprep.subr.mxu0 0.0
    %3496 = vmatpush1.msra.mxu0 0.0
    %3497 = vmatprep.subr.mxu0 0.0
    %3498 = vmatpush1.msra.mxu0 0.0
    %3499 = vmatprep.subr.mxu0 0.0
    %3500 = vmatpush1.msra.mxu0 0.0
    %3501 = vmatprep.subr.mxu0 0.0
    %3502 = vmatpush1.msra.mxu0 0.0
    %3503 = vmatprep.subr.mxu0 0.0
    %3504 = vmatpush1.msra.mxu0 0.0
    %3505 = vmatprep.subr.mxu0 0.0
    %3506 = vmatpush1.msra.mxu0 0.0
    %3507 = vmatprep.subr.mxu0 0.0
    %3508 = vmatpush1.msra.mxu0 0.0
    %3509 = vmatprep.subr.mxu0 0.0
    %3510 = vmatpush1.msra.mxu0 0.0
    %3511 = vmatprep.subr.mxu0 0.0
    %3512 = vmatpush1.msra.mxu0 0.0
    %3513 = vmatprep.subr.mxu0 0.0
    %3514 = vmatpush1.msra.mxu0 0.0
    %3515 = vmatprep.subr.mxu0 0.0
    %3516 = vmatpush1.msra.mxu0 0.0
    %3517 = vmatprep.subr.mxu0 0.0
    %3518 = vmatpush1.msra.mxu0 0.0
    %3519 = vmatprep.subr.mxu0 0.0
    %3520 = vmatpush1.msra.mxu0 0.0
    %3521 = vmatprep.subr.mxu0 0.0
    %3522 = vmatpush1.msra.mxu0 0.0
    %3523 = vmatprep.subr.mxu0 0.0
    %3524 = vmatpush1.msra.mxu0 0.0
    %3525 = vmatprep.subr.mxu0 0.0
    %3526 = vmatpush1.msra.mxu0 0.0
    %3527 = vmatprep.subr.mxu0 0.0
    %3528 = vmatpush1.msra.mxu0 0.0
    %3529 = vmatprep.subr.mxu0 0.0
    %3530 = vmatpush1.msra.mxu0 0.0
    %3531 = vmatprep.mubr.f32.mxu0 0.0
    %v3532 = vand.u32 %v3051, 4294901760
    %3533 = vmatmul.mubr.f32.gmra.mrb[0].mxu0 %v3532
    %v3534 = vpop.f32.mrb[0].mxu0
    %v3535 = vadd.f32 %v3460, %v3534
    %v3536 = vpop.f32.mrb[0].mxu0
    %3537 = vdwg.mxu0
    %v3539 = vrot.slane %v3535, 3
    %v3541 = vadd.f32 %v576, %v3539
    %v3542 = vtanh.pop %v3541
    %v3544 = vrot.slane %v3542, 5
    %v3545 = vsel %vm583, %v3544, 0
    %3547 = vmatprep.subr.mxu0 0.0
    %v3548 = vand.u32 %v579, 4294901760
    %3549 = vmatpush1.msra.mxu0 %v3548
    %3550 = vmatprep.subr.mxu0 0.0
    %v3551 = vand.u32 %v580, 4294901760
    %3552 = vmatpush1.msra.mxu0 %v3551
    %3553 = vmatprep.subr.mxu0 0.0
    %v3554 = vand.u32 %v581, 4294901760
    %3555 = vmatpush1.msra.mxu0 %v3554
    %3556 = vmatprep.subr.mxu0 0.0
    %v3557 = vand.u32 %v582, 4294901760
    %3558 = vmatpush1.msra.mxu0 %v3557
    %3559 = vmatprep.subr.mxu0 0.0
    %3560 = vmatpush1.msra.mxu0 0.0
    %3561 = vmatprep.subr.mxu0 0.0
    %3562 = vmatpush1.msra.mxu0 0.0
    %3563 = vmatprep.subr.mxu0 0.0
    %3564 = vmatpush1.msra.mxu0 0.0
    %3565 = vmatprep.subr.mxu0 0.0
    %3566 = vmatpush1.msra.mxu0 0.0
    %3567 = vmatprep.subr.mxu0 0.0
    %3568 = vmatpush1.msra.mxu0 0.0
    %3569 = vmatprep.subr.mxu0 0.0
    %3570 = vmatpush1.msra.mxu0 0.0
    %3571 = vmatprep.subr.mxu0 0.0
    %3572 = vmatpush1.msra.mxu0 0.0
    %3573 = vmatprep.subr.mxu0 0.0
    %3574 = vmatpush1.msra.mxu0 0.0
    %3575 = vmatprep.subr.mxu0 0.0
    %3576 = vmatpush1.msra.mxu0 0.0
    %3577 = vmatprep.subr.mxu0 0.0
    %3578 = vmatpush1.msra.mxu0 0.0
    %3579 = vmatprep.subr.mxu0 0.0
    %3580 = vmatpush1.msra.mxu0 0.0
    %3581 = vmatprep.subr.mxu0 0.0
    %3582 = vmatpush1.msra.mxu0 0.0
    %3583 = vmatprep.subr.mxu0 0.0
    %3584 = vmatpush1.msra.mxu0 0.0
    %3585 = vmatprep.subr.mxu0 0.0
    %3586 = vmatpush1.msra.mxu0 0.0
    %3587 = vmatprep.subr.mxu0 0.0
    %3588 = vmatpush1.msra.mxu0 0.0
    %3589 = vmatprep.subr.mxu0 0.0
    %3590 = vmatpush1.msra.mxu0 0.0
    %3591 = vmatprep.subr.mxu0 0.0
    %3592 = vmatpush1.msra.mxu0 0.0
    %3593 = vmatprep.subr.mxu0 0.0
    %3594 = vmatpush1.msra.mxu0 0.0
    %3595 = vmatprep.subr.mxu0 0.0
    %3596 = vmatpush1.msra.mxu0 0.0
    %3597 = vmatprep.subr.mxu0 0.0
    %3598 = vmatpush1.msra.mxu0 0.0
    %3599 = vmatprep.subr.mxu0 0.0
    %3600 = vmatpush1.msra.mxu0 0.0
    %3601 = vmatprep.subr.mxu0 0.0
    %3602 = vmatpush1.msra.mxu0 0.0
    %3603 = vmatprep.subr.mxu0 0.0
    %3604 = vmatpush1.msra.mxu0 0.0
    %3605 = vmatprep.subr.mxu0 0.0
    %3606 = vmatpush1.msra.mxu0 0.0
    %3607 = vmatprep.subr.mxu0 0.0
    %3608 = vmatpush1.msra.mxu0 0.0
    %3609 = vmatprep.subr.mxu0 0.0
    %3610 = vmatpush1.msra.mxu0 0.0
    %3611 = vmatprep.subr.mxu0 0.0
    %3612 = vmatpush1.msra.mxu0 0.0
    %3613 = vmatprep.subr.mxu0 0.0
    %3614 = vmatpush1.msra.mxu0 0.0
    %3615 = vmatprep.mubr.f32.mxu0 0.0
    %v3616 = vand.u32 %v3545, 4294901760
    %v3617 = vsub.f32 %v3545, %v3616
    %v3618 = vand.u32 %v3617, 4294901760
    %v3619 = vsub.f32 %v3617, %v3618
    %v3620 = vand.u32 %v3619, 4294901760
    %3621 = vmatmul.mubr.f32.gmra.mrb[0].mxu0 %v3620
    %v3622 = vpop.f32.mrb[0].mxu0
    %v3623 = vadd.f32 0.0, %v3622
    %v3624 = vpop.f32.mrb[0].mxu0
    %3625 = vdwg.mxu0
    %3626 = vmatprep.subr.mxu0 0.0
    %v3627 = vand.u32 %v579, 4294901760
    %v3628 = vsub.f32 %v579, %v3627
    %v3629 = vand.u32 %v3628, 4294901760
    %v3630 = vsub.f32 %v3628, %v3629
    %v3631 = vand.u32 %v3630, 4294901760
    %3632 = vmatpush1.msra.mxu0 %v3631
    %3633 = vmatprep.subr.mxu0 0.0
    %v3634 = vand.u32 %v580, 4294901760
    %v3635 = vsub.f32 %v580, %v3634
    %v3636 = vand.u32 %v3635, 4294901760
    %v3637 = vsub.f32 %v3635, %v3636
    %v3638 = vand.u32 %v3637, 4294901760
    %3639 = vmatpush1.msra.mxu0 %v3638
    %3640 = vmatprep.subr.mxu0 0.0
    %v3641 = vand.u32 %v581, 4294901760
    %v3642 = vsub.f32 %v581, %v3641
    %v3643 = vand.u32 %v3642, 4294901760
    %v3644 = vsub.f32 %v3642, %v3643
    %v3645 = vand.u32 %v3644, 4294901760
    %3646 = vmatpush1.msra.mxu0 %v3645
    %3647 = vmatprep.subr.mxu0 0.0
    %v3648 = vand.u32 %v582, 4294901760
    %v3649 = vsub.f32 %v582, %v3648
    %v3650 = vand.u32 %v3649, 4294901760
    %v3651 = vsub.f32 %v3649, %v3650
    %v3652 = vand.u32 %v3651, 4294901760
    %3653 = vmatpush1.msra.mxu0 %v3652
    %3654 = vmatprep.subr.mxu0 0.0
    %3655 = vmatpush1.msra.mxu0 0.0
    %3656 = vmatprep.subr.mxu0 0.0
    %3657 = vmatpush1.msra.mxu0 0.0
    %3658 = vmatprep.subr.mxu0 0.0
    %3659 = vmatpush1.msra.mxu0 0.0
    %3660 = vmatprep.subr.mxu0 0.0
    %3661 = vmatpush1.msra.mxu0 0.0
    %3662 = vmatprep.subr.mxu0 0.0
    %3663 = vmatpush1.msra.mxu0 0.0
    %3664 = vmatprep.subr.mxu0 0.0
    %3665 = vmatpush1.msra.mxu0 0.0
    %3666 = vmatprep.subr.mxu0 0.0
    %3667 = vmatpush1.msra.mxu0 0.0
    %3668 = vmatprep.subr.mxu0 0.0
    %3669 = vmatpush1.msra.mxu0 0.0
    %3670 = vmatprep.subr.mxu0 0.0
    %3671 = vmatpush1.msra.mxu0 0.0
    %3672 = vmatprep.subr.mxu0 0.0
    %3673 = vmatpush1.msra.mxu0 0.0
    %3674 = vmatprep.subr.mxu0 0.0
    %3675 = vmatpush1.msra.mxu0 0.0
    %3676 = vmatprep.subr.mxu0 0.0
    %3677 = vmatpush1.msra.mxu0 0.0
    %3678 = vmatprep.subr.mxu0 0.0
    %3679 = vmatpush1.msra.mxu0 0.0
    %3680 = vmatprep.subr.mxu0 0.0
    %3681 = vmatpush1.msra.mxu0 0.0
    %3682 = vmatprep.subr.mxu0 0.0
    %3683 = vmatpush1.msra.mxu0 0.0
    %3684 = vmatprep.subr.mxu0 0.0
    %3685 = vmatpush1.msra.mxu0 0.0
    %3686 = vmatprep.subr.mxu0 0.0
    %3687 = vmatpush1.msra.mxu0 0.0
    %3688 = vmatprep.subr.mxu0 0.0
    %3689 = vmatpush1.msra.mxu0 0.0
    %3690 = vmatprep.subr.mxu0 0.0
    %3691 = vmatpush1.msra.mxu0 0.0
    %3692 = vmatprep.subr.mxu0 0.0
    %3693 = vmatpush1.msra.mxu0 0.0
    %3694 = vmatprep.subr.mxu0 0.0
    %3695 = vmatpush1.msra.mxu0 0.0
    %3696 = vmatprep.subr.mxu0 0.0
    %3697 = vmatpush1.msra.mxu0 0.0
    %3698 = vmatprep.subr.mxu0 0.0
    %3699 = vmatpush1.msra.mxu0 0.0
    %3700 = vmatprep.subr.mxu0 0.0
    %3701 = vmatpush1.msra.mxu0 0.0
    %3702 = vmatprep.subr.mxu0 0.0
    %3703 = vmatpush1.msra.mxu0 0.0
    %3704 = vmatprep.subr.mxu0 0.0
    %3705 = vmatpush1.msra.mxu0 0.0
    %3706 = vmatprep.subr.mxu0 0.0
    %3707 = vmatpush1.msra.mxu0 0.0
    %3708 = vmatprep.subr.mxu0 0.0
    %3709 = vmatpush1.msra.mxu0 0.0
    %3710 = vmatprep.mubr.f32.mxu0 0.0
    %v3711 = vand.u32 %v3545, 4294901760
    %3712 = vmatmul.mubr.f32.gmra.mrb[0].mxu0 %v3711
    %v3713 = vpop.f32.mrb[0].mxu0
    %v3714 = vadd.f32 %v3623, %v3713
    %v3715 = vpop.f32.mrb[0].mxu0
    %3716 = vdwg.mxu0
    %3717 = vmatprep.subr.mxu0 0.0
    %v3718 = vand.u32 %v579, 4294901760
    %v3719 = vsub.f32 %v579, %v3718
    %3720 = vmatpush1.msra.mxu0 %v3719
    %3721 = vmatprep.subr.mxu0 0.0
    %v3722 = vand.u32 %v580, 4294901760
    %v3723 = vsub.f32 %v580, %v3722
    %3724 = vmatpush1.msra.mxu0 %v3723
    %3725 = vmatprep.subr.mxu0 0.0
    %v3726 = vand.u32 %v581, 4294901760
    %v3727 = vsub.f32 %v581, %v3726
    %3728 = vmatpush1.msra.mxu0 %v3727
    %3729 = vmatprep.subr.mxu0 0.0
    %v3730 = vand.u32 %v582, 4294901760
    %v3731 = vsub.f32 %v582, %v3730
    %3732 = vmatpush1.msra.mxu0 %v3731
    %3733 = vmatprep.subr.mxu0 0.0
    %3734 = vmatpush1.msra.mxu0 0.0
    %3735 = vmatprep.subr.mxu0 0.0
    %3736 = vmatpush1.msra.mxu0 0.0
    %3737 = vmatprep.subr.mxu0 0.0
    %3738 = vmatpush1.msra.mxu0 0.0
    %3739 = vmatprep.subr.mxu0 0.0
    %3740 = vmatpush1.msra.mxu0 0.0
    %3741 = vmatprep.subr.mxu0 0.0
    %3742 = vmatpush1.msra.mxu0 0.0
    %3743 = vmatprep.subr.mxu0 0.0
    %3744 = vmatpush1.msra.mxu0 0.0
    %3745 = vmatprep.subr.mxu0 0.0
    %3746 = vmatpush1.msra.mxu0 0.0
    %3747 = vmatprep.subr.mxu0 0.0
    %3748 = vmatpush1.msra.mxu0 0.0
    %3749 = vmatprep.subr.mxu0 0.0
    %3750 = vmatpush1.msra.mxu0 0.0
    %3751 = vmatprep.subr.mxu0 0.0
    %3752 = vmatpush1.msra.mxu0 0.0
    %3753 = vmatprep.subr.mxu0 0.0
    %3754 = vmatpush1.msra.mxu0 0.0
    %3755 = vmatprep.subr.mxu0 0.0
    %3756 = vmatpush1.msra.mxu0 0.0
    %3757 = vmatprep.subr.mxu0 0.0
    %3758 = vmatpush1.msra.mxu0 0.0
    %3759 = vmatprep.subr.mxu0 0.0
    %3760 = vmatpush1.msra.mxu0 0.0
    %3761 = vmatprep.subr.mxu0 0.0
    %3762 = vmatpush1.msra.mxu0 0.0
    %3763 = vmatprep.subr.mxu0 0.0
    %3764 = vmatpush1.msra.mxu0 0.0
    %3765 = vmatprep.subr.mxu0 0.0
    %3766 = vmatpush1.msra.mxu0 0.0
    %3767 = vmatprep.subr.mxu0 0.0
    %3768 = vmatpush1.msra.mxu0 0.0
    %3769 = vmatprep.subr.mxu0 0.0
    %3770 = vmatpush1.msra.mxu0 0.0
    %3771 = vmatprep.subr.mxu0 0.0
    %3772 = vmatpush1.msra.mxu0 0.0
    %3773 = vmatprep.subr.mxu0 0.0
    %3774 = vmatpush1.msra.mxu0 0.0
    %3775 = vmatprep.subr.mxu0 0.0
    %3776 = vmatpush1.msra.mxu0 0.0
    %3777 = vmatprep.subr.mxu0 0.0
    %3778 = vmatpush1.msra.mxu0 0.0
    %3779 = vmatprep.subr.mxu0 0.0
    %3780 = vmatpush1.msra.mxu0 0.0
    %3781 = vmatprep.subr.mxu0 0.0
    %3782 = vmatpush1.msra.mxu0 0.0
    %3783 = vmatprep.subr.mxu0 0.0
    %3784 = vmatpush1.msra.mxu0 0.0
    %3785 = vmatprep.subr.mxu0 0.0
    %3786 = vmatpush1.msra.mxu0 0.0
    %3787 = vmatprep.subr.mxu0 0.0
    %3788 = vmatpush1.msra.mxu0 0.0
    %3789 = vmatprep.mubr.f32.mxu0 0.0
    %v3790 = vand.u32 %v3545, 4294901760
    %v3791 = vsub.f32 %v3545, %v3790
    %3792 = vmatmul.mubr.f32.gmra.mrb[0].mxu0 %v3791
    %v3793 = vpop.f32.mrb[0].mxu0
    %v3794 = vadd.f32 %v3714, %v3793
    %v3795 = vpop.f32.mrb[0].mxu0
    %3796 = vdwg.mxu0
    %3797 = vmatprep.subr.mxu0 0.0
    %v3798 = vand.u32 %v579, 4294901760
    %3799 = vmatpush1.msra.mxu0 %v3798
    %3800 = vmatprep.subr.mxu0 0.0
    %v3801 = vand.u32 %v580, 4294901760
    %3802 = vmatpush1.msra.mxu0 %v3801
    %3803 = vmatprep.subr.mxu0 0.0
    %v3804 = vand.u32 %v581, 4294901760
    %3805 = vmatpush1.msra.mxu0 %v3804
    %3806 = vmatprep.subr.mxu0 0.0
    %v3807 = vand.u32 %v582, 4294901760
    %3808 = vmatpush1.msra.mxu0 %v3807
    %3809 = vmatprep.subr.mxu0 0.0
    %3810 = vmatpush1.msra.mxu0 0.0
    %3811 = vmatprep.subr.mxu0 0.0
    %3812 = vmatpush1.msra.mxu0 0.0
    %3813 = vmatprep.subr.mxu0 0.0
    %3814 = vmatpush1.msra.mxu0 0.0
    %3815 = vmatprep.subr.mxu0 0.0
    %3816 = vmatpush1.msra.mxu0 0.0
    %3817 = vmatprep.subr.mxu0 0.0
    %3818 = vmatpush1.msra.mxu0 0.0
    %3819 = vmatprep.subr.mxu0 0.0
    %3820 = vmatpush1.msra.mxu0 0.0
    %3821 = vmatprep.subr.mxu0 0.0
    %3822 = vmatpush1.msra.mxu0 0.0
    %3823 = vmatprep.subr.mxu0 0.0
    %3824 = vmatpush1.msra.mxu0 0.0
    %3825 = vmatprep.subr.mxu0 0.0
    %3826 = vmatpush1.msra.mxu0 0.0
    %3827 = vmatprep.subr.mxu0 0.0
    %3828 = vmatpush1.msra.mxu0 0.0
    %3829 = vmatprep.subr.mxu0 0.0
    %3830 = vmatpush1.msra.mxu0 0.0
    %3831 = vmatprep.subr.mxu0 0.0
    %3832 = vmatpush1.msra.mxu0 0.0
    %3833 = vmatprep.subr.mxu0 0.0
    %3834 = vmatpush1.msra.mxu0 0.0
    %3835 = vmatprep.subr.mxu0 0.0
    %3836 = vmatpush1.msra.mxu0 0.0
    %3837 = vmatprep.subr.mxu0 0.0
    %3838 = vmatpush1.msra.mxu0 0.0
    %3839 = vmatprep.subr.mxu0 0.0
    %3840 = vmatpush1.msra.mxu0 0.0
    %3841 = vmatprep.subr.mxu0 0.0
    %3842 = vmatpush1.msra.mxu0 0.0
    %3843 = vmatprep.subr.mxu0 0.0
    %3844 = vmatpush1.msra.mxu0 0.0
    %3845 = vmatprep.subr.mxu0 0.0
    %3846 = vmatpush1.msra.mxu0 0.0
    %3847 = vmatprep.subr.mxu0 0.0
    %3848 = vmatpush1.msra.mxu0 0.0
    %3849 = vmatprep.subr.mxu0 0.0
    %3850 = vmatpush1.msra.mxu0 0.0
    %3851 = vmatprep.subr.mxu0 0.0
    %3852 = vmatpush1.msra.mxu0 0.0
    %3853 = vmatprep.subr.mxu0 0.0
    %3854 = vmatpush1.msra.mxu0 0.0
    %3855 = vmatprep.subr.mxu0 0.0
    %3856 = vmatpush1.msra.mxu0 0.0
    %3857 = vmatprep.subr.mxu0 0.0
    %3858 = vmatpush1.msra.mxu0 0.0
    %3859 = vmatprep.subr.mxu0 0.0
    %3860 = vmatpush1.msra.mxu0 0.0
    %3861 = vmatprep.subr.mxu0 0.0
    %3862 = vmatpush1.msra.mxu0 0.0
    %3863 = vmatprep.subr.mxu0 0.0
    %3864 = vmatpush1.msra.mxu0 0.0
    %3865 = vmatprep.mubr.f32.mxu0 0.0
    %v3866 = vand.u32 %v3545, 4294901760
    %v3867 = vsub.f32 %v3545, %v3866
    %v3868 = vand.u32 %v3867, 4294901760
    %3869 = vmatmul.mubr.f32.gmra.mrb[0].mxu0 %v3868
    %v3870 = vpop.f32.mrb[0].mxu0
    %v3871 = vadd.f32 %v3794, %v3870
    %v3872 = vpop.f32.mrb[0].mxu0
    %3873 = vdwg.mxu0
    %3874 = vmatprep.subr.mxu0 0.0
    %v3875 = vand.u32 %v579, 4294901760
    %v3876 = vsub.f32 %v579, %v3875
    %v3877 = vand.u32 %v3876, 4294901760
    %3878 = vmatpush1.msra.mxu0 %v3877
    %3879 = vmatprep.subr.mxu0 0.0
    %v3880 = vand.u32 %v580, 4294901760
    %v3881 = vsub.f32 %v580, %v3880
    %v3882 = vand.u32 %v3881, 4294901760
    %3883 = vmatpush1.msra.mxu0 %v3882
    %3884 = vmatprep.subr.mxu0 0.0
    %v3885 = vand.u32 %v581, 4294901760
    %v3886 = vsub.f32 %v581, %v3885
    %v3887 = vand.u32 %v3886, 4294901760
    %3888 = vmatpush1.msra.mxu0 %v3887
    %3889 = vmatprep.subr.mxu0 0.0
    %v3890 = vand.u32 %v582, 4294901760
    %v3891 = vsub.f32 %v582, %v3890
    %v3892 = vand.u32 %v3891, 4294901760
    %3893 = vmatpush1.msra.mxu0 %v3892
    %3894 = vmatprep.subr.mxu0 0.0
    %3895 = vmatpush1.msra.mxu0 0.0
    %3896 = vmatprep.subr.mxu0 0.0
    %3897 = vmatpush1.msra.mxu0 0.0
    %3898 = vmatprep.subr.mxu0 0.0
    %3899 = vmatpush1.msra.mxu0 0.0
    %3900 = vmatprep.subr.mxu0 0.0
    %3901 = vmatpush1.msra.mxu0 0.0
    %3902 = vmatprep.subr.mxu0 0.0
    %3903 = vmatpush1.msra.mxu0 0.0
    %3904 = vmatprep.subr.mxu0 0.0
    %3905 = vmatpush1.msra.mxu0 0.0
    %3906 = vmatprep.subr.mxu0 0.0
    %3907 = vmatpush1.msra.mxu0 0.0
    %3908 = vmatprep.subr.mxu0 0.0
    %3909 = vmatpush1.msra.mxu0 0.0
    %3910 = vmatprep.subr.mxu0 0.0
    %3911 = vmatpush1.msra.mxu0 0.0
    %3912 = vmatprep.subr.mxu0 0.0
    %3913 = vmatpush1.msra.mxu0 0.0
    %3914 = vmatprep.subr.mxu0 0.0
    %3915 = vmatpush1.msra.mxu0 0.0
    %3916 = vmatprep.subr.mxu0 0.0
    %3917 = vmatpush1.msra.mxu0 0.0
    %3918 = vmatprep.subr.mxu0 0.0
    %3919 = vmatpush1.msra.mxu0 0.0
    %3920 = vmatprep.subr.mxu0 0.0
    %3921 = vmatpush1.msra.mxu0 0.0
    %3922 = vmatprep.subr.mxu0 0.0
    %3923 = vmatpush1.msra.mxu0 0.0
    %3924 = vmatprep.subr.mxu0 0.0
    %3925 = vmatpush1.msra.mxu0 0.0
    %3926 = vmatprep.subr.mxu0 0.0
    %3927 = vmatpush1.msra.mxu0 0.0
    %3928 = vmatprep.subr.mxu0 0.0
    %3929 = vmatpush1.msra.mxu0 0.0
    %3930 = vmatprep.subr.mxu0 0.0
    %3931 = vmatpush1.msra.mxu0 0.0
    %3932 = vmatprep.subr.mxu0 0.0
    %3933 = vmatpush1.msra.mxu0 0.0
    %3934 = vmatprep.subr.mxu0 0.0
    %3935 = vmatpush1.msra.mxu0 0.0
    %3936 = vmatprep.subr.mxu0 0.0
    %3937 = vmatpush1.msra.mxu0 0.0
    %3938 = vmatprep.subr.mxu0 0.0
    %3939 = vmatpush1.msra.mxu0 0.0
    %3940 = vmatprep.subr.mxu0 0.0
    %3941 = vmatpush1.msra.mxu0 0.0
    %3942 = vmatprep.subr.mxu0 0.0
    %3943 = vmatpush1.msra.mxu0 0.0
    %3944 = vmatprep.subr.mxu0 0.0
    %3945 = vmatpush1.msra.mxu0 0.0
    %3946 = vmatprep.subr.mxu0 0.0
    %3947 = vmatpush1.msra.mxu0 0.0
    %3948 = vmatprep.subr.mxu0 0.0
    %3949 = vmatpush1.msra.mxu0 0.0
    %3950 = vmatprep.mubr.f32.mxu0 0.0
    %v3951 = vand.u32 %v3545, 4294901760
    %3952 = vmatmul.mubr.f32.gmra.mrb[0].mxu0 %v3951
    %v3953 = vpop.f32.mrb[0].mxu0
    %v3954 = vadd.f32 %v3871, %v3953
    %v3955 = vpop.f32.mrb[0].mxu0
    %3956 = vdwg.mxu0
    %3957 = vmatprep.subr.mxu0 0.0
    %v3958 = vand.u32 %v579, 4294901760
    %3959 = vmatpush1.msra.mxu0 %v3958
    %3960 = vmatprep.subr.mxu0 0.0
    %v3961 = vand.u32 %v580, 4294901760
    %3962 = vmatpush1.msra.mxu0 %v3961
    %3963 = vmatprep.subr.mxu0 0.0
    %v3964 = vand.u32 %v581, 4294901760
    %3965 = vmatpush1.msra.mxu0 %v3964
    %3966 = vmatprep.subr.mxu0 0.0
    %v3967 = vand.u32 %v582, 4294901760
    %3968 = vmatpush1.msra.mxu0 %v3967
    %3969 = vmatprep.subr.mxu0 0.0
    %3970 = vmatpush1.msra.mxu0 0.0
    %3971 = vmatprep.subr.mxu0 0.0
    %3972 = vmatpush1.msra.mxu0 0.0
    %3973 = vmatprep.subr.mxu0 0.0
    %3974 = vmatpush1.msra.mxu0 0.0
    %3975 = vmatprep.subr.mxu0 0.0
    %3976 = vmatpush1.msra.mxu0 0.0
    %3977 = vmatprep.subr.mxu0 0.0
    %3978 = vmatpush1.msra.mxu0 0.0
    %3979 = vmatprep.subr.mxu0 0.0
    %3980 = vmatpush1.msra.mxu0 0.0
    %3981 = vmatprep.subr.mxu0 0.0
    %3982 = vmatpush1.msra.mxu0 0.0
    %3983 = vmatprep.subr.mxu0 0.0
    %3984 = vmatpush1.msra.mxu0 0.0
    %3985 = vmatprep.subr.mxu0 0.0
    %3986 = vmatpush1.msra.mxu0 0.0
    %3987 = vmatprep.subr.mxu0 0.0
    %3988 = vmatpush1.msra.mxu0 0.0
    %3989 = vmatprep.subr.mxu0 0.0
    %3990 = vmatpush1.msra.mxu0 0.0
    %3991 = vmatprep.subr.mxu0 0.0
    %3992 = vmatpush1.msra.mxu0 0.0
    %3993 = vmatprep.subr.mxu0 0.0
    %3994 = vmatpush1.msra.mxu0 0.0
    %3995 = vmatprep.subr.mxu0 0.0
    %3996 = vmatpush1.msra.mxu0 0.0
    %3997 = vmatprep.subr.mxu0 0.0
    %3998 = vmatpush1.msra.mxu0 0.0
    %3999 = vmatprep.subr.mxu0 0.0
    %4000 = vmatpush1.msra.mxu0 0.0
    %4001 = vmatprep.subr.mxu0 0.0
    %4002 = vmatpush1.msra.mxu0 0.0
    %4003 = vmatprep.subr.mxu0 0.0
    %4004 = vmatpush1.msra.mxu0 0.0
    %4005 = vmatprep.subr.mxu0 0.0
    %4006 = vmatpush1.msra.mxu0 0.0
    %4007 = vmatprep.subr.mxu0 0.0
    %4008 = vmatpush1.msra.mxu0 0.0
    %4009 = vmatprep.subr.mxu0 0.0
    %4010 = vmatpush1.msra.mxu0 0.0
    %4011 = vmatprep.subr.mxu0 0.0
    %4012 = vmatpush1.msra.mxu0 0.0
    %4013 = vmatprep.subr.mxu0 0.0
    %4014 = vmatpush1.msra.mxu0 0.0
    %4015 = vmatprep.subr.mxu0 0.0
    %4016 = vmatpush1.msra.mxu0 0.0
    %4017 = vmatprep.subr.mxu0 0.0
    %4018 = vmatpush1.msra.mxu0 0.0
    %4019 = vmatprep.subr.mxu0 0.0
    %4020 = vmatpush1.msra.mxu0 0.0
    %4021 = vmatprep.subr.mxu0 0.0
    %4022 = vmatpush1.msra.mxu0 0.0
    %4023 = vmatprep.subr.mxu0 0.0
    %4024 = vmatpush1.msra.mxu0 0.0
    %4025 = vmatprep.mubr.f32.mxu0 0.0
    %v4026 = vand.u32 %v3545, 4294901760
    %4027 = vmatmul.mubr.f32.gmra.mrb[0].mxu0 %v4026
    %v4028 = vpop.f32.mrb[0].mxu0
    %v4029 = vadd.f32 %v3954, %v4028
    %v4030 = vpop.f32.mrb[0].mxu0
    %4031 = vdwg.mxu0
    %v4033 = vrot.slane %v4029, 2
    %v4035 = vadd.f32 %v576, %v4033
    %v4036 = vtanh.pop %v4035
    %v4038 = vrot.slane %v4036, 6
    %v4039 = vsel %vm583, %v4038, 0
    %4041 = vmatprep.subr.mxu0 0.0
    %v4042 = vand.u32 %v579, 4294901760
    %4043 = vmatpush1.msra.mxu0 %v4042
    %4044 = vmatprep.subr.mxu0 0.0
    %v4045 = vand.u32 %v580, 4294901760
    %4046 = vmatpush1.msra.mxu0 %v4045
    %4047 = vmatprep.subr.mxu0 0.0
    %v4048 = vand.u32 %v581, 4294901760
    %4049 = vmatpush1.msra.mxu0 %v4048
    %4050 = vmatprep.subr.mxu0 0.0
    %v4051 = vand.u32 %v582, 4294901760
    %4052 = vmatpush1.msra.mxu0 %v4051
    %4053 = vmatprep.subr.mxu0 0.0
    %4054 = vmatpush1.msra.mxu0 0.0
    %4055 = vmatprep.subr.mxu0 0.0
    %4056 = vmatpush1.msra.mxu0 0.0
    %4057 = vmatprep.subr.mxu0 0.0
    %4058 = vmatpush1.msra.mxu0 0.0
    %4059 = vmatprep.subr.mxu0 0.0
    %4060 = vmatpush1.msra.mxu0 0.0
    %4061 = vmatprep.subr.mxu0 0.0
    %4062 = vmatpush1.msra.mxu0 0.0
    %4063 = vmatprep.subr.mxu0 0.0
    %4064 = vmatpush1.msra.mxu0 0.0
    %4065 = vmatprep.subr.mxu0 0.0
    %4066 = vmatpush1.msra.mxu0 0.0
    %4067 = vmatprep.subr.mxu0 0.0
    %4068 = vmatpush1.msra.mxu0 0.0
    %4069 = vmatprep.subr.mxu0 0.0
    %4070 = vmatpush1.msra.mxu0 0.0
    %4071 = vmatprep.subr.mxu0 0.0
    %4072 = vmatpush1.msra.mxu0 0.0
    %4073 = vmatprep.subr.mxu0 0.0
    %4074 = vmatpush1.msra.mxu0 0.0
    %4075 = vmatprep.subr.mxu0 0.0
    %4076 = vmatpush1.msra.mxu0 0.0
    %4077 = vmatprep.subr.mxu0 0.0
    %4078 = vmatpush1.msra.mxu0 0.0
    %4079 = vmatprep.subr.mxu0 0.0
    %4080 = vmatpush1.msra.mxu0 0.0
    %4081 = vmatprep.subr.mxu0 0.0
    %4082 = vmatpush1.msra.mxu0 0.0
    %4083 = vmatprep.subr.mxu0 0.0
    %4084 = vmatpush1.msra.mxu0 0.0
    %4085 = vmatprep.subr.mxu0 0.0
    %4086 = vmatpush1.msra.mxu0 0.0
    %4087 = vmatprep.subr.mxu0 0.0
    %4088 = vmatpush1.msra.mxu0 0.0
    %4089 = vmatprep.subr.mxu0 0.0
    %4090 = vmatpush1.msra.mxu0 0.0
    %4091 = vmatprep.subr.mxu0 0.0
    %4092 = vmatpush1.msra.mxu0 0.0
    %4093 = vmatprep.subr.mxu0 0.0
    %4094 = vmatpush1.msra.mxu0 0.0
    %4095 = vmatprep.subr.mxu0 0.0
    %4096 = vmatpush1.msra.mxu0 0.0
    %4097 = vmatprep.subr.mxu0 0.0
    %4098 = vmatpush1.msra.mxu0 0.0
    %4099 = vmatprep.subr.mxu0 0.0
    %4100 = vmatpush1.msra.mxu0 0.0
    %4101 = vmatprep.subr.mxu0 0.0
    %4102 = vmatpush1.msra.mxu0 0.0
    %4103 = vmatprep.subr.mxu0 0.0
    %4104 = vmatpush1.msra.mxu0 0.0
    %4105 = vmatprep.subr.mxu0 0.0
    %4106 = vmatpush1.msra.mxu0 0.0
    %4107 = vmatprep.subr.mxu0 0.0
    %4108 = vmatpush1.msra.mxu0 0.0
    %4109 = vmatprep.mubr.f32.mxu0 0.0
    %v4110 = vand.u32 %v4039, 4294901760
    %v4111 = vsub.f32 %v4039, %v4110
    %v4112 = vand.u32 %v4111, 4294901760
    %v4113 = vsub.f32 %v4111, %v4112
    %v4114 = vand.u32 %v4113, 4294901760
    %4115 = vmatmul.mubr.f32.gmra.mrb[0].mxu0 %v4114
    %v4116 = vpop.f32.mrb[0].mxu0
    %v4117 = vadd.f32 0.0, %v4116
    %v4118 = vpop.f32.mrb[0].mxu0
    %4119 = vdwg.mxu0
    %4120 = vmatprep.subr.mxu0 0.0
    %v4121 = vand.u32 %v579, 4294901760
    %v4122 = vsub.f32 %v579, %v4121
    %v4123 = vand.u32 %v4122, 4294901760
    %v4124 = vsub.f32 %v4122, %v4123
    %v4125 = vand.u32 %v4124, 4294901760
    %4126 = vmatpush1.msra.mxu0 %v4125
    %4127 = vmatprep.subr.mxu0 0.0
    %v4128 = vand.u32 %v580, 4294901760
    %v4129 = vsub.f32 %v580, %v4128
    %v4130 = vand.u32 %v4129, 4294901760
    %v4131 = vsub.f32 %v4129, %v4130
    %v4132 = vand.u32 %v4131, 4294901760
    %4133 = vmatpush1.msra.mxu0 %v4132
    %4134 = vmatprep.subr.mxu0 0.0
    %v4135 = vand.u32 %v581, 4294901760
    %v4136 = vsub.f32 %v581, %v4135
    %v4137 = vand.u32 %v4136, 4294901760
    %v4138 = vsub.f32 %v4136, %v4137
    %v4139 = vand.u32 %v4138, 4294901760
    %4140 = vmatpush1.msra.mxu0 %v4139
    %4141 = vmatprep.subr.mxu0 0.0
    %v4142 = vand.u32 %v582, 4294901760
    %v4143 = vsub.f32 %v582, %v4142
    %v4144 = vand.u32 %v4143, 4294901760
    %v4145 = vsub.f32 %v4143, %v4144
    %v4146 = vand.u32 %v4145, 4294901760
    %4147 = vmatpush1.msra.mxu0 %v4146
    %4148 = vmatprep.subr.mxu0 0.0
    %4149 = vmatpush1.msra.mxu0 0.0
    %4150 = vmatprep.subr.mxu0 0.0
    %4151 = vmatpush1.msra.mxu0 0.0
    %4152 = vmatprep.subr.mxu0 0.0
    %4153 = vmatpush1.msra.mxu0 0.0
    %4154 = vmatprep.subr.mxu0 0.0
    %4155 = vmatpush1.msra.mxu0 0.0
    %4156 = vmatprep.subr.mxu0 0.0
    %4157 = vmatpush1.msra.mxu0 0.0
    %4158 = vmatprep.subr.mxu0 0.0
    %4159 = vmatpush1.msra.mxu0 0.0
    %4160 = vmatprep.subr.mxu0 0.0
    %4161 = vmatpush1.msra.mxu0 0.0
    %4162 = vmatprep.subr.mxu0 0.0
    %4163 = vmatpush1.msra.mxu0 0.0
    %4164 = vmatprep.subr.mxu0 0.0
    %4165 = vmatpush1.msra.mxu0 0.0
    %4166 = vmatprep.subr.mxu0 0.0
    %4167 = vmatpush1.msra.mxu0 0.0
    %4168 = vmatprep.subr.mxu0 0.0
    %4169 = vmatpush1.msra.mxu0 0.0
    %4170 = vmatprep.subr.mxu0 0.0
    %4171 = vmatpush1.msra.mxu0 0.0
    %4172 = vmatprep.subr.mxu0 0.0
    %4173 = vmatpush1.msra.mxu0 0.0
    %4174 = vmatprep.subr.mxu0 0.0
    %4175 = vmatpush1.msra.mxu0 0.0
    %4176 = vmatprep.subr.mxu0 0.0
    %4177 = vmatpush1.msra.mxu0 0.0
    %4178 = vmatprep.subr.mxu0 0.0
    %4179 = vmatpush1.msra.mxu0 0.0
    %4180 = vmatprep.subr.mxu0 0.0
    %4181 = vmatpush1.msra.mxu0 0.0
    %4182 = vmatprep.subr.mxu0 0.0
    %4183 = vmatpush1.msra.mxu0 0.0
    %4184 = vmatprep.subr.mxu0 0.0
    %4185 = vmatpush1.msra.mxu0 0.0
    %4186 = vmatprep.subr.mxu0 0.0
    %4187 = vmatpush1.msra.mxu0 0.0
    %4188 = vmatprep.subr.mxu0 0.0
    %4189 = vmatpush1.msra.mxu0 0.0
    %4190 = vmatprep.subr.mxu0 0.0
    %4191 = vmatpush1.msra.mxu0 0.0
    %4192 = vmatprep.subr.mxu0 0.0
    %4193 = vmatpush1.msra.mxu0 0.0
    %4194 = vmatprep.subr.mxu0 0.0
    %4195 = vmatpush1.msra.mxu0 0.0
    %4196 = vmatprep.subr.mxu0 0.0
    %4197 = vmatpush1.msra.mxu0 0.0
    %4198 = vmatprep.subr.mxu0 0.0
    %4199 = vmatpush1.msra.mxu0 0.0
    %4200 = vmatprep.subr.mxu0 0.0
    %4201 = vmatpush1.msra.mxu0 0.0
    %4202 = vmatprep.subr.mxu0 0.0
    %4203 = vmatpush1.msra.mxu0 0.0
    %4204 = vmatprep.mubr.f32.mxu0 0.0
    %v4205 = vand.u32 %v4039, 4294901760
    %4206 = vmatmul.mubr.f32.gmra.mrb[0].mxu0 %v4205
    %v4207 = vpop.f32.mrb[0].mxu0
    %v4208 = vadd.f32 %v4117, %v4207
    %v4209 = vpop.f32.mrb[0].mxu0
    %4210 = vdwg.mxu0
    %4211 = vmatprep.subr.mxu0 0.0
    %v4212 = vand.u32 %v579, 4294901760
    %v4213 = vsub.f32 %v579, %v4212
    %4214 = vmatpush1.msra.mxu0 %v4213
    %4215 = vmatprep.subr.mxu0 0.0
    %v4216 = vand.u32 %v580, 4294901760
    %v4217 = vsub.f32 %v580, %v4216
    %4218 = vmatpush1.msra.mxu0 %v4217
    %4219 = vmatprep.subr.mxu0 0.0
    %v4220 = vand.u32 %v581, 4294901760
    %v4221 = vsub.f32 %v581, %v4220
    %4222 = vmatpush1.msra.mxu0 %v4221
    %4223 = vmatprep.subr.mxu0 0.0
    %v4224 = vand.u32 %v582, 4294901760
    %v4225 = vsub.f32 %v582, %v4224
    %4226 = vmatpush1.msra.mxu0 %v4225
    %4227 = vmatprep.subr.mxu0 0.0
    %4228 = vmatpush1.msra.mxu0 0.0
    %4229 = vmatprep.subr.mxu0 0.0
    %4230 = vmatpush1.msra.mxu0 0.0
    %4231 = vmatprep.subr.mxu0 0.0
    %4232 = vmatpush1.msra.mxu0 0.0
    %4233 = vmatprep.subr.mxu0 0.0
    %4234 = vmatpush1.msra.mxu0 0.0
    %4235 = vmatprep.subr.mxu0 0.0
    %4236 = vmatpush1.msra.mxu0 0.0
    %4237 = vmatprep.subr.mxu0 0.0
    %4238 = vmatpush1.msra.mxu0 0.0
    %4239 = vmatprep.subr.mxu0 0.0
    %4240 = vmatpush1.msra.mxu0 0.0
    %4241 = vmatprep.subr.mxu0 0.0
    %4242 = vmatpush1.msra.mxu0 0.0
    %4243 = vmatprep.subr.mxu0 0.0
    %4244 = vmatpush1.msra.mxu0 0.0
    %4245 = vmatprep.subr.mxu0 0.0
    %4246 = vmatpush1.msra.mxu0 0.0
    %4247 = vmatprep.subr.mxu0 0.0
    %4248 = vmatpush1.msra.mxu0 0.0
    %4249 = vmatprep.subr.mxu0 0.0
    %4250 = vmatpush1.msra.mxu0 0.0
    %4251 = vmatprep.subr.mxu0 0.0
    %4252 = vmatpush1.msra.mxu0 0.0
    %4253 = vmatprep.subr.mxu0 0.0
    %4254 = vmatpush1.msra.mxu0 0.0
    %4255 = vmatprep.subr.mxu0 0.0
    %4256 = vmatpush1.msra.mxu0 0.0
    %4257 = vmatprep.subr.mxu0 0.0
    %4258 = vmatpush1.msra.mxu0 0.0
    %4259 = vmatprep.subr.mxu0 0.0
    %4260 = vmatpush1.msra.mxu0 0.0
    %4261 = vmatprep.subr.mxu0 0.0
    %4262 = vmatpush1.msra.mxu0 0.0
    %4263 = vmatprep.subr.mxu0 0.0
    %4264 = vmatpush1.msra.mxu0 0.0
    %4265 = vmatprep.subr.mxu0 0.0
    %4266 = vmatpush1.msra.mxu0 0.0
    %4267 = vmatprep.subr.mxu0 0.0
    %4268 = vmatpush1.msra.mxu0 0.0
    %4269 = vmatprep.subr.mxu0 0.0
    %4270 = vmatpush1.msra.mxu0 0.0
    %4271 = vmatprep.subr.mxu0 0.0
    %4272 = vmatpush1.msra.mxu0 0.0
    %4273 = vmatprep.subr.mxu0 0.0
    %4274 = vmatpush1.msra.mxu0 0.0
    %4275 = vmatprep.subr.mxu0 0.0
    %4276 = vmatpush1.msra.mxu0 0.0
    %4277 = vmatprep.subr.mxu0 0.0
    %4278 = vmatpush1.msra.mxu0 0.0
    %4279 = vmatprep.subr.mxu0 0.0
    %4280 = vmatpush1.msra.mxu0 0.0
    %4281 = vmatprep.subr.mxu0 0.0
    %4282 = vmatpush1.msra.mxu0 0.0
    %4283 = vmatprep.mubr.f32.mxu0 0.0
    %v4284 = vand.u32 %v4039, 4294901760
    %v4285 = vsub.f32 %v4039, %v4284
    %4286 = vmatmul.mubr.f32.gmra.mrb[0].mxu0 %v4285
    %v4287 = vpop.f32.mrb[0].mxu0
    %v4288 = vadd.f32 %v4208, %v4287
    %v4289 = vpop.f32.mrb[0].mxu0
    %4290 = vdwg.mxu0
    %4291 = vmatprep.subr.mxu0 0.0
    %v4292 = vand.u32 %v579, 4294901760
    %4293 = vmatpush1.msra.mxu0 %v4292
    %4294 = vmatprep.subr.mxu0 0.0
    %v4295 = vand.u32 %v580, 4294901760
    %4296 = vmatpush1.msra.mxu0 %v4295
    %4297 = vmatprep.subr.mxu0 0.0
    %v4298 = vand.u32 %v581, 4294901760
    %4299 = vmatpush1.msra.mxu0 %v4298
    %4300 = vmatprep.subr.mxu0 0.0
    %v4301 = vand.u32 %v582, 4294901760
    %4302 = vmatpush1.msra.mxu0 %v4301
    %4303 = vmatprep.subr.mxu0 0.0
    %4304 = vmatpush1.msra.mxu0 0.0
    %4305 = vmatprep.subr.mxu0 0.0
    %4306 = vmatpush1.msra.mxu0 0.0
    %4307 = vmatprep.subr.mxu0 0.0
    %4308 = vmatpush1.msra.mxu0 0.0
    %4309 = vmatprep.subr.mxu0 0.0
    %4310 = vmatpush1.msra.mxu0 0.0
    %4311 = vmatprep.subr.mxu0 0.0
    %4312 = vmatpush1.msra.mxu0 0.0
    %4313 = vmatprep.subr.mxu0 0.0
    %4314 = vmatpush1.msra.mxu0 0.0
    %4315 = vmatprep.subr.mxu0 0.0
    %4316 = vmatpush1.msra.mxu0 0.0
    %4317 = vmatprep.subr.mxu0 0.0
    %4318 = vmatpush1.msra.mxu0 0.0
    %4319 = vmatprep.subr.mxu0 0.0
    %4320 = vmatpush1.msra.mxu0 0.0
    %4321 = vmatprep.subr.mxu0 0.0
    %4322 = vmatpush1.msra.mxu0 0.0
    %4323 = vmatprep.subr.mxu0 0.0
    %4324 = vmatpush1.msra.mxu0 0.0
    %4325 = vmatprep.subr.mxu0 0.0
    %4326 = vmatpush1.msra.mxu0 0.0
    %4327 = vmatprep.subr.mxu0 0.0
    %4328 = vmatpush1.msra.mxu0 0.0
    %4329 = vmatprep.subr.mxu0 0.0
    %4330 = vmatpush1.msra.mxu0 0.0
    %4331 = vmatprep.subr.mxu0 0.0
    %4332 = vmatpush1.msra.mxu0 0.0
    %4333 = vmatprep.subr.mxu0 0.0
    %4334 = vmatpush1.msra.mxu0 0.0
    %4335 = vmatprep.subr.mxu0 0.0
    %4336 = vmatpush1.msra.mxu0 0.0
    %4337 = vmatprep.subr.mxu0 0.0
    %4338 = vmatpush1.msra.mxu0 0.0
    %4339 = vmatprep.subr.mxu0 0.0
    %4340 = vmatpush1.msra.mxu0 0.0
    %4341 = vmatprep.subr.mxu0 0.0
    %4342 = vmatpush1.msra.mxu0 0.0
    %4343 = vmatprep.subr.mxu0 0.0
    %4344 = vmatpush1.msra.mxu0 0.0
    %4345 = vmatprep.subr.mxu0 0.0
    %4346 = vmatpush1.msra.mxu0 0.0
    %4347 = vmatprep.subr.mxu0 0.0
    %4348 = vmatpush1.msra.mxu0 0.0
    %4349 = vmatprep.subr.mxu0 0.0
    %4350 = vmatpush1.msra.mxu0 0.0
    %4351 = vmatprep.subr.mxu0 0.0
    %4352 = vmatpush1.msra.mxu0 0.0
    %4353 = vmatprep.subr.mxu0 0.0
    %4354 = vmatpush1.msra.mxu0 0.0
    %4355 = vmatprep.subr.mxu0 0.0
    %4356 = vmatpush1.msra.mxu0 0.0
    %4357 = vmatprep.subr.mxu0 0.0
    %4358 = vmatpush1.msra.mxu0 0.0
    %4359 = vmatprep.mubr.f32.mxu0 0.0
    %v4360 = vand.u32 %v4039, 4294901760
    %v4361 = vsub.f32 %v4039, %v4360
    %v4362 = vand.u32 %v4361, 4294901760
    %4363 = vmatmul.mubr.f32.gmra.mrb[0].mxu0 %v4362
    %v4364 = vpop.f32.mrb[0].mxu0
    %v4365 = vadd.f32 %v4288, %v4364
    %v4366 = vpop.f32.mrb[0].mxu0
    %4367 = vdwg.mxu0
    %4368 = vmatprep.subr.mxu0 0.0
    %v4369 = vand.u32 %v579, 4294901760
    %v4370 = vsub.f32 %v579, %v4369
    %v4371 = vand.u32 %v4370, 4294901760
    %4372 = vmatpush1.msra.mxu0 %v4371
    %4373 = vmatprep.subr.mxu0 0.0
    %v4374 = vand.u32 %v580, 4294901760
    %v4375 = vsub.f32 %v580, %v4374
    %v4376 = vand.u32 %v4375, 4294901760
    %4377 = vmatpush1.msra.mxu0 %v4376
    %4378 = vmatprep.subr.mxu0 0.0
    %v4379 = vand.u32 %v581, 4294901760
    %v4380 = vsub.f32 %v581, %v4379
    %v4381 = vand.u32 %v4380, 4294901760
    %4382 = vmatpush1.msra.mxu0 %v4381
    %4383 = vmatprep.subr.mxu0 0.0
    %v4384 = vand.u32 %v582, 4294901760
    %v4385 = vsub.f32 %v582, %v4384
    %v4386 = vand.u32 %v4385, 4294901760
    %4387 = vmatpush1.msra.mxu0 %v4386
    %4388 = vmatprep.subr.mxu0 0.0
    %4389 = vmatpush1.msra.mxu0 0.0
    %4390 = vmatprep.subr.mxu0 0.0
    %4391 = vmatpush1.msra.mxu0 0.0
    %4392 = vmatprep.subr.mxu0 0.0
    %4393 = vmatpush1.msra.mxu0 0.0
    %4394 = vmatprep.subr.mxu0 0.0
    %4395 = vmatpush1.msra.mxu0 0.0
    %4396 = vmatprep.subr.mxu0 0.0
    %4397 = vmatpush1.msra.mxu0 0.0
    %4398 = vmatprep.subr.mxu0 0.0
    %4399 = vmatpush1.msra.mxu0 0.0
    %4400 = vmatprep.subr.mxu0 0.0
    %4401 = vmatpush1.msra.mxu0 0.0
    %4402 = vmatprep.subr.mxu0 0.0
    %4403 = vmatpush1.msra.mxu0 0.0
    %4404 = vmatprep.subr.mxu0 0.0
    %4405 = vmatpush1.msra.mxu0 0.0
    %4406 = vmatprep.subr.mxu0 0.0
    %4407 = vmatpush1.msra.mxu0 0.0
    %4408 = vmatprep.subr.mxu0 0.0
    %4409 = vmatpush1.msra.mxu0 0.0
    %4410 = vmatprep.subr.mxu0 0.0
    %4411 = vmatpush1.msra.mxu0 0.0
    %4412 = vmatprep.subr.mxu0 0.0
    %4413 = vmatpush1.msra.mxu0 0.0
    %4414 = vmatprep.subr.mxu0 0.0
    %4415 = vmatpush1.msra.mxu0 0.0
    %4416 = vmatprep.subr.mxu0 0.0
    %4417 = vmatpush1.msra.mxu0 0.0
    %4418 = vmatprep.subr.mxu0 0.0
    %4419 = vmatpush1.msra.mxu0 0.0
    %4420 = vmatprep.subr.mxu0 0.0
    %4421 = vmatpush1.msra.mxu0 0.0
    %4422 = vmatprep.subr.mxu0 0.0
    %4423 = vmatpush1.msra.mxu0 0.0
    %4424 = vmatprep.subr.mxu0 0.0
    %4425 = vmatpush1.msra.mxu0 0.0
    %4426 = vmatprep.subr.mxu0 0.0
    %4427 = vmatpush1.msra.mxu0 0.0
    %4428 = vmatprep.subr.mxu0 0.0
    %4429 = vmatpush1.msra.mxu0 0.0
    %4430 = vmatprep.subr.mxu0 0.0
    %4431 = vmatpush1.msra.mxu0 0.0
    %4432 = vmatprep.subr.mxu0 0.0
    %4433 = vmatpush1.msra.mxu0 0.0
    %4434 = vmatprep.subr.mxu0 0.0
    %4435 = vmatpush1.msra.mxu0 0.0
    %4436 = vmatprep.subr.mxu0 0.0
    %4437 = vmatpush1.msra.mxu0 0.0
    %4438 = vmatprep.subr.mxu0 0.0
    %4439 = vmatpush1.msra.mxu0 0.0
    %4440 = vmatprep.subr.mxu0 0.0
    %4441 = vmatpush1.msra.mxu0 0.0
    %4442 = vmatprep.subr.mxu0 0.0
    %4443 = vmatpush1.msra.mxu0 0.0
    %4444 = vmatprep.mubr.f32.mxu0 0.0
    %v4445 = vand.u32 %v4039, 4294901760
    %4446 = vmatmul.mubr.f32.gmra.mrb[0].mxu0 %v4445
    %v4447 = vpop.f32.mrb[0].mxu0
    %v4448 = vadd.f32 %v4365, %v4447
    %v4449 = vpop.f32.mrb[0].mxu0
    %4450 = vdwg.mxu0
    %4451 = vmatprep.subr.mxu0 0.0
    %v4452 = vand.u32 %v579, 4294901760
    %4453 = vmatpush1.msra.mxu0 %v4452
    %4454 = vmatprep.subr.mxu0 0.0
    %v4455 = vand.u32 %v580, 4294901760
    %4456 = vmatpush1.msra.mxu0 %v4455
    %4457 = vmatprep.subr.mxu0 0.0
    %v4458 = vand.u32 %v581, 4294901760
    %4459 = vmatpush1.msra.mxu0 %v4458
    %4460 = vmatprep.subr.mxu0 0.0
    %v4461 = vand.u32 %v582, 4294901760
    %4462 = vmatpush1.msra.mxu0 %v4461
    %4463 = vmatprep.subr.mxu0 0.0
    %4464 = vmatpush1.msra.mxu0 0.0
    %4465 = vmatprep.subr.mxu0 0.0
    %4466 = vmatpush1.msra.mxu0 0.0
    %4467 = vmatprep.subr.mxu0 0.0
    %4468 = vmatpush1.msra.mxu0 0.0
    %4469 = vmatprep.subr.mxu0 0.0
    %4470 = vmatpush1.msra.mxu0 0.0
    %4471 = vmatprep.subr.mxu0 0.0
    %4472 = vmatpush1.msra.mxu0 0.0
    %4473 = vmatprep.subr.mxu0 0.0
    %4474 = vmatpush1.msra.mxu0 0.0
    %4475 = vmatprep.subr.mxu0 0.0
    %4476 = vmatpush1.msra.mxu0 0.0
    %4477 = vmatprep.subr.mxu0 0.0
    %4478 = vmatpush1.msra.mxu0 0.0
    %4479 = vmatprep.subr.mxu0 0.0
    %4480 = vmatpush1.msra.mxu0 0.0
    %4481 = vmatprep.subr.mxu0 0.0
    %4482 = vmatpush1.msra.mxu0 0.0
    %4483 = vmatprep.subr.mxu0 0.0
    %4484 = vmatpush1.msra.mxu0 0.0
    %4485 = vmatprep.subr.mxu0 0.0
    %4486 = vmatpush1.msra.mxu0 0.0
    %4487 = vmatprep.subr.mxu0 0.0
    %4488 = vmatpush1.msra.mxu0 0.0
    %4489 = vmatprep.subr.mxu0 0.0
    %4490 = vmatpush1.msra.mxu0 0.0
    %4491 = vmatprep.subr.mxu0 0.0
    %4492 = vmatpush1.msra.mxu0 0.0
    %4493 = vmatprep.subr.mxu0 0.0
    %4494 = vmatpush1.msra.mxu0 0.0
    %4495 = vmatprep.subr.mxu0 0.0
    %4496 = vmatpush1.msra.mxu0 0.0
    %4497 = vmatprep.subr.mxu0 0.0
    %4498 = vmatpush1.msra.mxu0 0.0
    %4499 = vmatprep.subr.mxu0 0.0
    %4500 = vmatpush1.msra.mxu0 0.0
    %4501 = vmatprep.subr.mxu0 0.0
    %4502 = vmatpush1.msra.mxu0 0.0
    %4503 = vmatprep.subr.mxu0 0.0
    %4504 = vmatpush1.msra.mxu0 0.0
    %4505 = vmatprep.subr.mxu0 0.0
    %4506 = vmatpush1.msra.mxu0 0.0
    %4507 = vmatprep.subr.mxu0 0.0
    %4508 = vmatpush1.msra.mxu0 0.0
    %4509 = vmatprep.subr.mxu0 0.0
    %4510 = vmatpush1.msra.mxu0 0.0
    %4511 = vmatprep.subr.mxu0 0.0
    %4512 = vmatpush1.msra.mxu0 0.0
    %4513 = vmatprep.subr.mxu0 0.0
    %4514 = vmatpush1.msra.mxu0 0.0
    %4515 = vmatprep.subr.mxu0 0.0
    %4516 = vmatpush1.msra.mxu0 0.0
    %4517 = vmatprep.subr.mxu0 0.0
    %4518 = vmatpush1.msra.mxu0 0.0
    %4519 = vmatprep.mubr.f32.mxu0 0.0
    %v4520 = vand.u32 %v4039, 4294901760
    %4521 = vmatmul.mubr.f32.gmra.mrb[0].mxu0 %v4520
    %v4522 = vpop.f32.mrb[0].mxu0
    %v4523 = vadd.f32 %v4448, %v4522
    %v4524 = vpop.f32.mrb[0].mxu0
    %4525 = vdwg.mxu0
    %v4527 = vrot.slane %v4523, 1
    %v4529 = vadd.f32 %v576, %v4527
    %v4530 = vtanh.pop %v4529
    %vm4531 = vcmask 1040384
    %v4532 = vsel %vm4531, %v1073, %v1566
    %v4533 = vsel %vm51, %v4532, %v2060
    %vm4534 = vcmask 1042432
    %v4535 = vsel %vm4534, %v4533, %v2554
    %vm4536 = vcmask 1043456
    %v4537 = vsel %vm4536, %v4535, %v3048
    %vm4538 = vcmask 1044480
    %v4539 = vsel %vm4538, %v4537, %v3542
    %vm4540 = vcmask 1045504
    %v4541 = vsel %vm4540, %v4539, %v4036
    %vm4542 = vcmask 1046528
    %v4543 = vsel %vm4542, %v4541, %v4530
    %v4544 = vld [vmem:[%s4] sm:$0xff]
    %v4545 = vld [vmem:[%s4 + $0x8] sm:$0xff]
    %v4546 = vld [vmem:[%s4 + $0x10] sm:$0xff]
    %v4547 = vld [vmem:[%s4 + $0x18] sm:$0xff]
    %v4548 = vld [vmem:[%s5] sm:$0x1]
    %v4550 = vlaneseq
    %v4551 = vshrl.u32 %v4550, 7
    %v4552 = vsub.s32 0, %v4551
    %v4553 = vrot.slane %v4548, %v4552
    %v4556 = vsel %vm583, %v4543, 0
    %4558 = vmatprep.subr.mxu0 0.0
    %v4559 = vand.u32 %v4544, 4294901760
    %4560 = vmatpush1.msra.mxu0 %v4559
    %4561 = vmatprep.subr.mxu0 0.0
    %v4562 = vand.u32 %v4545, 4294901760
    %4563 = vmatpush1.msra.mxu0 %v4562
    %4564 = vmatprep.subr.mxu0 0.0
    %v4565 = vand.u32 %v4546, 4294901760
    %4566 = vmatpush1.msra.mxu0 %v4565
    %4567 = vmatprep.subr.mxu0 0.0
    %v4568 = vand.u32 %v4547, 4294901760
    %4569 = vmatpush1.msra.mxu0 %v4568
    %4570 = vmatprep.subr.mxu0 0.0
    %4571 = vmatpush1.msra.mxu0 0.0
    %4572 = vmatprep.subr.mxu0 0.0
    %4573 = vmatpush1.msra.mxu0 0.0
    %4574 = vmatprep.subr.mxu0 0.0
    %4575 = vmatpush1.msra.mxu0 0.0
    %4576 = vmatprep.subr.mxu0 0.0
    %4577 = vmatpush1.msra.mxu0 0.0
    %4578 = vmatprep.subr.mxu0 0.0
    %4579 = vmatpush1.msra.mxu0 0.0
    %4580 = vmatprep.subr.mxu0 0.0
    %4581 = vmatpush1.msra.mxu0 0.0
    %4582 = vmatprep.subr.mxu0 0.0
    %4583 = vmatpush1.msra.mxu0 0.0
    %4584 = vmatprep.subr.mxu0 0.0
    %4585 = vmatpush1.msra.mxu0 0.0
    %4586 = vmatprep.subr.mxu0 0.0
    %4587 = vmatpush1.msra.mxu0 0.0
    %4588 = vmatprep.subr.mxu0 0.0
    %4589 = vmatpush1.msra.mxu0 0.0
    %4590 = vmatprep.subr.mxu0 0.0
    %4591 = vmatpush1.msra.mxu0 0.0
    %4592 = vmatprep.subr.mxu0 0.0
    %4593 = vmatpush1.msra.mxu0 0.0
    %4594 = vmatprep.subr.mxu0 0.0
    %4595 = vmatpush1.msra.mxu0 0.0
    %4596 = vmatprep.subr.mxu0 0.0
    %4597 = vmatpush1.msra.mxu0 0.0
    %4598 = vmatprep.subr.mxu0 0.0
    %4599 = vmatpush1.msra.mxu0 0.0
    %4600 = vmatprep.subr.mxu0 0.0
    %4601 = vmatpush1.msra.mxu0 0.0
    %4602 = vmatprep.subr.mxu0 0.0
    %4603 = vmatpush1.msra.mxu0 0.0
    %4604 = vmatprep.subr.mxu0 0.0
    %4605 = vmatpush1.msra.mxu0 0.0
    %4606 = vmatprep.subr.mxu0 0.0
    %4607 = vmatpush1.msra.mxu0 0.0
    %4608 = vmatprep.subr.mxu0 0.0
    %4609 = vmatpush1.msra.mxu0 0.0
    %4610 = vmatprep.subr.mxu0 0.0
    %4611 = vmatpush1.msra.mxu0 0.0
    %4612 = vmatprep.subr.mxu0 0.0
    %4613 = vmatpush1.msra.mxu0 0.0
    %4614 = vmatprep.subr.mxu0 0.0
    %4615 = vmatpush1.msra.mxu0 0.0
    %4616 = vmatprep.subr.mxu0 0.0
    %4617 = vmatpush1.msra.mxu0 0.0
    %4618 = vmatprep.subr.mxu0 0.0
    %4619 = vmatpush1.msra.mxu0 0.0
    %4620 = vmatprep.subr.mxu0 0.0
    %4621 = vmatpush1.msra.mxu0 0.0
    %4622 = vmatprep.subr.mxu0 0.0
    %4623 = vmatpush1.msra.mxu0 0.0
    %4624 = vmatprep.subr.mxu0 0.0
    %4625 = vmatpush1.msra.mxu0 0.0
    %4626 = vmatprep.mubr.f32.mxu0 0.0
    %v4627 = vand.u32 %v4556, 4294901760
    %v4628 = vsub.f32 %v4556, %v4627
    %v4629 = vand.u32 %v4628, 4294901760
    %v4630 = vsub.f32 %v4628, %v4629
    %v4631 = vand.u32 %v4630, 4294901760
    %4632 = vmatmul.mubr.f32.gmra.mrb[0].mxu0 %v4631
    %v4633 = vpop.f32.mrb[0].mxu0
    %v4634 = vadd.f32 %v4553, %v4633
    %v4635 = vpop.f32.mrb[0].mxu0
    %4636 = vdwg.mxu0
    %4637 = vmatprep.subr.mxu0 0.0
    %v4638 = vand.u32 %v4544, 4294901760
    %v4639 = vsub.f32 %v4544, %v4638
    %v4640 = vand.u32 %v4639, 4294901760
    %v4641 = vsub.f32 %v4639, %v4640
    %v4642 = vand.u32 %v4641, 4294901760
    %4643 = vmatpush1.msra.mxu0 %v4642
    %4644 = vmatprep.subr.mxu0 0.0
    %v4645 = vand.u32 %v4545, 4294901760
    %v4646 = vsub.f32 %v4545, %v4645
    %v4647 = vand.u32 %v4646, 4294901760
    %v4648 = vsub.f32 %v4646, %v4647
    %v4649 = vand.u32 %v4648, 4294901760
    %4650 = vmatpush1.msra.mxu0 %v4649
    %4651 = vmatprep.subr.mxu0 0.0
    %v4652 = vand.u32 %v4546, 4294901760
    %v4653 = vsub.f32 %v4546, %v4652
    %v4654 = vand.u32 %v4653, 4294901760
    %v4655 = vsub.f32 %v4653, %v4654
    %v4656 = vand.u32 %v4655, 4294901760
    %4657 = vmatpush1.msra.mxu0 %v4656
    %4658 = vmatprep.subr.mxu0 0.0
    %v4659 = vand.u32 %v4547, 4294901760
    %v4660 = vsub.f32 %v4547, %v4659
    %v4661 = vand.u32 %v4660, 4294901760
    %v4662 = vsub.f32 %v4660, %v4661
    %v4663 = vand.u32 %v4662, 4294901760
    %4664 = vmatpush1.msra.mxu0 %v4663
    %4665 = vmatprep.subr.mxu0 0.0
    %4666 = vmatpush1.msra.mxu0 0.0
    %4667 = vmatprep.subr.mxu0 0.0
    %4668 = vmatpush1.msra.mxu0 0.0
    %4669 = vmatprep.subr.mxu0 0.0
    %4670 = vmatpush1.msra.mxu0 0.0
    %4671 = vmatprep.subr.mxu0 0.0
    %4672 = vmatpush1.msra.mxu0 0.0
    %4673 = vmatprep.subr.mxu0 0.0
    %4674 = vmatpush1.msra.mxu0 0.0
    %4675 = vmatprep.subr.mxu0 0.0
    %4676 = vmatpush1.msra.mxu0 0.0
    %4677 = vmatprep.subr.mxu0 0.0
    %4678 = vmatpush1.msra.mxu0 0.0
    %4679 = vmatprep.subr.mxu0 0.0
    %4680 = vmatpush1.msra.mxu0 0.0
    %4681 = vmatprep.subr.mxu0 0.0
    %4682 = vmatpush1.msra.mxu0 0.0
    %4683 = vmatprep.subr.mxu0 0.0
    %4684 = vmatpush1.msra.mxu0 0.0
    %4685 = vmatprep.subr.mxu0 0.0
    %4686 = vmatpush1.msra.mxu0 0.0
    %4687 = vmatprep.subr.mxu0 0.0
    %4688 = vmatpush1.msra.mxu0 0.0
    %4689 = vmatprep.subr.mxu0 0.0
    %4690 = vmatpush1.msra.mxu0 0.0
    %4691 = vmatprep.subr.mxu0 0.0
    %4692 = vmatpush1.msra.mxu0 0.0
    %4693 = vmatprep.subr.mxu0 0.0
    %4694 = vmatpush1.msra.mxu0 0.0
    %4695 = vmatprep.subr.mxu0 0.0
    %4696 = vmatpush1.msra.mxu0 0.0
    %4697 = vmatprep.subr.mxu0 0.0
    %4698 = vmatpush1.msra.mxu0 0.0
    %4699 = vmatprep.subr.mxu0 0.0
    %4700 = vmatpush1.msra.mxu0 0.0
    %4701 = vmatprep.subr.mxu0 0.0
    %4702 = vmatpush1.msra.mxu0 0.0
    %4703 = vmatprep.subr.mxu0 0.0
    %4704 = vmatpush1.msra.mxu0 0.0
    %4705 = vmatprep.subr.mxu0 0.0
    %4706 = vmatpush1.msra.mxu0 0.0
    %4707 = vmatprep.subr.mxu0 0.0
    %4708 = vmatpush1.msra.mxu0 0.0
    %4709 = vmatprep.subr.mxu0 0.0
    %4710 = vmatpush1.msra.mxu0 0.0
    %4711 = vmatprep.subr.mxu0 0.0
    %4712 = vmatpush1.msra.mxu0 0.0
    %4713 = vmatprep.subr.mxu0 0.0
    %4714 = vmatpush1.msra.mxu0 0.0
    %4715 = vmatprep.subr.mxu0 0.0
    %4716 = vmatpush1.msra.mxu0 0.0
    %4717 = vmatprep.subr.mxu0 0.0
    %4718 = vmatpush1.msra.mxu0 0.0
    %4719 = vmatprep.subr.mxu0 0.0
    %4720 = vmatpush1.msra.mxu0 0.0
    %4721 = vmatprep.mubr.f32.mxu0 0.0
    %v4722 = vand.u32 %v4556, 4294901760
    %4723 = vmatmul.mubr.f32.gmra.mrb[0].mxu0 %v4722
    %v4724 = vpop.f32.mrb[0].mxu0
    %v4725 = vadd.f32 %v4634, %v4724
    %v4726 = vpop.f32.mrb[0].mxu0
    %4727 = vdwg.mxu0
    %4728 = vmatprep.subr.mxu0 0.0
    %v4729 = vand.u32 %v4544, 4294901760
    %v4730 = vsub.f32 %v4544, %v4729
    %4731 = vmatpush1.msra.mxu0 %v4730
    %4732 = vmatprep.subr.mxu0 0.0
    %v4733 = vand.u32 %v4545, 4294901760
    %v4734 = vsub.f32 %v4545, %v4733
    %4735 = vmatpush1.msra.mxu0 %v4734
    %4736 = vmatprep.subr.mxu0 0.0
    %v4737 = vand.u32 %v4546, 4294901760
    %v4738 = vsub.f32 %v4546, %v4737
    %4739 = vmatpush1.msra.mxu0 %v4738
    %4740 = vmatprep.subr.mxu0 0.0
    %v4741 = vand.u32 %v4547, 4294901760
    %v4742 = vsub.f32 %v4547, %v4741
    %4743 = vmatpush1.msra.mxu0 %v4742
    %4744 = vmatprep.subr.mxu0 0.0
    %4745 = vmatpush1.msra.mxu0 0.0
    %4746 = vmatprep.subr.mxu0 0.0
    %4747 = vmatpush1.msra.mxu0 0.0
    %4748 = vmatprep.subr.mxu0 0.0
    %4749 = vmatpush1.msra.mxu0 0.0
    %4750 = vmatprep.subr.mxu0 0.0
    %4751 = vmatpush1.msra.mxu0 0.0
    %4752 = vmatprep.subr.mxu0 0.0
    %4753 = vmatpush1.msra.mxu0 0.0
    %4754 = vmatprep.subr.mxu0 0.0
    %4755 = vmatpush1.msra.mxu0 0.0
    %4756 = vmatprep.subr.mxu0 0.0
    %4757 = vmatpush1.msra.mxu0 0.0
    %4758 = vmatprep.subr.mxu0 0.0
    %4759 = vmatpush1.msra.mxu0 0.0
    %4760 = vmatprep.subr.mxu0 0.0
    %4761 = vmatpush1.msra.mxu0 0.0
    %4762 = vmatprep.subr.mxu0 0.0
    %4763 = vmatpush1.msra.mxu0 0.0
    %4764 = vmatprep.subr.mxu0 0.0
    %4765 = vmatpush1.msra.mxu0 0.0
    %4766 = vmatprep.subr.mxu0 0.0
    %4767 = vmatpush1.msra.mxu0 0.0
    %4768 = vmatprep.subr.mxu0 0.0
    %4769 = vmatpush1.msra.mxu0 0.0
    %4770 = vmatprep.subr.mxu0 0.0
    %4771 = vmatpush1.msra.mxu0 0.0
    %4772 = vmatprep.subr.mxu0 0.0
    %4773 = vmatpush1.msra.mxu0 0.0
    %4774 = vmatprep.subr.mxu0 0.0
    %4775 = vmatpush1.msra.mxu0 0.0
    %4776 = vmatprep.subr.mxu0 0.0
    %4777 = vmatpush1.msra.mxu0 0.0
    %4778 = vmatprep.subr.mxu0 0.0
    %4779 = vmatpush1.msra.mxu0 0.0
    %4780 = vmatprep.subr.mxu0 0.0
    %4781 = vmatpush1.msra.mxu0 0.0
    %4782 = vmatprep.subr.mxu0 0.0
    %4783 = vmatpush1.msra.mxu0 0.0
    %4784 = vmatprep.subr.mxu0 0.0
    %4785 = vmatpush1.msra.mxu0 0.0
    %4786 = vmatprep.subr.mxu0 0.0
    %4787 = vmatpush1.msra.mxu0 0.0
    %4788 = vmatprep.subr.mxu0 0.0
    %4789 = vmatpush1.msra.mxu0 0.0
    %4790 = vmatprep.subr.mxu0 0.0
    %4791 = vmatpush1.msra.mxu0 0.0
    %4792 = vmatprep.subr.mxu0 0.0
    %4793 = vmatpush1.msra.mxu0 0.0
    %4794 = vmatprep.subr.mxu0 0.0
    %4795 = vmatpush1.msra.mxu0 0.0
    %4796 = vmatprep.subr.mxu0 0.0
    %4797 = vmatpush1.msra.mxu0 0.0
    %4798 = vmatprep.subr.mxu0 0.0
    %4799 = vmatpush1.msra.mxu0 0.0
    %4800 = vmatprep.mubr.f32.mxu0 0.0
    %v4801 = vand.u32 %v4556, 4294901760
    %v4802 = vsub.f32 %v4556, %v4801
    %4803 = vmatmul.mubr.f32.gmra.mrb[0].mxu0 %v4802
    %v4804 = vpop.f32.mrb[0].mxu0
    %v4805 = vadd.f32 %v4725, %v4804
    %v4806 = vpop.f32.mrb[0].mxu0
    %4807 = vdwg.mxu0
    %4808 = vmatprep.subr.mxu0 0.0
    %v4809 = vand.u32 %v4544, 4294901760
    %4810 = vmatpush1.msra.mxu0 %v4809
    %4811 = vmatprep.subr.mxu0 0.0
    %v4812 = vand.u32 %v4545, 4294901760
    %4813 = vmatpush1.msra.mxu0 %v4812
    %4814 = vmatprep.subr.mxu0 0.0
    %v4815 = vand.u32 %v4546, 4294901760
    %4816 = vmatpush1.msra.mxu0 %v4815
    %4817 = vmatprep.subr.mxu0 0.0
    %v4818 = vand.u32 %v4547, 4294901760
    %4819 = vmatpush1.msra.mxu0 %v4818
    %4820 = vmatprep.subr.mxu0 0.0
    %4821 = vmatpush1.msra.mxu0 0.0
    %4822 = vmatprep.subr.mxu0 0.0
    %4823 = vmatpush1.msra.mxu0 0.0
    %4824 = vmatprep.subr.mxu0 0.0
    %4825 = vmatpush1.msra.mxu0 0.0
    %4826 = vmatprep.subr.mxu0 0.0
    %4827 = vmatpush1.msra.mxu0 0.0
    %4828 = vmatprep.subr.mxu0 0.0
    %4829 = vmatpush1.msra.mxu0 0.0
    %4830 = vmatprep.subr.mxu0 0.0
    %4831 = vmatpush1.msra.mxu0 0.0
    %4832 = vmatprep.subr.mxu0 0.0
    %4833 = vmatpush1.msra.mxu0 0.0
    %4834 = vmatprep.subr.mxu0 0.0
    %4835 = vmatpush1.msra.mxu0 0.0
    %4836 = vmatprep.subr.mxu0 0.0
    %4837 = vmatpush1.msra.mxu0 0.0
    %4838 = vmatprep.subr.mxu0 0.0
    %4839 = vmatpush1.msra.mxu0 0.0
    %4840 = vmatprep.subr.mxu0 0.0
    %4841 = vmatpush1.msra.mxu0 0.0
    %4842 = vmatprep.subr.mxu0 0.0
    %4843 = vmatpush1.msra.mxu0 0.0
    %4844 = vmatprep.subr.mxu0 0.0
    %4845 = vmatpush1.msra.mxu0 0.0
    %4846 = vmatprep.subr.mxu0 0.0
    %4847 = vmatpush1.msra.mxu0 0.0
    %4848 = vmatprep.subr.mxu0 0.0
    %4849 = vmatpush1.msra.mxu0 0.0
    %4850 = vmatprep.subr.mxu0 0.0
    %4851 = vmatpush1.msra.mxu0 0.0
    %4852 = vmatprep.subr.mxu0 0.0
    %4853 = vmatpush1.msra.mxu0 0.0
    %4854 = vmatprep.subr.mxu0 0.0
    %4855 = vmatpush1.msra.mxu0 0.0
    %4856 = vmatprep.subr.mxu0 0.0
    %4857 = vmatpush1.msra.mxu0 0.0
    %4858 = vmatprep.subr.mxu0 0.0
    %4859 = vmatpush1.msra.mxu0 0.0
    %4860 = vmatprep.subr.mxu0 0.0
    %4861 = vmatpush1.msra.mxu0 0.0
    %4862 = vmatprep.subr.mxu0 0.0
    %4863 = vmatpush1.msra.mxu0 0.0
    %4864 = vmatprep.subr.mxu0 0.0
    %4865 = vmatpush1.msra.mxu0 0.0
    %4866 = vmatprep.subr.mxu0 0.0
    %4867 = vmatpush1.msra.mxu0 0.0
    %4868 = vmatprep.subr.mxu0 0.0
    %4869 = vmatpush1.msra.mxu0 0.0
    %4870 = vmatprep.subr.mxu0 0.0
    %4871 = vmatpush1.msra.mxu0 0.0
    %4872 = vmatprep.subr.mxu0 0.0
    %4873 = vmatpush1.msra.mxu0 0.0
    %4874 = vmatprep.subr.mxu0 0.0
    %4875 = vmatpush1.msra.mxu0 0.0
    %4876 = vmatprep.mubr.f32.mxu0 0.0
    %v4877 = vand.u32 %v4556, 4294901760
    %v4878 = vsub.f32 %v4556, %v4877
    %v4879 = vand.u32 %v4878, 4294901760
    %4880 = vmatmul.mubr.f32.gmra.mrb[0].mxu0 %v4879
    %v4881 = vpop.f32.mrb[0].mxu0
    %v4882 = vadd.f32 %v4805, %v4881
    %v4883 = vpop.f32.mrb[0].mxu0
    %4884 = vdwg.mxu0
    %4885 = vmatprep.subr.mxu0 0.0
    %v4886 = vand.u32 %v4544, 4294901760
    %v4887 = vsub.f32 %v4544, %v4886
    %v4888 = vand.u32 %v4887, 4294901760
    %4889 = vmatpush1.msra.mxu0 %v4888
    %4890 = vmatprep.subr.mxu0 0.0
    %v4891 = vand.u32 %v4545, 4294901760
    %v4892 = vsub.f32 %v4545, %v4891
    %v4893 = vand.u32 %v4892, 4294901760
    %4894 = vmatpush1.msra.mxu0 %v4893
    %4895 = vmatprep.subr.mxu0 0.0
    %v4896 = vand.u32 %v4546, 4294901760
    %v4897 = vsub.f32 %v4546, %v4896
    %v4898 = vand.u32 %v4897, 4294901760
    %4899 = vmatpush1.msra.mxu0 %v4898
    %4900 = vmatprep.subr.mxu0 0.0
    %v4901 = vand.u32 %v4547, 4294901760
    %v4902 = vsub.f32 %v4547, %v4901
    %v4903 = vand.u32 %v4902, 4294901760
    %4904 = vmatpush1.msra.mxu0 %v4903
    %4905 = vmatprep.subr.mxu0 0.0
    %4906 = vmatpush1.msra.mxu0 0.0
    %4907 = vmatprep.subr.mxu0 0.0
    %4908 = vmatpush1.msra.mxu0 0.0
    %4909 = vmatprep.subr.mxu0 0.0
    %4910 = vmatpush1.msra.mxu0 0.0
    %4911 = vmatprep.subr.mxu0 0.0
    %4912 = vmatpush1.msra.mxu0 0.0
    %4913 = vmatprep.subr.mxu0 0.0
    %4914 = vmatpush1.msra.mxu0 0.0
    %4915 = vmatprep.subr.mxu0 0.0
    %4916 = vmatpush1.msra.mxu0 0.0
    %4917 = vmatprep.subr.mxu0 0.0
    %4918 = vmatpush1.msra.mxu0 0.0
    %4919 = vmatprep.subr.mxu0 0.0
    %4920 = vmatpush1.msra.mxu0 0.0
    %4921 = vmatprep.subr.mxu0 0.0
    %4922 = vmatpush1.msra.mxu0 0.0
    %4923 = vmatprep.subr.mxu0 0.0
    %4924 = vmatpush1.msra.mxu0 0.0
    %4925 = vmatprep.subr.mxu0 0.0
    %4926 = vmatpush1.msra.mxu0 0.0
    %4927 = vmatprep.subr.mxu0 0.0
    %4928 = vmatpush1.msra.mxu0 0.0
    %4929 = vmatprep.subr.mxu0 0.0
    %4930 = vmatpush1.msra.mxu0 0.0
    %4931 = vmatprep.subr.mxu0 0.0
    %4932 = vmatpush1.msra.mxu0 0.0
    %4933 = vmatprep.subr.mxu0 0.0
    %4934 = vmatpush1.msra.mxu0 0.0
    %4935 = vmatprep.subr.mxu0 0.0
    %4936 = vmatpush1.msra.mxu0 0.0
    %4937 = vmatprep.subr.mxu0 0.0
    %4938 = vmatpush1.msra.mxu0 0.0
    %4939 = vmatprep.subr.mxu0 0.0
    %4940 = vmatpush1.msra.mxu0 0.0
    %4941 = vmatprep.subr.mxu0 0.0
    %4942 = vmatpush1.msra.mxu0 0.0
    %4943 = vmatprep.subr.mxu0 0.0
    %4944 = vmatpush1.msra.mxu0 0.0
    %4945 = vmatprep.subr.mxu0 0.0
    %4946 = vmatpush1.msra.mxu0 0.0
    %4947 = vmatprep.subr.mxu0 0.0
    %4948 = vmatpush1.msra.mxu0 0.0
    %4949 = vmatprep.subr.mxu0 0.0
    %4950 = vmatpush1.msra.mxu0 0.0
    %4951 = vmatprep.subr.mxu0 0.0
    %4952 = vmatpush1.msra.mxu0 0.0
    %4953 = vmatprep.subr.mxu0 0.0
    %4954 = vmatpush1.msra.mxu0 0.0
    %4955 = vmatprep.subr.mxu0 0.0
    %4956 = vmatpush1.msra.mxu0 0.0
    %4957 = vmatprep.subr.mxu0 0.0
    %4958 = vmatpush1.msra.mxu0 0.0
    %4959 = vmatprep.subr.mxu0 0.0
    %4960 = vmatpush1.msra.mxu0 0.0
    %4961 = vmatprep.mubr.f32.mxu0 0.0
    %v4962 = vand.u32 %v4556, 4294901760
    %4963 = vmatmul.mubr.f32.gmra.mrb[0].mxu0 %v4962
    %v4964 = vpop.f32.mrb[0].mxu0
    %v4965 = vadd.f32 %v4882, %v4964
    %v4966 = vpop.f32.mrb[0].mxu0
    %4967 = vdwg.mxu0
    %4968 = vmatprep.subr.mxu0 0.0
    %v4969 = vand.u32 %v4544, 4294901760
    %4970 = vmatpush1.msra.mxu0 %v4969
    %4971 = vmatprep.subr.mxu0 0.0
    %v4972 = vand.u32 %v4545, 4294901760
    %4973 = vmatpush1.msra.mxu0 %v4972
    %4974 = vmatprep.subr.mxu0 0.0
    %v4975 = vand.u32 %v4546, 4294901760
    %4976 = vmatpush1.msra.mxu0 %v4975
    %4977 = vmatprep.subr.mxu0 0.0
    %v4978 = vand.u32 %v4547, 4294901760
    %4979 = vmatpush1.msra.mxu0 %v4978
    %4980 = vmatprep.subr.mxu0 0.0
    %4981 = vmatpush1.msra.mxu0 0.0
    %4982 = vmatprep.subr.mxu0 0.0
    %4983 = vmatpush1.msra.mxu0 0.0
    %4984 = vmatprep.subr.mxu0 0.0
    %4985 = vmatpush1.msra.mxu0 0.0
    %4986 = vmatprep.subr.mxu0 0.0
    %4987 = vmatpush1.msra.mxu0 0.0
    %4988 = vmatprep.subr.mxu0 0.0
    %4989 = vmatpush1.msra.mxu0 0.0
    %4990 = vmatprep.subr.mxu0 0.0
    %4991 = vmatpush1.msra.mxu0 0.0
    %4992 = vmatprep.subr.mxu0 0.0
    %4993 = vmatpush1.msra.mxu0 0.0
    %4994 = vmatprep.subr.mxu0 0.0
    %4995 = vmatpush1.msra.mxu0 0.0
    %4996 = vmatprep.subr.mxu0 0.0
    %4997 = vmatpush1.msra.mxu0 0.0
    %4998 = vmatprep.subr.mxu0 0.0
    %4999 = vmatpush1.msra.mxu0 0.0
    %5000 = vmatprep.subr.mxu0 0.0
    %5001 = vmatpush1.msra.mxu0 0.0
    %5002 = vmatprep.subr.mxu0 0.0
    %5003 = vmatpush1.msra.mxu0 0.0
    %5004 = vmatprep.subr.mxu0 0.0
    %5005 = vmatpush1.msra.mxu0 0.0
    %5006 = vmatprep.subr.mxu0 0.0
    %5007 = vmatpush1.msra.mxu0 0.0
    %5008 = vmatprep.subr.mxu0 0.0
    %5009 = vmatpush1.msra.mxu0 0.0
    %5010 = vmatprep.subr.mxu0 0.0
    %5011 = vmatpush1.msra.mxu0 0.0
    %5012 = vmatprep.subr.mxu0 0.0
    %5013 = vmatpush1.msra.mxu0 0.0
    %5014 = vmatprep.subr.mxu0 0.0
    %5015 = vmatpush1.msra.mxu0 0.0
    %5016 = vmatprep.subr.mxu0 0.0
    %5017 = vmatpush1.msra.mxu0 0.0
    %5018 = vmatprep.subr.mxu0 0.0
    %5019 = vmatpush1.msra.mxu0 0.0
    %5020 = vmatprep.subr.mxu0 0.0
    %5021 = vmatpush1.msra.mxu0 0.0
    %5022 = vmatprep.subr.mxu0 0.0
    %5023 = vmatpush1.msra.mxu0 0.0
    %5024 = vmatprep.subr.mxu0 0.0
    %5025 = vmatpush1.msra.mxu0 0.0
    %5026 = vmatprep.subr.mxu0 0.0
    %5027 = vmatpush1.msra.mxu0 0.0
    %5028 = vmatprep.subr.mxu0 0.0
    %5029 = vmatpush1.msra.mxu0 0.0
    %5030 = vmatprep.subr.mxu0 0.0
    %5031 = vmatpush1.msra.mxu0 0.0
    %5032 = vmatprep.subr.mxu0 0.0
    %5033 = vmatpush1.msra.mxu0 0.0
    %5034 = vmatprep.subr.mxu0 0.0
    %5035 = vmatpush1.msra.mxu0 0.0
    %5036 = vmatprep.mubr.f32.mxu0 0.0
    %v5037 = vand.u32 %v4556, 4294901760
    %5038 = vmatmul.mubr.f32.gmra.mrb[0].mxu0 %v5037
    %v5039 = vpop.f32.mrb[0].mxu0
    %v5040 = vadd.f32 %v4965, %v5039
    %v5041 = vpop.f32.mrb[0].mxu0
    %5042 = vdwg.mxu0
    %vm5043 = vcmask 64512
    %5044 = vst.msk [vmem:[#allocation2] sm:$0xff] %vm5043, %v5040
    // Predicated region
    $region26: #{tpu_custom_call.1} parent=1 // pred_check
      _
    $region27: #{tpu_custom_call.1} parent=1 // pred_check_branch
      %5046 = sbr.rel (0) target = $region29
    $region28: #{tpu_custom_call.1} parent=1 // pred_region
      %s5048 = ssub.s32 128, 128
      %5049 = vsyncadd [#allocation3], %s5048
      %s5051 = sshll.u32 [#allocation2], 4
      %s5052 = int_to_ptr.vmem [resolvable:$true] %s5051
      %5054 = dma.vmem_to_hbm [thread:$0]  %s5052, 128, %s6, [#allocation3]
    $region29: #{tpu_custom_call.1} parent=1 // pred_fallthru
      _
    // Predicated region
    $region30: #{tpu_custom_call.1} parent=1 // pred_check
      _
    $region31: #{tpu_custom_call.1} parent=1 // pred_check_branch
      %5056 = sbr.rel (0) target = $region33
    $region32: #{tpu_custom_call.1} parent=1 // pred_region
      %5057 = dma.done [#allocation3], 128
    $region33: #{tpu_custom_call.1} parent=1 // pred_fallthru
      _
    %5058 = vsyncpa [#allocation3], 1

</llo_original>
